<compile_context>
chip_gen: v6e
topology: v6e:2x2x1
jax: 0.10.0
libtpu: 0.0.40
codegen_flags: <defaults>
</compile_context>

<pallas_src>
import functools

import jax
import jax.numpy as jnp
import numpy as np
from jax.experimental import pallas as pl
from jax.experimental.pallas import tpu as pltpu

O_PAD = 128        # lane-dense output width; real classes occupy the first O lanes
NEG_BIG = -1e30    # mask value for padded class lanes


def cnn_trln_kernel(emb_ref, lens_ref, wconv_ref, bconv_ref, wtrln_ref, wlin_ref,
                    out_ref, *, num_classes):
    x = emb_ref[...].astype(jnp.float32)          # (TB, S, C)  bf16 in HBM/VMEM
    TB, S, C = x.shape
    T = wtrln_ref.shape[-1]

    # --- Fused trln-feature simulation: tanh(mean_over_seq(emb) @ w_trln) ---
    # TODO(synk): self.trln is an external black-box regressor (trln.predict on
    # numpy); it is simulated here with a fixed deterministic projection.
    mean = jnp.sum(x, axis=1) * (1.0 / S)         # (TB, C) f32
    trln = jnp.tanh(jnp.dot(mean, wtrln_ref[...],
                            preferred_element_type=jnp.float32))     # (TB, T)

    # --- Convs as im2col matmuls + running max of the ReLU'd outputs ---------
    pooled = jnp.zeros((TB, C), jnp.float32)      # ReLU >= 0, so 0-init == max-pool
    row_off = 0
    for k in (1, 2, 3, 4):
        rows = k * C
        if S >= k:                                # mirrors `embedded.size(2) >= kernel_size`
            L = S - k + 1
            if k == 1:
                slab = x                                             # (TB, S, C)
            else:
                slab = jnp.concatenate([x[:, j:j + L, :] for j in range(k)],
                                       axis=-1)                      # (TB, L, k*C)
            slab = slab.astype(jnp.bfloat16)
            w = wconv_ref[row_off:row_off + rows, :]                 # (k*C, C) bf16
            acc = jnp.einsum('blk,kc->blc', slab, w,
                             preferred_element_type=jnp.float32)     # (TB, L, C)
            acc = acc + bconv_ref[k - 1:k, :]                        # (1, C) broadcast
            act = jnp.maximum(acc, 0.0)                              # ReLU (f32, VPU)
            pooled = jnp.maximum(pooled, jnp.max(act, axis=1))       # running max-pool
        row_off += rows

    # --- Linear over ensemble = [pooled | trln | lens] (split matmuls) -------
    wp = wlin_ref[0:C, :]                         # (C, O_PAD)
    wt = wlin_ref[C:C + T, :]                     # (T, O_PAD)
    wl = wlin_ref[C + T:C + T + 1, :]             # (1, O_PAD)
    bb = wlin_ref[C + T + 1:C + T + 2, :]         # (1, O_PAD)
    out = (jnp.dot(pooled, wp, preferred_element_type=jnp.float32)
           + jnp.dot(trln, wt, preferred_element_type=jnp.float32)
           + lens_ref[...] * wl                   # (TB,1)*(1,O_PAD)
           + bb)                                  # (TB, O_PAD)

    # --- log_softmax over the real classes (padded lanes masked out) ---------
    col = jax.lax.broadcasted_iota(jnp.int32, out.shape, 1)
    out = jnp.where(col < num_classes, out, NEG_BIG)
    m = jnp.max(out, axis=1, keepdims=True)
    z = out - m
    lse = jnp.log(jnp.sum(jnp.exp(z), axis=1, keepdims=True))
    out_ref[...] = z - lse


def cnn_trln_forward(tokens, lengths, params, *, tile_b=8):
    """tokens: (S, B) int32 (torchtext convention), lengths: (B,) int32."""
    emb_table = params['embedding']                    # (V, C) f32
    C = emb_table.shape[1]
    T = params['w_trln'].shape[1]
    O = params['lin_b'].shape[-1]

    # Gather directly into (B, S, C): indexing with tokens.T avoids transposing
    # the full activation; bf16 halves the kernel's dominant HBM traffic.
    # TODO(synk): the embedding gather itself could move in-kernel via
    # scalar-prefetched token ids + pl.Element row gather.
    emb = jnp.take(emb_table, tokens.T, axis=0).astype(jnp.bfloat16)   # (B, S, C)
    lens = lengths.reshape(-1, 1).astype(jnp.float32)                  # (B, 1)
    B, S, _ = emb.shape

    # Conv weights packed in im2col order: rows = (tap j, c_in) per kernel size.
    wconv = jnp.concatenate(
        [params['w%d' % k].reshape(k * C, C) for k in (1, 2, 3, 4)],
        axis=0).astype(jnp.bfloat16)                                   # (10C, C)
    bconv = jnp.concatenate(
        [params['b%d' % k].reshape(1, C) for k in (1, 2, 3, 4)], axis=0)  # (4, C) f32
    wtrln = params['w_trln'].astype(jnp.float32)                       # (C, T)

    # Packed Linear slab, padded lane-dense to O_PAD classes (extra lanes = 0).
    wlin = jnp.zeros((C + T + 2, O_PAD), jnp.float32)
    wlin = wlin.at[0:C, :O].set(params['lin_wp'])
    wlin = wlin.at[C:C + T, :O].set(params['lin_wt'])
    wlin = wlin.at[C + T, :O].set(params['lin_wl'][0])
    wlin = wlin.at[C + T + 1, :O].set(params['lin_b'][0])

    # Pad batch to a multiple of the tile (padded rows are zeros -> finite out).
    n_tiles = pl.cdiv(B, tile_b)
    b_pad = n_tiles * tile_b
    if b_pad != B:
        emb = jnp.pad(emb, ((0, b_pad - B), (0, 0), (0, 0)))
        lens = jnp.pad(lens, ((0, b_pad - B), (0, 0)))

    # Rough cost hint for the XLA scheduler around the custom call.
    conv_flops = 2 * b_pad * sum(max(S - k + 1, 0) * k * C * C for k in (1, 2, 3, 4))
    flops = conv_flops + 2 * b_pad * C * T + 2 * b_pad * (C + T + 1) * O_PAD
    bytes_accessed = (emb.size * 2 + lens.size * 4 + wconv.size * 2
                      + bconv.size * 4 + wtrln.size * 4 + wlin.size * 4
                      + b_pad * O_PAD * 4)
    cost = pl.CostEstimate(flops=flops, transcendentals=b_pad * (T + O_PAD),
                           bytes_accessed=bytes_accessed)

    # NOTE: per-tile VMEM use is tile_b*S*C*2B x2 (double-buffer) + weights;
    # size tile_b so this stays well under ~32 MiB scoped VMEM (64 MiB physical
    # on v7x, 128 MiB on v5e/v6e). Trivial at these shapes.
    out_pad = pl.pallas_call(
        functools.partial(cnn_trln_kernel, num_classes=O),
        out_shape=jax.ShapeDtypeStruct((b_pad, O_PAD), jnp.float32),
        grid=(n_tiles,),
        in_specs=[
            pl.BlockSpec((tile_b, S, C), lambda i: (i, 0, 0)),   # emb tile (bf16)
            pl.BlockSpec((tile_b, 1), lambda i: (i, 0)),          # lengths tile
            pl.BlockSpec((10 * C, C), lambda i: (0, 0)),          # packed conv weights
            pl.BlockSpec((4, C), lambda i: (0, 0)),               # conv biases
            pl.BlockSpec((C, T), lambda i: (0, 0)),               # trln projection
            pl.BlockSpec((C + T + 2, O_PAD), lambda i: (0, 0)),   # packed Linear
        ],
        out_specs=pl.BlockSpec((tile_b, O_PAD), lambda i: (i, 0)),
        compiler_params=pltpu.CompilerParams(
            dimension_semantics=("parallel",)),
        cost_estimate=cost,
    )(emb, lens, wconv, bconv, wtrln, wlin)

    return out_pad[:B, :O]


def reference_forward(tokens, lengths, params):
    """Pure-JAX f32 reference mirroring the PyTorch forward."""
    embedded = jnp.take(params['embedding'], tokens, axis=0)   # (S,B,C)
    emb_bsc = jnp.transpose(embedded, (1, 0, 2))               # (B,S,C)
    conv_in = jnp.transpose(emb_bsc, (0, 2, 1))                # (B,C,S) = PyTorch conv input
    trln_feats = jnp.tanh(jnp.mean(emb_bsc, axis=1) @ params['w_trln'])
    lens = lengths.reshape(-1, 1).astype(jnp.float32)
    S = conv_in.shape[2]
    pieces = []
    for k in range(1, 5):
        if S < k:
            continue
        w = jnp.transpose(params['w%d' % k], (2, 1, 0))        # (Cout, Cin, k)
        o = jax.lax.conv_general_dilated(conv_in, w, window_strides=(1,),
                                         padding='VALID',
                                         dimension_numbers=('NCH', 'OIH', 'NCH'))
        o = o + params['b%d' % k].reshape(1, -1, 1)
        pieces.append(o)
    cat = jnp.concatenate(pieces, axis=2)
    pooled = jnp.max(jax.nn.relu(cat), axis=2)
    ensemble = jnp.concatenate([pooled, trln_feats, lens], axis=1)
    W = jnp.concatenate([params['lin_wp'], params['lin_wt'], params['lin_wl']], axis=0)
    out = ensemble @ W + params['lin_b']
    return jax.nn.log_softmax(out, axis=1)


def make_params(key, vocab, C, T, O):
    ks = jax.random.split(key, 12)
    p = {'embedding': 0.1 * jax.random.normal(ks[0], (vocab, C), jnp.float32),
         'w_trln': 0.1 * jax.random.normal(ks[1], (C, T), jnp.float32)}
    for k in range(1, 5):
        p['w%d' % k] = 0.1 * jax.random.normal(ks[1 + k], (k, C, C), jnp.float32)
        p['b%d' % k] = 0.1 * jax.random.normal(ks[5 + k], (1, 1, C), jnp.float32)
    F = C + T + 1                                   # analogue of in_features=801
    W = 0.1 * jax.random.normal(ks[10], (F, O), jnp.float32)
    p['lin_wp'] = W[:C]
    p['lin_wt'] = W[C:C + T]
    p['lin_wl'] = W[C + T:].reshape(1, O)
    p['lin_b'] = 0.1 * jax.random.normal(ks[11], (1, O), jnp.float32)
    return p


if __name__ == "__main__":
    key = jax.random.PRNGKey(0)
    # vocab, in_channels, seq, batch, trln dim, classes
    V, C, S, B, T, O = 50, 32, 8, 16, 16, 5
    k_tok, k_par = jax.random.split(key)
    tokens = jax.random.randint(k_tok, (S, B), 0, V, dtype=jnp.int32)   # (seq, batch) torchtext layout
    lengths = jnp.full((B,), S, dtype=jnp.int32)
    params = make_params(k_par, V, C, T, O)

    logits = jax.block_until_ready(cnn_trln_forward(tokens, lengths, params, tile_b=8))
    ref = jax.block_until_ready(reference_forward(tokens, lengths, params))

    assert logits.shape == (B, O) and logits.dtype == jnp.float32
    np.testing.assert_allclose(np.asarray(logits), np.asarray(ref), rtol=2e-2, atol=2e-2)
    print("KERNEL_OK")
</pallas_src>

<mosaic_0001>
module attributes {stable_mosaic.version = 11 : i64} {
  func.func @cnn_trln_kernel(%arg0: i32, %arg1: memref<8x8x32xbf16, #tpu.memory_space<vmem>>, %arg2: memref<8x1xf32, #tpu.memory_space<vmem>>, %arg3: memref<320x32xbf16, #tpu.memory_space<vmem>>, %arg4: memref<4x32xf32, #tpu.memory_space<vmem>>, %arg5: memref<32x16xf32, #tpu.memory_space<vmem>>, %arg6: memref<50x128xf32, #tpu.memory_space<vmem>>, %arg7: memref<8x128xf32, #tpu.memory_space<vmem>>) attributes {dimension_semantics = [#tpu.dimension_semantics<parallel>], iteration_bounds = array<i64: 2>, scalar_prefetch = 0 : i64, scratch_operands = 0 : i64, tpu.core_type = #tpu.core_type<tc>, window_params = [{transform_indices = @transform_0, window_bounds = array<i64: 8, 8, 32>}, {transform_indices = @transform_1, window_bounds = array<i64: 8, 1>}, {pipeline_mode = #tpu.pipeline_mode<synchronous>, transform_indices = @transform_2, window_bounds = array<i64: 320, 32>}, {pipeline_mode = #tpu.pipeline_mode<synchronous>, transform_indices = @transform_3, window_bounds = array<i64: 4, 32>}, {pipeline_mode = #tpu.pipeline_mode<synchronous>, transform_indices = @transform_4, window_bounds = array<i64: 32, 16>}, {pipeline_mode = #tpu.pipeline_mode<synchronous>, transform_indices = @transform_5, window_bounds = array<i64: 50, 128>}, {transform_indices = @transform_6, window_bounds = array<i64: 8, 128>}]} {
    %c0 = arith.constant 0 : index
    %c0_0 = arith.constant 0 : index
    %c0_1 = arith.constant 0 : index
    %0 = vector.load %arg1[%c0, %c0_0, %c0_1] : memref<8x8x32xbf16, #tpu.memory_space<vmem>>, vector<8x8x32xbf16>
    %1 = arith.extf %0 : vector<8x8x32xbf16> to vector<8x8x32xf32>
    %cst = arith.constant dense<0.000000e+00> : vector<8x32xf32>
    %2 = vector.multi_reduction <add>, %1, %cst [1] : vector<8x8x32xf32> to vector<8x32xf32>
    %cst_2 = arith.constant 1.250000e-01 : f32
    %3 = vector.broadcast %cst_2 : f32 to vector<8x32xf32>
    %4 = arith.mulf %2, %3 : vector<8x32xf32>
    %c0_3 = arith.constant 0 : index
    %c0_4 = arith.constant 0 : index
    %5 = vector.load %arg5[%c0_3, %c0_4] : memref<32x16xf32, #tpu.memory_space<vmem>>, vector<32x16xf32>
    %cst_5 = arith.constant dense<0.000000e+00> : vector<8x16xf32>
    %6 = tpu.matmul %4, %5, %cst_5 {dimension_numbers = #tpu.dot_dimension_numbers<[1], [0], [0], [1], [0, 0, 1, 1], [], []>} : vector<8x32xf32>, vector<32x16xf32>, vector<8x16xf32> -> vector<8x16xf32>
    %7 = math.tanh %6 : vector<8x16xf32>
    %cst_6 = arith.constant 0.000000e+00 : f32
    %8 = vector.broadcast %cst_6 : f32 to vector<8x32xf32>
    %9 = arith.truncf %1 : vector<8x8x32xf32> to vector<8x8x32xbf16>
    %c0_7 = arith.constant 0 : index
    %c0_8 = arith.constant 0 : index
    %10 = vector.load %arg3[%c0_7, %c0_8] : memref<320x32xbf16, #tpu.memory_space<vmem>>, vector<32x32xbf16>
    "tpu.trace_start"() <{level = 10 : i32, message = "blk,kc->blc"}> : () -> ()
    %cst_9 = arith.constant dense<0.000000e+00> : vector<8x8x32xf32>
    %11 = tpu.matmul %9, %10, %cst_9 {dimension_numbers = #tpu.dot_dimension_numbers<[2], [0], [0, 1], [1], [0, 0, 0, 1, 1, 1], [], []>} : vector<8x8x32xbf16>, vector<32x32xbf16>, vector<8x8x32xf32> -> vector<8x8x32xf32>
    "tpu.trace_stop"() : () -> ()
    %c0_10 = arith.constant 0 : index
    %c0_11 = arith.constant 0 : index
    %12 = vector.load %arg4[%c0_10, %c0_11] : memref<4x32xf32, #tpu.memory_space<vmem>>, vector<1x32xf32>
    %13 = vector.shape_cast %12 : vector<1x32xf32> to vector<1x1x32xf32>
    %14 = vector.broadcast %13 : vector<1x1x32xf32> to vector<8x8x32xf32>
    %15 = arith.addf %11, %14 : vector<8x8x32xf32>
    %cst_12 = arith.constant 0.000000e+00 : f32
    %16 = vector.broadcast %cst_12 : f32 to vector<8x8x32xf32>
    %17 = arith.maximumf %15, %16 : vector<8x8x32xf32>
    %cst_13 = arith.constant dense<0xFF800000> : vector<8x32xf32>
    %18 = vector.multi_reduction <maximumf>, %17, %cst_13 [1] : vector<8x8x32xf32> to vector<8x32xf32>
    %19 = arith.maximumf %8, %18 : vector<8x32xf32>
    %20 = vector.extract_strided_slice %1 {offsets = [0, 0, 0], sizes = [8, 7, 32], strides = [1, 1, 1]} : vector<8x8x32xf32> to vector<8x7x32xf32>
    %21 = vector.extract_strided_slice %1 {offsets = [0, 1, 0], sizes = [8, 7, 32], strides = [1, 1, 1]} : vector<8x8x32xf32> to vector<8x7x32xf32>
    %22 = tpu.concatenate %20, %21 in 2 : vector<8x7x32xf32>, vector<8x7x32xf32> -> vector<8x7x64xf32>
    %23 = arith.truncf %22 : vector<8x7x64xf32> to vector<8x7x64xbf16>
    %c32 = arith.constant 32 : index
    %c0_14 = arith.constant 0 : index
    %24 = vector.load %arg3[%c32, %c0_14] : memref<320x32xbf16, #tpu.memory_space<vmem>>, vector<64x32xbf16>
    "tpu.trace_start"() <{level = 10 : i32, message = "blk,kc->blc"}> : () -> ()
    %cst_15 = arith.constant dense<0.000000e+00> : vector<8x7x32xf32>
    %25 = tpu.matmul %23, %24, %cst_15 {dimension_numbers = #tpu.dot_dimension_numbers<[2], [0], [0, 1], [1], [0, 0, 0, 1, 1, 1], [], []>} : vector<8x7x64xbf16>, vector<64x32xbf16>, vector<8x7x32xf32> -> vector<8x7x32xf32>
    "tpu.trace_stop"() : () -> ()
    %c1 = arith.constant 1 : index
    %c0_16 = arith.constant 0 : index
    %26 = vector.load %arg4[%c1, %c0_16] : memref<4x32xf32, #tpu.memory_space<vmem>>, vector<1x32xf32>
    %27 = vector.shape_cast %26 : vector<1x32xf32> to vector<1x1x32xf32>
    %28 = vector.broadcast %27 : vector<1x1x32xf32> to vector<8x7x32xf32>
    %29 = arith.addf %25, %28 : vector<8x7x32xf32>
    %cst_17 = arith.constant 0.000000e+00 : f32
    %30 = vector.broadcast %cst_17 : f32 to vector<8x7x32xf32>
    %31 = arith.maximumf %29, %30 : vector<8x7x32xf32>
    %cst_18 = arith.constant dense<0xFF800000> : vector<8x32xf32>
    %32 = vector.multi_reduction <maximumf>, %31, %cst_18 [1] : vector<8x7x32xf32> to vector<8x32xf32>
    %33 = arith.maximumf %19, %32 : vector<8x32xf32>
    %34 = vector.extract_strided_slice %1 {offsets = [0, 0, 0], sizes = [8, 6, 32], strides = [1, 1, 1]} : vector<8x8x32xf32> to vector<8x6x32xf32>
    %35 = vector.extract_strided_slice %1 {offsets = [0, 1, 0], sizes = [8, 6, 32], strides = [1, 1, 1]} : vector<8x8x32xf32> to vector<8x6x32xf32>
    %36 = vector.extract_strided_slice %1 {offsets = [0, 2, 0], sizes = [8, 6, 32], strides = [1, 1, 1]} : vector<8x8x32xf32> to vector<8x6x32xf32>
    %37 = tpu.concatenate %34, %35, %36 in 2 : vector<8x6x32xf32>, vector<8x6x32xf32>, vector<8x6x32xf32> -> vector<8x6x96xf32>
    %38 = arith.truncf %37 : vector<8x6x96xf32> to vector<8x6x96xbf16>
    %c96 = arith.constant 96 : index
    %c0_19 = arith.constant 0 : index
    %39 = vector.load %arg3[%c96, %c0_19] : memref<320x32xbf16, #tpu.memory_space<vmem>>, vector<96x32xbf16>
    "tpu.trace_start"() <{level = 10 : i32, message = "blk,kc->blc"}> : () -> ()
    %cst_20 = arith.constant dense<0.000000e+00> : vector<8x6x32xf32>
    %40 = tpu.matmul %38, %39, %cst_20 {dimension_numbers = #tpu.dot_dimension_numbers<[2], [0], [0, 1], [1], [0, 0, 0, 1, 1, 1], [], []>} : vector<8x6x96xbf16>, vector<96x32xbf16>, vector<8x6x32xf32> -> vector<8x6x32xf32>
    "tpu.trace_stop"() : () -> ()
    %c2 = arith.constant 2 : index
    %c0_21 = arith.constant 0 : index
    %41 = vector.load %arg4[%c2, %c0_21] : memref<4x32xf32, #tpu.memory_space<vmem>>, vector<1x32xf32>
    %42 = vector.shape_cast %41 : vector<1x32xf32> to vector<1x1x32xf32>
    %43 = vector.broadcast %42 : vector<1x1x32xf32> to vector<8x6x32xf32>
    %44 = arith.addf %40, %43 : vector<8x6x32xf32>
    %cst_22 = arith.constant 0.000000e+00 : f32
    %45 = vector.broadcast %cst_22 : f32 to vector<8x6x32xf32>
    %46 = arith.maximumf %44, %45 : vector<8x6x32xf32>
    %cst_23 = arith.constant dense<0xFF800000> : vector<8x32xf32>
    %47 = vector.multi_reduction <maximumf>, %46, %cst_23 [1] : vector<8x6x32xf32> to vector<8x32xf32>
    %48 = arith.maximumf %33, %47 : vector<8x32xf32>
    %49 = vector.extract_strided_slice %1 {offsets = [0, 0, 0], sizes = [8, 5, 32], strides = [1, 1, 1]} : vector<8x8x32xf32> to vector<8x5x32xf32>
    %50 = vector.extract_strided_slice %1 {offsets = [0, 1, 0], sizes = [8, 5, 32], strides = [1, 1, 1]} : vector<8x8x32xf32> to vector<8x5x32xf32>
    %51 = vector.extract_strided_slice %1 {offsets = [0, 2, 0], sizes = [8, 5, 32], strides = [1, 1, 1]} : vector<8x8x32xf32> to vector<8x5x32xf32>
    %52 = vector.extract_strided_slice %1 {offsets = [0, 3, 0], sizes = [8, 5, 32], strides = [1, 1, 1]} : vector<8x8x32xf32> to vector<8x5x32xf32>
    %53 = tpu.concatenate %49, %50, %51, %52 in 2 : vector<8x5x32xf32>, vector<8x5x32xf32>, vector<8x5x32xf32>, vector<8x5x32xf32> -> vector<8x5x128xf32>
    %54 = arith.truncf %53 : vector<8x5x128xf32> to vector<8x5x128xbf16>
    %c192 = arith.constant 192 : index
    %c0_24 = arith.constant 0 : index
    %55 = vector.load %arg3[%c192, %c0_24] : memref<320x32xbf16, #tpu.memory_space<vmem>>, vector<128x32xbf16>
    "tpu.trace_start"() <{level = 10 : i32, message = "blk,kc->blc"}> : () -> ()
    %cst_25 = arith.constant dense<0.000000e+00> : vector<8x5x32xf32>
    %56 = tpu.matmul %54, %55, %cst_25 {dimension_numbers = #tpu.dot_dimension_numbers<[2], [0], [0, 1], [1], [0, 0, 0, 1, 1, 1], [], []>} : vector<8x5x128xbf16>, vector<128x32xbf16>, vector<8x5x32xf32> -> vector<8x5x32xf32>
    "tpu.trace_stop"() : () -> ()
    %c3 = arith.constant 3 : index
    %c0_26 = arith.constant 0 : index
    %57 = vector.load %arg4[%c3, %c0_26] : memref<4x32xf32, #tpu.memory_space<vmem>>, vector<1x32xf32>
    %58 = vector.shape_cast %57 : vector<1x32xf32> to vector<1x1x32xf32>
    %59 = vector.broadcast %58 : vector<1x1x32xf32> to vector<8x5x32xf32>
    %60 = arith.addf %56, %59 : vector<8x5x32xf32>
    %cst_27 = arith.constant 0.000000e+00 : f32
    %61 = vector.broadcast %cst_27 : f32 to vector<8x5x32xf32>
    %62 = arith.maximumf %60, %61 : vector<8x5x32xf32>
    %cst_28 = arith.constant dense<0xFF800000> : vector<8x32xf32>
    %63 = vector.multi_reduction <maximumf>, %62, %cst_28 [1] : vector<8x5x32xf32> to vector<8x32xf32>
    %64 = arith.maximumf %48, %63 : vector<8x32xf32>
    %c0_29 = arith.constant 0 : index
    %c0_30 = arith.constant 0 : index
    %65 = vector.load %arg6[%c0_29, %c0_30] : memref<50x128xf32, #tpu.memory_space<vmem>>, vector<32x128xf32>
    %c32_31 = arith.constant 32 : index
    %c0_32 = arith.constant 0 : index
    %66 = vector.load %arg6[%c32_31, %c0_32] : memref<50x128xf32, #tpu.memory_space<vmem>>, vector<16x128xf32>
    %c48 = arith.constant 48 : index
    %c0_33 = arith.constant 0 : index
    %67 = vector.load %arg6[%c48, %c0_33] : memref<50x128xf32, #tpu.memory_space<vmem>>, vector<1x128xf32>
    %c49 = arith.constant 49 : index
    %c0_34 = arith.constant 0 : index
    %68 = vector.load %arg6[%c49, %c0_34] : memref<50x128xf32, #tpu.memory_space<vmem>>, vector<1x128xf32>
    %cst_35 = arith.constant dense<0.000000e+00> : vector<8x128xf32>
    %69 = tpu.matmul %64, %65, %cst_35 {dimension_numbers = #tpu.dot_dimension_numbers<[1], [0], [0], [1], [0, 0, 1, 1], [], []>} : vector<8x32xf32>, vector<32x128xf32>, vector<8x128xf32> -> vector<8x128xf32>
    %cst_36 = arith.constant dense<0.000000e+00> : vector<8x128xf32>
    %70 = tpu.matmul %7, %66, %cst_36 {dimension_numbers = #tpu.dot_dimension_numbers<[1], [0], [0], [1], [0, 0, 1, 1], [], []>} : vector<8x16xf32>, vector<16x128xf32>, vector<8x128xf32> -> vector<8x128xf32>
    %71 = arith.addf %69, %70 : vector<8x128xf32>
    %c0_37 = arith.constant 0 : index
    %c0_38 = arith.constant 0 : index
    %72 = vector.load %arg2[%c0_37, %c0_38] : memref<8x1xf32, #tpu.memory_space<vmem>>, vector<8x1xf32>
    %73 = vector.broadcast %72 : vector<8x1xf32> to vector<8x128xf32>
    %74 = vector.broadcast %67 : vector<1x128xf32> to vector<8x128xf32>
    %75 = arith.mulf %73, %74 : vector<8x128xf32>
    %76 = arith.addf %71, %75 : vector<8x128xf32>
    %77 = vector.broadcast %68 : vector<1x128xf32> to vector<8x128xf32>
    %78 = arith.addf %76, %77 : vector<8x128xf32>
    %79 = tpu.iota {dimensions = array<i32: 1>} : vector<8x128xi32>
    %c5_i32 = arith.constant 5 : i32
    %80 = vector.broadcast %c5_i32 : i32 to vector<8x128xi32>
    %81 = arith.cmpi slt, %79, %80 : vector<8x128xi32>
    %cst_39 = arith.constant -1.000000e+30 : f32
    %82 = vector.broadcast %cst_39 : f32 to vector<8x128xf32>
    %83 = arith.select %81, %78, %82 : vector<8x128xi1>, vector<8x128xf32>
    %cst_40 = arith.constant dense<0xFF800000> : vector<8xf32>
    %84 = vector.multi_reduction <maximumf>, %83, %cst_40 [1] : vector<8x128xf32> to vector<8xf32>
    %85 = vector.shape_cast %84 : vector<8xf32> to vector<8x1xf32>
    %86 = vector.broadcast %85 : vector<8x1xf32> to vector<8x128xf32>
    %87 = arith.subf %83, %86 : vector<8x128xf32>
    %88 = math.exp %87 : vector<8x128xf32>
    %cst_41 = arith.constant dense<0.000000e+00> : vector<8xf32>
    %89 = vector.multi_reduction <add>, %88, %cst_41 [1] : vector<8x128xf32> to vector<8xf32>
    %90 = vector.shape_cast %89 : vector<8xf32> to vector<8x1xf32>
    %91 = math.log %90 : vector<8x1xf32>
    %92 = vector.broadcast %91 : vector<8x1xf32> to vector<8x128xf32>
    %93 = arith.subf %87, %92 : vector<8x128xf32>
    %c0_42 = arith.constant 0 : index
    %c0_43 = arith.constant 0 : index
    %94 = vector.load %arg7[%c0_42, %c0_43] : memref<8x128xf32, #tpu.memory_space<vmem>>, vector<8x128xf32>
    tpu.vector_store %arg7[%c0_42, %c0_43], %93 {strides = array<i32>} : memref<8x128xf32, #tpu.memory_space<vmem>>, vector<8x128xf32>,
    return
  }
  func.func @transform_0(%arg0: i32) -> (i32, i32, i32) {
    %c0_i32 = arith.constant 0 : i32
    %c0_i32_0 = arith.constant 0 : i32
    %c0_i32_1 = arith.constant 0 : i32
    return %arg0, %c0_i32, %c0_i32_0 : i32, i32, i32
  }
  func.func @transform_1(%arg0: i32) -> (i32, i32) {
    %c0_i32 = arith.constant 0 : i32
    %c0_i32_0 = arith.constant 0 : i32
    return %arg0, %c0_i32 : i32, i32
  }
  func.func @transform_2(%arg0: i32) -> (i32, i32) {
    %c0_i32 = arith.constant 0 : i32
    %c0_i32_0 = arith.constant 0 : i32
    %c0_i32_1 = arith.constant 0 : i32
    return %c0_i32, %c0_i32_0 : i32, i32
  }
  func.func @transform_3(%arg0: i32) -> (i32, i32) {
    %c0_i32 = arith.constant 0 : i32
    %c0_i32_0 = arith.constant 0 : i32
    %c0_i32_1 = arith.constant 0 : i32
    return %c0_i32, %c0_i32_0 : i32, i32
  }
  func.func @transform_4(%arg0: i32) -> (i32, i32) {
    %c0_i32 = arith.constant 0 : i32
    %c0_i32_0 = arith.constant 0 : i32
    %c0_i32_1 = arith.constant 0 : i32
    return %c0_i32, %c0_i32_0 : i32, i32
  }
  func.func @transform_5(%arg0: i32) -> (i32, i32) {
    %c0_i32 = arith.constant 0 : i32
    %c0_i32_0 = arith.constant 0 : i32
    %c0_i32_1 = arith.constant 0 : i32
    return %c0_i32, %c0_i32_0 : i32, i32
  }
  func.func @transform_6(%arg0: i32) -> (i32, i32) {
    %c0_i32 = arith.constant 0 : i32
    %c0_i32_0 = arith.constant 0 : i32
    return %arg0, %c0_i32 : i32, i32
  }
}

</mosaic_0001>

<llo_original>
// kernel: tpu_custom_call.1
$region0: #{tpu_custom_call.1}
  #allocation0 [shape = 'u32[]', space=smem, size = 0x4, offset = 0x4, fixed_abs, tag = 'smem constant byte address 0x4 - core index']
  #allocation1 [shape = 'u32[144,128]{1,0:T(1,128)}', space=vmem, size = 0x12000, scoped, tag = 'internal scratch']
  %s0 = inlined_call_operand.vmem [shape: bf16[16,8,32], index: 0, kind: input, shape index: {}]
  %s1 = inlined_call_operand.vmem [shape: f32[16,1], index: 1, kind: input, shape index: {}]
  %s2 = inlined_call_operand.vmem [shape: bf16[320,32], index: 2, kind: input, shape index: {}]
  %s3 = inlined_call_operand.vmem [shape: f32[4,32], index: 3, kind: input, shape index: {}]
  %s4 = inlined_call_operand.vmem [shape: f32[32,16], index: 4, kind: input, shape index: {}]
  %s5 = inlined_call_operand.vmem [shape: f32[50,128], index: 5, kind: input, shape index: {}]
  %s6 = inlined_call_operand.hbm [shape: f32[16,128], index: 6, kind: output, shape index: {}]
  %s7 = sld [smem:[#allocation0]]
  $region57: #{tpu_custom_call.1} parent=0
    _
  %s9 = ssub.s32 1, %s7
  %s10 = scalar_select 0, %s9, %s7
  $region1: #{tpu_custom_call.1} parent=0
    #allocation2 [shape = 'u8[8192]{0}', space=vmem, size = 0x2000, scoped, tag = 'output window, operand 0']
    #allocation3 [shape = 's32[2]{0}', space=sflag, size = 0x8, scoped, tag = 'scoped memory for tpu_custom_call.1']
    %11 = vsyncpa [#allocation3], 0
    %s12 = scalar_lea.sflag [#allocation3], 1
    %13 = vsyncpa %s12, 0
    loop: start=0, step=1, limit=4
    $region2: #{tpu_custom_call.1} parent=1 // loop_pre_header
      _
    $region3: #{tpu_custom_call.1} parent=1 // loop_header
      %s15 = sphi 0, %s19
      %p16 = scmp.ge.s32.totalorder %s15, 4
      %s25 = sphi 0, %s27
      %s28 = sphi 0, %s25
      %s29 = sphi 0, %s28
      %s45 = sphi 0, %s29
      %s51 = sphi 0, %s53
      %s54 = sphi 0, %s51
      %s55 = sphi 0, %s54
      %s71 = sphi 0, %s55
      %s75 = sphi 0, %s75
      %s77 = sphi 0, %s75
      %s78 = sphi 0, %s77
      %s92 = sphi 0, %s78
      %s96 = sphi 0, %s96
      %s98 = sphi 0, %s96
      %s99 = sphi 0, %s98
      %s113 = sphi 0, %s99
      %s117 = sphi 0, %s117
      %s119 = sphi 0, %s117
      %s120 = sphi 0, %s119
      %s134 = sphi 0, %s120
      %s138 = sphi 0, %s138
      %s140 = sphi 0, %s138
      %s141 = sphi 0, %s140
      %s155 = sphi 0, %s141
      %s161 = sphi 0, %s163
      %s164 = sphi 0, %s161
      %s165 = sphi 0, %s164
      %s181 = sphi 0, %s165
    $region4: #{tpu_custom_call.1} parent=1 // loop_header_branch
      %18 = sbr.rel (%p16) target = $region8
    $region5: #{tpu_custom_call.1} parent=1 // loop_body
      %s20 = ssub.s32 %s15, 1
      %s21 = ssub.s32 %s15, 2
      %s22 = sadd.s32 %s15, 1
      %s23 = ssub.s32 %s15, %s22
      %p24 = scmp.eq.s32.totalorder %s23, 0
      %s26 = sadd.s32 %s25, 1
      %s27 = scalar_select %p24, %s25, %s26
      %p30 = pneg %p24
      %p31 = scmp.eq.s32.totalorder %s15, 1
      %p32 = por %p30, %p31
      %p33 = scmp.ne.s32.totalorder %s25, %s28
      %p34 = scmp.eq.s32.totalorder %s15, 0
      %p35 = por %p33, %p34
      %p36 = scmp.ne.s32.totalorder %s25, %s28
      %p37 = scmp.eq.s32.totalorder %s20, 1
      %p38 = por %p36, %p37
      %p39 = scmp.ne.s32.totalorder %s28, %s29
      %p40 = scmp.eq.s32.totalorder %s20, 0
      %p41 = por %p39, %p40
      %p42 = scmp.ne.s32.totalorder %s28, %s29
      %p43 = scmp.eq.s32.totalorder %s21, 1
      %p44 = por %p42, %p43
      %p46 = scmp.ne.s32.totalorder %s29, %s45
      %p47 = scmp.eq.s32.totalorder %s21, 0
      %p48 = por %p46, %p47
      %s49 = ssub.s32 %s15, %s22
      %p50 = scmp.eq.s32.totalorder %s49, 0
      %s52 = sadd.s32 %s51, 1
      %s53 = scalar_select %p50, %s51, %s52
      %p56 = pneg %p50
      %p57 = scmp.eq.s32.totalorder %s15, 1
      %p58 = por %p56, %p57
      %p59 = scmp.ne.s32.totalorder %s51, %s54
      %p60 = scmp.eq.s32.totalorder %s15, 0
      %p61 = por %p59, %p60
      %p62 = scmp.ne.s32.totalorder %s51, %s54
      %p63 = scmp.eq.s32.totalorder %s20, 1
      %p64 = por %p62, %p63
      %p65 = scmp.ne.s32.totalorder %s54, %s55
      %p66 = scmp.eq.s32.totalorder %s20, 0
      %p67 = por %p65, %p66
      %p68 = scmp.ne.s32.totalorder %s54, %s55
      %p69 = scmp.eq.s32.totalorder %s21, 1
      %p70 = por %p68, %p69
      %p72 = scmp.ne.s32.totalorder %s55, %s71
      %p73 = scmp.eq.s32.totalorder %s21, 0
      %p74 = por %p72, %p73
      %s76 = sadd.s32 %s75, 1
      %p79 = scmp.eq.s32.totalorder %s15, 1
      %p80 = scmp.ne.s32.totalorder %s75, %s77
      %p81 = scmp.eq.s32.totalorder %s15, 0
      %p82 = por %p80, %p81
      %p83 = scmp.ne.s32.totalorder %s75, %s77
      %p84 = scmp.eq.s32.totalorder %s20, 1
      %p85 = por %p83, %p84
      %p86 = scmp.ne.s32.totalorder %s77, %s78
      %p87 = scmp.eq.s32.totalorder %s20, 0
      %p88 = por %p86, %p87
      %p89 = scmp.ne.s32.totalorder %s77, %s78
      %p90 = scmp.eq.s32.totalorder %s21, 1
      %p91 = por %p89, %p90
      %p93 = scmp.ne.s32.totalorder %s78, %s92
      %p94 = scmp.eq.s32.totalorder %s21, 0
      %p95 = por %p93, %p94
      %s97 = sadd.s32 %s96, 1
      %p100 = scmp.eq.s32.totalorder %s15, 1
      %p101 = scmp.ne.s32.totalorder %s96, %s98
      %p102 = scmp.eq.s32.totalorder %s15, 0
      %p103 = por %p101, %p102
      %p104 = scmp.ne.s32.totalorder %s96, %s98
      %p105 = scmp.eq.s32.totalorder %s20, 1
      %p106 = por %p104, %p105
      %p107 = scmp.ne.s32.totalorder %s98, %s99
      %p108 = scmp.eq.s32.totalorder %s20, 0
      %p109 = por %p107, %p108
      %p110 = scmp.ne.s32.totalorder %s98, %s99
      %p111 = scmp.eq.s32.totalorder %s21, 1
      %p112 = por %p110, %p111
      %p114 = scmp.ne.s32.totalorder %s99, %s113
      %p115 = scmp.eq.s32.totalorder %s21, 0
      %p116 = por %p114, %p115
      %s118 = sadd.s32 %s117, 1
      %p121 = scmp.eq.s32.totalorder %s15, 1
      %p122 = scmp.ne.s32.totalorder %s117, %s119
      %p123 = scmp.eq.s32.totalorder %s15, 0
      %p124 = por %p122, %p123
      %p125 = scmp.ne.s32.totalorder %s117, %s119
      %p126 = scmp.eq.s32.totalorder %s20, 1
      %p127 = por %p125, %p126
      %p128 = scmp.ne.s32.totalorder %s119, %s120
      %p129 = scmp.eq.s32.totalorder %s20, 0
      %p130 = por %p128, %p129
      %p131 = scmp.ne.s32.totalorder %s119, %s120
      %p132 = scmp.eq.s32.totalorder %s21, 1
      %p133 = por %p131, %p132
      %p135 = scmp.ne.s32.totalorder %s120, %s134
      %p136 = scmp.eq.s32.totalorder %s21, 0
      %p137 = por %p135, %p136
      %s139 = sadd.s32 %s138, 1
      %p142 = scmp.eq.s32.totalorder %s15, 1
      %p143 = scmp.ne.s32.totalorder %s138, %s140
      %p144 = scmp.eq.s32.totalorder %s15, 0
      %p145 = por %p143, %p144
      %p146 = scmp.ne.s32.totalorder %s138, %s140
      %p147 = scmp.eq.s32.totalorder %s20, 1
      %p148 = por %p146, %p147
      %p149 = scmp.ne.s32.totalorder %s140, %s141
      %p150 = scmp.eq.s32.totalorder %s20, 0
      %p151 = por %p149, %p150
      %p152 = scmp.ne.s32.totalorder %s140, %s141
      %p153 = scmp.eq.s32.totalorder %s21, 1
      %p154 = por %p152, %p153
      %p156 = scmp.ne.s32.totalorder %s141, %s155
      %p157 = scmp.eq.s32.totalorder %s21, 0
      %p158 = por %p156, %p157
      %s159 = ssub.s32 %s15, %s22
      %p160 = scmp.eq.s32.totalorder %s159, 0
      %s162 = sadd.s32 %s161, 1
      %s163 = scalar_select %p160, %s161, %s162
      %p166 = pneg %p160
      %p167 = scmp.eq.s32.totalorder %s15, 1
      %p168 = por %p166, %p167
      %p169 = scmp.ne.s32.totalorder %s161, %s164
      %p170 = scmp.eq.s32.totalorder %s15, 0
      %p171 = por %p169, %p170
      %p172 = scmp.ne.s32.totalorder %s161, %s164
      %p173 = scmp.eq.s32.totalorder %s20, 1
      %p174 = por %p172, %p173
      %p175 = scmp.ne.s32.totalorder %s164, %s165
      %p176 = scmp.eq.s32.totalorder %s20, 0
      %p177 = por %p175, %p176
      %p178 = scmp.ne.s32.totalorder %s164, %s165
      %p179 = scmp.eq.s32.totalorder %s21, 1
      %p180 = por %p178, %p179
      %p182 = scmp.ne.s32.totalorder %s165, %s181
      %p183 = scmp.eq.s32.totalorder %s21, 0
      %p184 = por %p182, %p183
      %p185 = scmp.le.s32.totalorder 1, %s15
      %p186 = scmp.lt.s32.totalorder %s15, 3
      %p187 = pnand %p185, %p186
      %p188 = pneg %p187
      // Predicated region
      $region9: #{tpu_custom_call.1} parent=5 // pred_check
        _
      $region10: #{tpu_custom_call.1} parent=5 // pred_check_branch
        %190 = sbr.rel (%p187) target = $region12
      $region11: #{tpu_custom_call.1} parent=5 // pred_region
        %s191 = ssub.s32 %s15, 1
        // Predicated region
        $region13: #{tpu_custom_call.1} parent=11 // pred_check
          %p192 = pneg %p88
        $region14: #{tpu_custom_call.1} parent=11 // pred_check_branch
          %194 = sbr.rel (%p192) target = $region16
        $region15: #{tpu_custom_call.1} parent=11 // pred_region
          _
        $region16: #{tpu_custom_call.1} parent=11 // pred_fallthru
          _
        // Predicated region
        $region17: #{tpu_custom_call.1} parent=11 // pred_check
          %p195 = pneg %p109
        $region18: #{tpu_custom_call.1} parent=11 // pred_check_branch
          %197 = sbr.rel (%p195) target = $region20
        $region19: #{tpu_custom_call.1} parent=11 // pred_region
          _
        $region20: #{tpu_custom_call.1} parent=11 // pred_fallthru
          _
        // Predicated region
        $region21: #{tpu_custom_call.1} parent=11 // pred_check
          %p198 = pneg %p130
        $region22: #{tpu_custom_call.1} parent=11 // pred_check_branch
          %200 = sbr.rel (%p198) target = $region24
        $region23: #{tpu_custom_call.1} parent=11 // pred_region
          _
        $region24: #{tpu_custom_call.1} parent=11 // pred_fallthru
          _
        // Predicated region
        $region25: #{tpu_custom_call.1} parent=11 // pred_check
          %p201 = pneg %p151
        $region26: #{tpu_custom_call.1} parent=11 // pred_check_branch
          %203 = sbr.rel (%p201) target = $region28
        $region27: #{tpu_custom_call.1} parent=11 // pred_region
          _
        $region28: #{tpu_custom_call.1} parent=11 // pred_fallthru
          _
      $region12: #{tpu_custom_call.1} parent=5 // pred_fallthru
        _
      %p204 = scmp.lt.s32.totalorder %s15, 2
      // Predicated region
      $region29: #{tpu_custom_call.1} parent=5 // pred_check
        %p205 = pneg %p204
      $region30: #{tpu_custom_call.1} parent=5 // pred_check_branch
        %207 = sbr.rel (%p205) target = $region32
      $region31: #{tpu_custom_call.1} parent=5 // pred_region
        // Predicated region
        $region33: #{tpu_custom_call.1} parent=31 // pred_check
          %p208 = pneg %p35
        $region34: #{tpu_custom_call.1} parent=31 // pred_check_branch
          %210 = sbr.rel (%p208) target = $region36
        $region35: #{tpu_custom_call.1} parent=31 // pred_region
          %s211 = smul.u32 8, %s15
          %p212 = scmp.lt.s32.totalorder %s211, 15
          %s213 = scalar_select %p212, %s211, 15
          %s214 = smul.addr %s213, 4
          %s215 = scalar_lea.vmem %s0, %s214
          %s216 = smul.u32 8, %s15
        $region36: #{tpu_custom_call.1} parent=31 // pred_fallthru
          _
        // Predicated region
        $region37: #{tpu_custom_call.1} parent=31 // pred_check
          %p217 = pneg %p61
        $region38: #{tpu_custom_call.1} parent=31 // pred_check_branch
          %219 = sbr.rel (%p217) target = $region40
        $region39: #{tpu_custom_call.1} parent=31 // pred_region
          %p220 = scmp.lt.s32.totalorder %s15, 1
          %s221 = scalar_select %p220, %s15, 1
          %s222 = smul.addr %s221, 8
          %s223 = scalar_lea.vmem %s1, %s222
        $region40: #{tpu_custom_call.1} parent=31 // pred_fallthru
          _
      $region32: #{tpu_custom_call.1} parent=5 // pred_fallthru
        _
      %p224 = scmp.le.s32.totalorder 1, %s15
      %p225 = scmp.lt.s32.totalorder %s15, 3
      %p226 = pnand %p224, %p225
      %p227 = pneg %p226
      // Predicated region
      $region41: #{tpu_custom_call.1} parent=5 // pred_check
        _
      $region42: #{tpu_custom_call.1} parent=5 // pred_check_branch
        %229 = sbr.rel (%p226) target = $region44
      $region43: #{tpu_custom_call.1} parent=5 // pred_region
        %s230 = ssub.s32 %s15, 1
        %s231 = smul.u32 8, %s20
        %p232 = scmp.lt.s32.totalorder %s231, 15
        %s233 = scalar_select %p232, %s231, 15
        %s234 = smul.addr %s233, 4
        %s235 = scalar_lea.vmem %s0, %s234
        %p236 = pneg %p41
        %p237 = pneg %p38
        %p238 = scmp.lt.s32.totalorder %s20, 1
        %s239 = scalar_select %p238, %s20, 1
        %s240 = smul.addr %s239, 8
        %s241 = scalar_lea.vmem %s1, %s240
        %p242 = pneg %p67
        %p243 = pneg %p64
        %p244 = pneg %p88
        %p245 = pneg %p85
        %p246 = pneg %p109
        %p247 = pneg %p106
        %p248 = pneg %p130
        %p249 = pneg %p127
        %p250 = pneg %p151
        %p251 = pneg %p148
        %p252 = pneg %p177
        %p253 = pneg %p174
        %s254 = sand.u32 %s164, 1
        %s255 = scalar_lea.sflag [#allocation3], %s254
        %s256 = sand.u32 %s164, 1
        %s257 = smul.addr %s256, 8
        %s258 = scalar_lea.vmem [#allocation2], %s257
        %s259 = smul.u32 8, %s20
        %p260 = scmp.lt.s32.totalorder %s259, 15
        %s261 = scalar_select %p260, %s259, 15
        %s262 = smul.addr %s261, 4
        %s263 = scalar_lea.vmem %s0, %s262
        %s264 = smul.u32 8, %s20
        %p265 = scmp.lt.s32.totalorder %s20, 1
        %s266 = scalar_select %p265, %s20, 1
        %s267 = smul.addr %s266, 8
        %s268 = scalar_lea.vmem %s1, %s267
        %v270 = vld [vmem:[%s263] sm:$0xf]
        %v271 = vld [vmem:[%s263 + $0x4] sm:$0xf]
        %v272 = vld [vmem:[%s263 + $0x8] sm:$0xf]
        %v273 = vld [vmem:[%s263 + $0xc] sm:$0xf]
        %v274 = vld [vmem:[%s263 + $0x10] sm:$0xf]
        %v275 = vld [vmem:[%s263 + $0x14] sm:$0xf]
        %v276 = vld [vmem:[%s263 + $0x18] sm:$0xf]
        %v277 = vld [vmem:[%s263 + $0x1c] sm:$0xf]
        %v278 = vunpack.c.l.bf16 %v270
        %v279 = vunpack.c.l.bf16 %v271
        %v280 = vunpack.c.l.bf16 %v272
        %v281 = vunpack.c.l.bf16 %v273
        %v282 = vunpack.c.l.bf16 %v274
        %v283 = vunpack.c.l.bf16 %v275
        %v284 = vunpack.c.l.bf16 %v276
        %v285 = vunpack.c.l.bf16 %v277
        %vm286 = vcmask 261120
        %v287 = vsel %vm286, %v278, 0.0
        %v288 = vrot.slane %v287, 4
        %v289 = vadd.f32 %v287, %v288
        %v290 = vrot.slane %v289, 2
        %v291 = vadd.f32 %v289, %v290
        %v292 = vrot.slane %v291, 1
        %v293 = vadd.f32 %v291, %v292
        %v294 = vsel %vm286, %v279, 0.0
        %v295 = vrot.slane %v294, 4
        %v296 = vadd.f32 %v294, %v295
        %v297 = vrot.slane %v296, 2
        %v298 = vadd.f32 %v296, %v297
        %v299 = vrot.slane %v298, 1
        %v300 = vadd.f32 %v298, %v299
        %v301 = vsel %vm286, %v280, 0.0
        %v302 = vrot.slane %v301, 4
        %v303 = vadd.f32 %v301, %v302
        %v304 = vrot.slane %v303, 2
        %v305 = vadd.f32 %v303, %v304
        %v306 = vrot.slane %v305, 1
        %v307 = vadd.f32 %v305, %v306
        %v308 = vsel %vm286, %v281, 0.0
        %v309 = vrot.slane %v308, 4
        %v310 = vadd.f32 %v308, %v309
        %v311 = vrot.slane %v310, 2
        %v312 = vadd.f32 %v310, %v311
        %v313 = vrot.slane %v312, 1
        %v314 = vadd.f32 %v312, %v313
        %v315 = vsel %vm286, %v282, 0.0
        %v316 = vrot.slane %v315, 4
        %v317 = vadd.f32 %v315, %v316
        %v318 = vrot.slane %v317, 2
        %v319 = vadd.f32 %v317, %v318
        %v320 = vrot.slane %v319, 1
        %v321 = vadd.f32 %v319, %v320
        %v322 = vsel %vm286, %v283, 0.0
        %v323 = vrot.slane %v322, 4
        %v324 = vadd.f32 %v322, %v323
        %v325 = vrot.slane %v324, 2
        %v326 = vadd.f32 %v324, %v325
        %v327 = vrot.slane %v326, 1
        %v328 = vadd.f32 %v326, %v327
        %v329 = vsel %vm286, %v284, 0.0
        %v330 = vrot.slane %v329, 4
        %v331 = vadd.f32 %v329, %v330
        %v332 = vrot.slane %v331, 2
        %v333 = vadd.f32 %v331, %v332
        %v334 = vrot.slane %v333, 1
        %v335 = vadd.f32 %v333, %v334
        %v336 = vsel %vm286, %v285, 0.0
        %v337 = vrot.slane %v336, 4
        %v338 = vadd.f32 %v336, %v337
        %v339 = vrot.slane %v338, 2
        %v340 = vadd.f32 %v338, %v339
        %v341 = vrot.slane %v340, 1
        %v342 = vadd.f32 %v340, %v341
        %v343 = vmul.f32 %v293, 0.125
        %v344 = vmul.f32 %v300, 0.125
        %v345 = vmul.f32 %v307, 0.125
        %v346 = vmul.f32 %v314, 0.125
        %v347 = vmul.f32 %v321, 0.125
        %v348 = vmul.f32 %v328, 0.125
        %v349 = vmul.f32 %v335, 0.125
        %v350 = vmul.f32 %v342, 0.125
        %v351 = vld [vmem:[%s4] sm:$0xff]
        %v352 = vld [vmem:[%s4 + $0x8] sm:$0xff]
        %v353 = vld [vmem:[%s4 + $0x10] sm:$0xff]
        %v354 = vld [vmem:[%s4 + $0x18] sm:$0xff]
        %vm363 = vcmask 1041409
        %v364 = vsel %vm363, %v344, %v343
        %vm365 = vcmask 1042434
        %v366 = vsel %vm365, %v345, %v364
        %vm367 = vcmask 1043459
        %v368 = vsel %vm367, %v346, %v366
        %vm369 = vcmask 1044484
        %v370 = vsel %vm369, %v347, %v368
        %vm371 = vcmask 1045509
        %v372 = vsel %vm371, %v348, %v370
        %vm373 = vcmask 1046534
        %v374 = vsel %vm373, %v349, %v372
        %vm375 = vcmask 1047559
        %v376 = vsel %vm375, %v350, %v374
        %v377 = vsel %vm286, %v376, 0
        %379 = vmatprep.subr.mxu0 0.0
        %380 = vmatpush1.msra.mxu0 0.0
        %381 = vmatprep.subr.mxu0 0.0
        %382 = vmatpush1.msra.mxu0 0.0
        %383 = vmatprep.subr.mxu0 0.0
        %384 = vmatpush1.msra.mxu0 0.0
        %385 = vmatprep.subr.mxu0 0.0
        %386 = vmatpush1.msra.mxu0 0.0
        %387 = vmatprep.subr.mxu0 0.0
        %388 = vmatpush1.msra.mxu0 0.0
        %389 = vmatprep.subr.mxu0 0.0
        %390 = vmatpush1.msra.mxu0 0.0
        %391 = vmatprep.subr.mxu0 0.0
        %392 = vmatpush1.msra.mxu0 0.0
        %393 = vmatprep.subr.mxu0 0.0
        %394 = vmatpush1.msra.mxu0 0.0
        %395 = vmatprep.subr.mxu0 0.0
        %396 = vmatpush1.msra.mxu0 0.0
        %397 = vmatprep.subr.mxu0 0.0
        %398 = vmatpush1.msra.mxu0 0.0
        %399 = vmatprep.subr.mxu0 0.0
        %400 = vmatpush1.msra.mxu0 0.0
        %401 = vmatprep.subr.mxu0 0.0
        %402 = vmatpush1.msra.mxu0 0.0
        %403 = vmatprep.subr.mxu0 0.0
        %404 = vmatpush1.msra.mxu0 %v354
        %405 = vmatprep.subr.mxu0 0.0
        %406 = vmatpush1.msra.mxu0 %v353
        %407 = vmatprep.subr.mxu0 0.0
        %408 = vmatpush1.msra.mxu0 %v352
        %409 = vmatprep.subr.mxu0 0.0
        %410 = vmatpush1.msra.mxu0 %v351
        %411 = vmatprep.subr.mxu0 0.0
        %412 = vmatpush2.msra.mxu0 0.0
        %413 = vmatprep.subr.mxu0 0.0
        %414 = vmatpush2.msra.mxu0 0.0
        %415 = vmatprep.subr.mxu0 0.0
        %416 = vmatpush2.msra.mxu0 0.0
        %417 = vmatprep.subr.mxu0 0.0
        %418 = vmatpush2.msra.mxu0 0.0
        %419 = vmatprep.subr.mxu0 0.0
        %420 = vmatpush2.msra.mxu0 0.0
        %421 = vmatprep.subr.mxu0 0.0
        %422 = vmatpush2.msra.mxu0 0.0
        %423 = vmatprep.subr.mxu0 0.0
        %424 = vmatpush2.msra.mxu0 0.0
        %425 = vmatprep.subr.mxu0 0.0
        %426 = vmatpush2.msra.mxu0 0.0
        %427 = vmatprep.subr.mxu0 0.0
        %428 = vmatpush2.msra.mxu0 0.0
        %429 = vmatprep.subr.mxu0 0.0
        %430 = vmatpush2.msra.mxu0 0.0
        %431 = vmatprep.subr.mxu0 0.0
        %432 = vmatpush2.msra.mxu0 0.0
        %433 = vmatprep.subr.mxu0 0.0
        %434 = vmatpush2.msra.mxu0 0.0
        %435 = vmatprep.subr.mxu0 0.0
        %436 = vmatpush2.msra.mxu0 0.0
        %437 = vmatprep.subr.mxu0 0.0
        %438 = vmatpush2.msra.mxu0 0.0
        %439 = vmatprep.subr.mxu0 0.0
        %440 = vmatpush2.msra.mxu0 0.0
        %441 = vmatprep.subr.mxu0 0.0
        %442 = vmatpush2.msra.mxu0 0.0
        %443 = vmatprep.mubr.f32.mxu0 0.0
        %444 = vmatmul.mubr.f32.gmra.mxu0 %v377
        %v445 = vpop.f32.mrf.mxu0
        %v446 = vadd.f32 0.0, %v445
        %v447 = vpop.f32.mrf.mxu0
        %448 = vdwg.mxu0
        %v449 = vtanh.pop %v446
        %v450 = vld [vmem:[%s2] sm:$0xf]
        %v451 = vld [vmem:[%s2 + $0x4] sm:$0xf]
        %v452 = vld [vmem:[%s2 + $0x8] sm:$0xf]
        %v453 = vld [vmem:[%s2 + $0xc] sm:$0xf]
        %v454 = vld [vmem:[%s3] sm:$0x1]
        %v455 = vlaneseq
        %v456 = vshrl.u32 %v455, 7
        %v457 = vsub.s32 0, %v456
        %v458 = vrot.slane %v454, %v457
        %v467 = vunpack.c.l.b16 %v270
        %v468 = vunpack.c.l.b16 %v271
        %v469 = vunpack.c.l.b16 %v272
        %v470 = vunpack.c.l.b16 %v273
        %v471 = vunpack.c.l.b16 %v274
        %v472 = vunpack.c.l.b16 %v275
        %v473 = vunpack.c.l.b16 %v276
        %v474 = vunpack.c.l.b16 %v277
        %v475 = vpack.c.b16 %v468, %v467
        %v476 = vpack.c.b16 %v470, %v469
        %v477 = vpack.c.b16 %v472, %v471
        %v478 = vpack.c.b16 %v474, %v473
        %v483 = vunpack.c.l.b16 %v450
        %v484 = vunpack.c.l.b16 %v451
        %v485 = vunpack.c.l.b16 %v452
        %v486 = vunpack.c.l.b16 %v453
        %v487 = vpack.c.b16 %v484, %v483
        %v488 = vpack.c.b16 %v486, %v485
        %v492 = vsel %vm286, %v475, 0
        %v495 = vsel %vm286, %v476, 0
        %v498 = vsel %vm286, %v477, 0
        %v501 = vsel %vm286, %v478, 0
        %503 = vmatprep.subr.bf16.mxu0 0
        %504 = vmatpush1.bf16.msra.mxu0 0
        %505 = vmatprep.subr.bf16.mxu0 0
        %506 = vmatpush1.bf16.msra.mxu0 0
        %507 = vmatprep.subr.bf16.mxu0 0
        %508 = vmatpush1.bf16.msra.mxu0 0
        %509 = vmatprep.subr.bf16.mxu0 0
        %510 = vmatpush1.bf16.msra.mxu0 0
        %511 = vmatprep.subr.bf16.mxu0 0
        %512 = vmatpush1.bf16.msra.mxu0 0
        %513 = vmatprep.subr.bf16.mxu0 0
        %514 = vmatpush1.bf16.msra.mxu0 0
        %515 = vmatprep.subr.bf16.mxu0 0
        %516 = vmatpush1.bf16.msra.mxu0 %v488
        %517 = vmatprep.subr.bf16.mxu0 0
        %518 = vmatpush1.bf16.msra.mxu0 %v487
        %519 = vmatprep.subr.bf16.mxu0 0
        %520 = vmatpush2.bf16.msra.mxu0 0
        %521 = vmatprep.subr.bf16.mxu0 0
        %522 = vmatpush2.bf16.msra.mxu0 0
        %523 = vmatprep.subr.bf16.mxu0 0
        %524 = vmatpush2.bf16.msra.mxu0 0
        %525 = vmatprep.subr.bf16.mxu0 0
        %526 = vmatpush2.bf16.msra.mxu0 0
        %527 = vmatprep.subr.bf16.mxu0 0
        %528 = vmatpush2.bf16.msra.mxu0 0
        %529 = vmatprep.subr.bf16.mxu0 0
        %530 = vmatpush2.bf16.msra.mxu0 0
        %531 = vmatprep.subr.bf16.mxu0 0
        %532 = vmatpush2.bf16.msra.mxu0 0
        %533 = vmatprep.subr.bf16.mxu0 0
        %534 = vmatpush2.bf16.msra.mxu0 0
        %535 = vmatprep.mubr.bf16.mxu0 0
        %536 = vmatmul.mubr.bf16.gmra.mxu0 %v492
        %v537 = vpop.f32.mrf.mxu0
        %v538 = vadd.f32 %v458, %v537
        %v539 = vpop.f32.mrf.mxu0
        %v540 = vpop.f32.mrf.mxu0
        %v541 = vadd.f32 %v458, %v540
        %v542 = vpop.f32.mrf.mxu0
        %543 = vmatprep.mubr.bf16.mxu0 0
        %544 = vmatmul.mubr.bf16.gmra.mxu0 %v495
        %v545 = vpop.f32.mrf.mxu0
        %v546 = vadd.f32 %v458, %v545
        %v547 = vpop.f32.mrf.mxu0
        %v548 = vpop.f32.mrf.mxu0
        %v549 = vadd.f32 %v458, %v548
        %v550 = vpop.f32.mrf.mxu0
        %551 = vmatprep.mubr.bf16.mxu0 0
        %552 = vmatmul.mubr.bf16.gmra.mxu0 %v498
        %v553 = vpop.f32.mrf.mxu0
        %v554 = vadd.f32 %v458, %v553
        %v555 = vpop.f32.mrf.mxu0
        %v556 = vpop.f32.mrf.mxu0
        %v557 = vadd.f32 %v458, %v556
        %v558 = vpop.f32.mrf.mxu0
        %559 = vmatprep.mubr.bf16.mxu0 0
        %560 = vmatmul.mubr.bf16.gmra.mxu0 %v501
        %v561 = vpop.f32.mrf.mxu0
        %v562 = vadd.f32 %v458, %v561
        %v563 = vpop.f32.mrf.mxu0
        %v564 = vpop.f32.mrf.mxu0
        %v565 = vadd.f32 %v458, %v564
        %v566 = vpop.f32.mrf.mxu0
        %567 = vdwg.mxu0
        %v568 = vmax.f32 %v538, 0.0
        %v569 = vmax.f32 %v541, 0.0
        %v570 = vmax.f32 %v546, 0.0
        %v571 = vmax.f32 %v549, 0.0
        %v572 = vmax.f32 %v554, 0.0
        %v573 = vmax.f32 %v557, 0.0
        %v574 = vmax.f32 %v562, 0.0
        %v575 = vmax.f32 %v565, 0.0
        %v576 = vsel %vm286, %v568, -inf
        %v577 = vrot.slane %v576, 4
        %v578 = vmax.f32 %v576, %v577
        %v579 = vrot.slane %v578, 2
        %v580 = vmax.f32 %v578, %v579
        %v581 = vrot.slane %v580, 1
        %v582 = vmax.f32 %v580, %v581
        %v583 = vsel %vm286, %v569, -inf
        %v584 = vrot.slane %v583, 4
        %v585 = vmax.f32 %v583, %v584
        %v586 = vrot.slane %v585, 2
        %v587 = vmax.f32 %v585, %v586
        %v588 = vrot.slane %v587, 1
        %v589 = vmax.f32 %v587, %v588
        %v590 = vsel %vm286, %v570, -inf
        %v591 = vrot.slane %v590, 4
        %v592 = vmax.f32 %v590, %v591
        %v593 = vrot.slane %v592, 2
        %v594 = vmax.f32 %v592, %v593
        %v595 = vrot.slane %v594, 1
        %v596 = vmax.f32 %v594, %v595
        %v597 = vsel %vm286, %v571, -inf
        %v598 = vrot.slane %v597, 4
        %v599 = vmax.f32 %v597, %v598
        %v600 = vrot.slane %v599, 2
        %v601 = vmax.f32 %v599, %v600
        %v602 = vrot.slane %v601, 1
        %v603 = vmax.f32 %v601, %v602
        %v604 = vsel %vm286, %v572, -inf
        %v605 = vrot.slane %v604, 4
        %v606 = vmax.f32 %v604, %v605
        %v607 = vrot.slane %v606, 2
        %v608 = vmax.f32 %v606, %v607
        %v609 = vrot.slane %v608, 1
        %v610 = vmax.f32 %v608, %v609
        %v611 = vsel %vm286, %v573, -inf
        %v612 = vrot.slane %v611, 4
        %v613 = vmax.f32 %v611, %v612
        %v614 = vrot.slane %v613, 2
        %v615 = vmax.f32 %v613, %v614
        %v616 = vrot.slane %v615, 1
        %v617 = vmax.f32 %v615, %v616
        %v618 = vsel %vm286, %v574, -inf
        %v619 = vrot.slane %v618, 4
        %v620 = vmax.f32 %v618, %v619
        %v621 = vrot.slane %v620, 2
        %v622 = vmax.f32 %v620, %v621
        %v623 = vrot.slane %v622, 1
        %v624 = vmax.f32 %v622, %v623
        %v625 = vsel %vm286, %v575, -inf
        %v626 = vrot.slane %v625, 4
        %v627 = vmax.f32 %v625, %v626
        %v628 = vrot.slane %v627, 2
        %v629 = vmax.f32 %v627, %v628
        %v630 = vrot.slane %v629, 1
        %v631 = vmax.f32 %v629, %v630
        %v632 = vmax.f32 %v582, 0.0
        %v633 = vmax.f32 %v589, 0.0
        %v634 = vmax.f32 %v596, 0.0
        %v635 = vmax.f32 %v603, 0.0
        %v636 = vmax.f32 %v610, 0.0
        %v637 = vmax.f32 %v617, 0.0
        %v638 = vmax.f32 %v624, 0.0
        %v639 = vmax.f32 %v631, 0.0
        %v648 = vrot.slane %v278, 1
        %v649 = vrot.slane %v279, 1
        %v650 = vrot.slane %v280, 1
        %v651 = vrot.slane %v281, 1
        %v652 = vrot.slane %v282, 1
        %v653 = vrot.slane %v283, 1
        %v654 = vrot.slane %v284, 1
        %v655 = vrot.slane %v285, 1
        %656 = vrot.lane.b32.xlu0 %v648, 32
        %v657 = vpop.permute.xlu0 %656
        %658 = vrot.lane.b32.xlu0 %v649, 32
        %v659 = vpop.permute.xlu0 %658
        %660 = vrot.lane.b32.xlu0 %v650, 32
        %v661 = vpop.permute.xlu0 %660
        %662 = vrot.lane.b32.xlu0 %v651, 32
        %v663 = vpop.permute.xlu0 %662
        %664 = vrot.lane.b32.xlu0 %v652, 32
        %v665 = vpop.permute.xlu0 %664
        %666 = vrot.lane.b32.xlu0 %v653, 32
        %v667 = vpop.permute.xlu0 %666
        %668 = vrot.lane.b32.xlu0 %v654, 32
        %v669 = vpop.permute.xlu0 %668
        %670 = vrot.lane.b32.xlu0 %v655, 32
        %v671 = vpop.permute.xlu0 %670
        %v680 = vsel %vm286, %v278, %v657
        %v681 = vsel %vm286, %v279, %v659
        %v682 = vsel %vm286, %v280, %v661
        %v683 = vsel %vm286, %v281, %v663
        %v684 = vsel %vm286, %v282, %v665
        %v685 = vsel %vm286, %v283, %v667
        %v686 = vsel %vm286, %v284, %v669
        %v687 = vsel %vm286, %v285, %v671
        %v688 = vpack.c.bf16 %v680, %v680
        %v689 = vpack.c.bf16 %v681, %v681
        %v690 = vpack.c.bf16 %v682, %v682
        %v691 = vpack.c.bf16 %v683, %v683
        %v692 = vpack.c.bf16 %v684, %v684
        %v693 = vpack.c.bf16 %v685, %v685
        %v694 = vpack.c.bf16 %v686, %v686
        %v695 = vpack.c.bf16 %v687, %v687
        %v696 = vld [vmem:[%s2 + $0x10] sm:$0xf]
        %v697 = vld [vmem:[%s2 + $0x14] sm:$0xf]
        %v698 = vld [vmem:[%s2 + $0x18] sm:$0xf]
        %v699 = vld [vmem:[%s2 + $0x1c] sm:$0xf]
        %v700 = vld [vmem:[%s2 + $0x20] sm:$0xf]
        %v701 = vld [vmem:[%s2 + $0x24] sm:$0xf]
        %v702 = vld [vmem:[%s2 + $0x28] sm:$0xf]
        %v703 = vld [vmem:[%s2 + $0x2c] sm:$0xf]
        %v704 = vld [vmem:[%s3 + $0x1] sm:$0x1]
        %v705 = vlaneseq
        %v706 = vshrl.u32 %v705, 7
        %v707 = vsub.s32 0, %v706
        %v708 = vrot.slane %v704, %v707
        %v718 = vunpack.c.l.s4 1966171168
        %v719 = vunpack.c.0.s8 %v718
        %v720 = vlaneseq
        %v721 = vshrl.u32 %v720, 7
        %v722 = vsub.s32 %v719, %v721
        %v723 = vrot.slane %v688, %v722
        %v724 = vcombine.high %v723, %v723
        %v726 = vunpack.c.l.s4 1966171168
        %v727 = vunpack.c.0.s8 %v726
        %v728 = vlaneseq
        %v729 = vshrl.u32 %v728, 7
        %v730 = vsub.s32 %v727, %v729
        %v731 = vrot.slane %v723, %v730
        %v733 = vunpack.c.l.s4 1966171168
        %v734 = vunpack.c.0.s8 %v733
        %v735 = vlaneseq
        %v736 = vshrl.u32 %v735, 7
        %v737 = vsub.s32 %v734, %v736
        %v738 = vrot.slane %v724, %v737
        %v739 = vcombine.high %v731, %v731
        %v740 = vcombine.high %v738, %v738
        %v742 = vunpack.c.l.s4 1966171168
        %v743 = vunpack.c.0.s8 %v742
        %v744 = vlaneseq
        %v745 = vshrl.u32 %v744, 7
        %v746 = vsub.s32 %v743, %v745
        %v747 = vrot.slane %v689, %v746
        %v748 = vcombine.high %v747, %v747
        %v750 = vunpack.c.l.s4 1966171168
        %v751 = vunpack.c.0.s8 %v750
        %v752 = vlaneseq
        %v753 = vshrl.u32 %v752, 7
        %v754 = vsub.s32 %v751, %v753
        %v755 = vrot.slane %v747, %v754
        %v757 = vunpack.c.l.s4 1966171168
        %v758 = vunpack.c.0.s8 %v757
        %v759 = vlaneseq
        %v760 = vshrl.u32 %v759, 7
        %v761 = vsub.s32 %v758, %v760
        %v762 = vrot.slane %v748, %v761
        %v763 = vcombine.high %v755, %v755
        %v764 = vcombine.high %v762, %v762
        %v766 = vunpack.c.l.s4 1966171168
        %v767 = vunpack.c.0.s8 %v766
        %v768 = vlaneseq
        %v769 = vshrl.u32 %v768, 7
        %v770 = vsub.s32 %v767, %v769
        %v771 = vrot.slane %v690, %v770
        %v772 = vcombine.high %v771, %v771
        %v774 = vunpack.c.l.s4 1966171168
        %v775 = vunpack.c.0.s8 %v774
        %v776 = vlaneseq
        %v777 = vshrl.u32 %v776, 7
        %v778 = vsub.s32 %v775, %v777
        %v779 = vrot.slane %v771, %v778
        %v781 = vunpack.c.l.s4 1966171168
        %v782 = vunpack.c.0.s8 %v781
        %v783 = vlaneseq
        %v784 = vshrl.u32 %v783, 7
        %v785 = vsub.s32 %v782, %v784
        %v786 = vrot.slane %v772, %v785
        %v787 = vcombine.high %v779, %v779
        %v788 = vcombine.high %v786, %v786
        %v790 = vunpack.c.l.s4 1966171168
        %v791 = vunpack.c.0.s8 %v790
        %v792 = vlaneseq
        %v793 = vshrl.u32 %v792, 7
        %v794 = vsub.s32 %v791, %v793
        %v795 = vrot.slane %v691, %v794
        %v796 = vcombine.high %v795, %v795
        %v798 = vunpack.c.l.s4 1966171168
        %v799 = vunpack.c.0.s8 %v798
        %v800 = vlaneseq
        %v801 = vshrl.u32 %v800, 7
        %v802 = vsub.s32 %v799, %v801
        %v803 = vrot.slane %v795, %v802
        %v805 = vunpack.c.l.s4 1966171168
        %v806 = vunpack.c.0.s8 %v805
        %v807 = vlaneseq
        %v808 = vshrl.u32 %v807, 7
        %v809 = vsub.s32 %v806, %v808
        %v810 = vrot.slane %v796, %v809
        %v811 = vcombine.high %v803, %v803
        %v812 = vcombine.high %v810, %v810
        %v814 = vunpack.c.l.s4 1966171168
        %v815 = vunpack.c.0.s8 %v814
        %v816 = vlaneseq
        %v817 = vshrl.u32 %v816, 7
        %v818 = vsub.s32 %v815, %v817
        %v819 = vrot.slane %v692, %v818
        %v820 = vcombine.high %v819, %v819
        %v822 = vunpack.c.l.s4 1966171168
        %v823 = vunpack.c.0.s8 %v822
        %v824 = vlaneseq
        %v825 = vshrl.u32 %v824, 7
        %v826 = vsub.s32 %v823, %v825
        %v827 = vrot.slane %v819, %v826
        %v829 = vunpack.c.l.s4 1966171168
        %v830 = vunpack.c.0.s8 %v829
        %v831 = vlaneseq
        %v832 = vshrl.u32 %v831, 7
        %v833 = vsub.s32 %v830, %v832
        %v834 = vrot.slane %v820, %v833
        %v835 = vcombine.high %v827, %v827
        %v836 = vcombine.high %v834, %v834
        %v838 = vunpack.c.l.s4 1966171168
        %v839 = vunpack.c.0.s8 %v838
        %v840 = vlaneseq
        %v841 = vshrl.u32 %v840, 7
        %v842 = vsub.s32 %v839, %v841
        %v843 = vrot.slane %v693, %v842
        %v844 = vcombine.high %v843, %v843
        %v846 = vunpack.c.l.s4 1966171168
        %v847 = vunpack.c.0.s8 %v846
        %v848 = vlaneseq
        %v849 = vshrl.u32 %v848, 7
        %v850 = vsub.s32 %v847, %v849
        %v851 = vrot.slane %v843, %v850
        %v853 = vunpack.c.l.s4 1966171168
        %v854 = vunpack.c.0.s8 %v853
        %v855 = vlaneseq
        %v856 = vshrl.u32 %v855, 7
        %v857 = vsub.s32 %v854, %v856
        %v858 = vrot.slane %v844, %v857
        %v859 = vcombine.high %v851, %v851
        %v860 = vcombine.high %v858, %v858
        %v862 = vunpack.c.l.s4 1966171168
        %v863 = vunpack.c.0.s8 %v862
        %v864 = vlaneseq
        %v865 = vshrl.u32 %v864, 7
        %v866 = vsub.s32 %v863, %v865
        %v867 = vrot.slane %v694, %v866
        %v868 = vcombine.high %v867, %v867
        %v870 = vunpack.c.l.s4 1966171168
        %v871 = vunpack.c.0.s8 %v870
        %v872 = vlaneseq
        %v873 = vshrl.u32 %v872, 7
        %v874 = vsub.s32 %v871, %v873
        %v875 = vrot.slane %v867, %v874
        %v877 = vunpack.c.l.s4 1966171168
        %v878 = vunpack.c.0.s8 %v877
        %v879 = vlaneseq
        %v880 = vshrl.u32 %v879, 7
        %v881 = vsub.s32 %v878, %v880
        %v882 = vrot.slane %v868, %v881
        %v883 = vcombine.high %v875, %v875
        %v884 = vcombine.high %v882, %v882
        %v886 = vunpack.c.l.s4 1966171168
        %v887 = vunpack.c.0.s8 %v886
        %v888 = vlaneseq
        %v889 = vshrl.u32 %v888, 7
        %v890 = vsub.s32 %v887, %v889
        %v891 = vrot.slane %v695, %v890
        %v892 = vcombine.high %v891, %v891
        %v894 = vunpack.c.l.s4 1966171168
        %v895 = vunpack.c.0.s8 %v894
        %v896 = vlaneseq
        %v897 = vshrl.u32 %v896, 7
        %v898 = vsub.s32 %v895, %v897
        %v899 = vrot.slane %v891, %v898
        %v901 = vunpack.c.l.s4 1966171168
        %v902 = vunpack.c.0.s8 %v901
        %v903 = vlaneseq
        %v904 = vshrl.u32 %v903, 7
        %v905 = vsub.s32 %v902, %v904
        %v906 = vrot.slane %v892, %v905
        %v907 = vcombine.high %v899, %v899
        %v908 = vcombine.high %v906, %v906
        %v909 = vunpack.i.l.s16 %v731
        %v910 = vunpack.i.h.s16 %v731
        %v911 = vunpack.i.l.s16 %v738
        %v912 = vunpack.i.h.s16 %v738
        %v913 = vunpack.i.l.s16 %v739
        %v914 = vunpack.i.h.s16 %v739
        %v915 = vunpack.i.l.s16 %v740
        %v916 = vunpack.i.l.s16 %v755
        %v917 = vunpack.i.h.s16 %v755
        %v918 = vunpack.i.l.s16 %v762
        %v919 = vunpack.i.h.s16 %v762
        %v920 = vunpack.i.l.s16 %v763
        %v921 = vunpack.i.h.s16 %v763
        %v922 = vunpack.i.l.s16 %v764
        %v923 = vunpack.i.l.s16 %v779
        %v924 = vunpack.i.h.s16 %v779
        %v925 = vunpack.i.l.s16 %v786
        %v926 = vunpack.i.h.s16 %v786
        %v927 = vunpack.i.l.s16 %v787
        %v928 = vunpack.i.h.s16 %v787
        %v929 = vunpack.i.l.s16 %v788
        %v930 = vunpack.i.l.s16 %v803
        %v931 = vunpack.i.h.s16 %v803
        %v932 = vunpack.i.l.s16 %v810
        %v933 = vunpack.i.h.s16 %v810
        %v934 = vunpack.i.l.s16 %v811
        %v935 = vunpack.i.h.s16 %v811
        %v936 = vunpack.i.l.s16 %v812
        %v937 = vunpack.i.l.s16 %v827
        %v938 = vunpack.i.h.s16 %v827
        %v939 = vunpack.i.l.s16 %v834
        %v940 = vunpack.i.h.s16 %v834
        %v941 = vunpack.i.l.s16 %v835
        %v942 = vunpack.i.h.s16 %v835
        %v943 = vunpack.i.l.s16 %v836
        %v944 = vunpack.i.l.s16 %v851
        %v945 = vunpack.i.h.s16 %v851
        %v946 = vunpack.i.l.s16 %v858
        %v947 = vunpack.i.h.s16 %v858
        %v948 = vunpack.i.l.s16 %v859
        %v949 = vunpack.i.h.s16 %v859
        %v950 = vunpack.i.l.s16 %v860
        %v951 = vunpack.i.l.s16 %v875
        %v952 = vunpack.i.h.s16 %v875
        %v953 = vunpack.i.l.s16 %v882
        %v954 = vunpack.i.h.s16 %v882
        %v955 = vunpack.i.l.s16 %v883
        %v956 = vunpack.i.h.s16 %v883
        %v957 = vunpack.i.l.s16 %v884
        %v958 = vunpack.i.l.s16 %v899
        %v959 = vunpack.i.h.s16 %v899
        %v960 = vunpack.i.l.s16 %v906
        %v961 = vunpack.i.h.s16 %v906
        %v962 = vunpack.i.l.s16 %v907
        %v963 = vunpack.i.h.s16 %v907
        %v964 = vunpack.i.l.s16 %v908
        %v966 = vcombine.high %v708, %v708
        %v968 = vunpack.c.l.s4 1966171168
        %v969 = vunpack.c.0.s8 %v968
        %v970 = vlaneseq
        %v971 = vshrl.u32 %v970, 7
        %v972 = vsub.s32 %v969, %v971
        %v973 = vrot.slane %v708, %v972
        %v975 = vunpack.c.l.s4 1966171168
        %v976 = vunpack.c.0.s8 %v975
        %v977 = vlaneseq
        %v978 = vshrl.u32 %v977, 7
        %v979 = vsub.s32 %v976, %v978
        %v980 = vrot.slane %v966, %v979
        %v981 = vcombine.high %v973, %v973
        %v982 = vcombine.high %v980, %v980
        %v984 = vunpack.c.l.s4 1966171168
        %v985 = vunpack.c.0.s8 %v984
        %v986 = vlaneseq
        %v987 = vshrl.u32 %v986, 7
        %v988 = vsub.s32 %v985, %v987
        %v989 = vrot.slane %v973, %v988
        %v991 = vunpack.c.l.s4 1966171168
        %v992 = vunpack.c.0.s8 %v991
        %v993 = vlaneseq
        %v994 = vshrl.u32 %v993, 7
        %v995 = vsub.s32 %v992, %v994
        %v996 = vrot.slane %v980, %v995
        %v998 = vunpack.c.l.s4 1966171168
        %v999 = vunpack.c.0.s8 %v998
        %v1000 = vlaneseq
        %v1001 = vshrl.u32 %v1000, 7
        %v1002 = vsub.s32 %v999, %v1001
        %v1003 = vrot.slane %v981, %v1002
        %v1005 = vunpack.c.l.s4 1966171168
        %v1006 = vunpack.c.0.s8 %v1005
        %v1007 = vlaneseq
        %v1008 = vshrl.u32 %v1007, 7
        %v1009 = vsub.s32 %v1006, %v1008
        %v1010 = vrot.slane %v982, %v1009
        %v1011 = vcombine.high %v989, %v989
        %v1012 = vcombine.high %v996, %v996
        %v1013 = vcombine.high %v1003, %v1003
        %v1014 = vpack.i.b16 %v910, %v909
        %v1015 = vpack.i.b16 %v912, %v911
        %v1016 = vpack.i.b16 %v914, %v913
        %v1017 = vpack.i.b16 %v916, %v915
        %v1018 = vpack.i.b16 %v918, %v917
        %v1019 = vpack.i.b16 %v920, %v919
        %v1020 = vpack.i.b16 %v922, %v921
        %v1021 = vpack.i.b16 %v924, %v923
        %v1022 = vpack.i.b16 %v926, %v925
        %v1023 = vpack.i.b16 %v928, %v927
        %v1024 = vpack.i.b16 %v930, %v929
        %v1025 = vpack.i.b16 %v932, %v931
        %v1026 = vpack.i.b16 %v934, %v933
        %v1027 = vpack.i.b16 %v936, %v935
        %v1028 = vpack.i.b16 %v938, %v937
        %v1029 = vpack.i.b16 %v940, %v939
        %v1030 = vpack.i.b16 %v942, %v941
        %v1031 = vpack.i.b16 %v944, %v943
        %v1032 = vpack.i.b16 %v946, %v945
        %v1033 = vpack.i.b16 %v948, %v947
        %v1034 = vpack.i.b16 %v950, %v949
        %v1035 = vpack.i.b16 %v952, %v951
        %v1036 = vpack.i.b16 %v954, %v953
        %v1037 = vpack.i.b16 %v956, %v955
        %v1038 = vpack.i.b16 %v958, %v957
        %v1039 = vpack.i.b16 %v960, %v959
        %v1040 = vpack.i.b16 %v962, %v961
        %v1041 = vpack.i.b16 %v964, %v963
        %v1042 = vcombine.low %v1014, %v1015
        %v1043 = vcombine.low %v1016, %v1017
        %v1044 = vcombine.low %v1018, %v1019
        %v1045 = vcombine.low %v1020, %v1021
        %v1047 = vunpack.c.l.s4 1966171168
        %v1048 = vunpack.c.0.s8 %v1047
        %v1049 = vlaneseq
        %v1050 = vshrl.u32 %v1049, 7
        %v1051 = vsub.s32 %v1048, %v1050
        %v1052 = vrot.slane %v1042, %v1051
        %v1054 = vunpack.c.l.s4 1966171168
        %v1055 = vunpack.c.0.s8 %v1054
        %v1056 = vlaneseq
        %v1057 = vshrl.u32 %v1056, 7
        %v1058 = vsub.s32 %v1055, %v1057
        %v1059 = vrot.slane %v1043, %v1058
        %v1061 = vunpack.c.l.s4 1966171168
        %v1062 = vunpack.c.0.s8 %v1061
        %v1063 = vlaneseq
        %v1064 = vshrl.u32 %v1063, 7
        %v1065 = vsub.s32 %v1062, %v1064
        %v1066 = vrot.slane %v1044, %v1065
        %v1068 = vunpack.c.l.s4 1966171168
        %v1069 = vunpack.c.0.s8 %v1068
        %v1070 = vlaneseq
        %v1071 = vshrl.u32 %v1070, 7
        %v1072 = vsub.s32 %v1069, %v1071
        %v1073 = vrot.slane %v1045, %v1072
        %v1074 = vcombine.low %v1052, %v1059
        %v1075 = vcombine.low %v1066, %v1073
        %v1077 = vunpack.c.l.s4 1966171168
        %v1078 = vunpack.c.0.s8 %v1077
        %v1079 = vlaneseq
        %v1080 = vshrl.u32 %v1079, 7
        %v1081 = vsub.s32 %v1078, %v1080
        %v1082 = vrot.slane %v1074, %v1081
        %v1084 = vunpack.c.l.s4 1966171168
        %v1085 = vunpack.c.0.s8 %v1084
        %v1086 = vlaneseq
        %v1087 = vshrl.u32 %v1086, 7
        %v1088 = vsub.s32 %v1085, %v1087
        %v1089 = vrot.slane %v1075, %v1088
        %v1090 = vcombine.low %v1082, %v1089
        %v1091 = vcombine.low %v1022, %v1023
        %v1092 = vcombine.low %v1024, %v1025
        %v1093 = vcombine.low %v1026, %v1027
        %v1094 = vcombine.low %v1028, %v1029
        %v1096 = vunpack.c.l.s4 1966171168
        %v1097 = vunpack.c.0.s8 %v1096
        %v1098 = vlaneseq
        %v1099 = vshrl.u32 %v1098, 7
        %v1100 = vsub.s32 %v1097, %v1099
        %v1101 = vrot.slane %v1091, %v1100
        %v1103 = vunpack.c.l.s4 1966171168
        %v1104 = vunpack.c.0.s8 %v1103
        %v1105 = vlaneseq
        %v1106 = vshrl.u32 %v1105, 7
        %v1107 = vsub.s32 %v1104, %v1106
        %v1108 = vrot.slane %v1092, %v1107
        %v1110 = vunpack.c.l.s4 1966171168
        %v1111 = vunpack.c.0.s8 %v1110
        %v1112 = vlaneseq
        %v1113 = vshrl.u32 %v1112, 7
        %v1114 = vsub.s32 %v1111, %v1113
        %v1115 = vrot.slane %v1093, %v1114
        %v1117 = vunpack.c.l.s4 1966171168
        %v1118 = vunpack.c.0.s8 %v1117
        %v1119 = vlaneseq
        %v1120 = vshrl.u32 %v1119, 7
        %v1121 = vsub.s32 %v1118, %v1120
        %v1122 = vrot.slane %v1094, %v1121
        %v1123 = vcombine.low %v1101, %v1108
        %v1124 = vcombine.low %v1115, %v1122
        %v1126 = vunpack.c.l.s4 1966171168
        %v1127 = vunpack.c.0.s8 %v1126
        %v1128 = vlaneseq
        %v1129 = vshrl.u32 %v1128, 7
        %v1130 = vsub.s32 %v1127, %v1129
        %v1131 = vrot.slane %v1123, %v1130
        %v1133 = vunpack.c.l.s4 1966171168
        %v1134 = vunpack.c.0.s8 %v1133
        %v1135 = vlaneseq
        %v1136 = vshrl.u32 %v1135, 7
        %v1137 = vsub.s32 %v1134, %v1136
        %v1138 = vrot.slane %v1124, %v1137
        %v1139 = vcombine.low %v1131, %v1138
        %v1140 = vcombine.low %v1030, %v1031
        %v1141 = vcombine.low %v1032, %v1033
        %v1142 = vcombine.low %v1034, %v1035
        %v1143 = vcombine.low %v1036, %v1037
        %v1145 = vunpack.c.l.s4 1966171168
        %v1146 = vunpack.c.0.s8 %v1145
        %v1147 = vlaneseq
        %v1148 = vshrl.u32 %v1147, 7
        %v1149 = vsub.s32 %v1146, %v1148
        %v1150 = vrot.slane %v1140, %v1149
        %v1152 = vunpack.c.l.s4 1966171168
        %v1153 = vunpack.c.0.s8 %v1152
        %v1154 = vlaneseq
        %v1155 = vshrl.u32 %v1154, 7
        %v1156 = vsub.s32 %v1153, %v1155
        %v1157 = vrot.slane %v1141, %v1156
        %v1159 = vunpack.c.l.s4 1966171168
        %v1160 = vunpack.c.0.s8 %v1159
        %v1161 = vlaneseq
        %v1162 = vshrl.u32 %v1161, 7
        %v1163 = vsub.s32 %v1160, %v1162
        %v1164 = vrot.slane %v1142, %v1163
        %v1166 = vunpack.c.l.s4 1966171168
        %v1167 = vunpack.c.0.s8 %v1166
        %v1168 = vlaneseq
        %v1169 = vshrl.u32 %v1168, 7
        %v1170 = vsub.s32 %v1167, %v1169
        %v1171 = vrot.slane %v1143, %v1170
        %v1172 = vcombine.low %v1150, %v1157
        %v1173 = vcombine.low %v1164, %v1171
        %v1175 = vunpack.c.l.s4 1966171168
        %v1176 = vunpack.c.0.s8 %v1175
        %v1177 = vlaneseq
        %v1178 = vshrl.u32 %v1177, 7
        %v1179 = vsub.s32 %v1176, %v1178
        %v1180 = vrot.slane %v1172, %v1179
        %v1182 = vunpack.c.l.s4 1966171168
        %v1183 = vunpack.c.0.s8 %v1182
        %v1184 = vlaneseq
        %v1185 = vshrl.u32 %v1184, 7
        %v1186 = vsub.s32 %v1183, %v1185
        %v1187 = vrot.slane %v1173, %v1186
        %v1188 = vcombine.low %v1180, %v1187
        %v1189 = vcombine.low %v1038, %v1039
        %v1190 = vcombine.low %v1040, %v1041
        %v1192 = vunpack.c.l.s4 1966171168
        %v1193 = vunpack.c.0.s8 %v1192
        %v1194 = vlaneseq
        %v1195 = vshrl.u32 %v1194, 7
        %v1196 = vsub.s32 %v1193, %v1195
        %v1197 = vrot.slane %v1189, %v1196
        %v1199 = vunpack.c.l.s4 1966171168
        %v1200 = vunpack.c.0.s8 %v1199
        %v1201 = vlaneseq
        %v1202 = vshrl.u32 %v1201, 7
        %v1203 = vsub.s32 %v1200, %v1202
        %v1204 = vrot.slane %v1190, %v1203
        %v1205 = vcombine.low %v1197, %v1204
        %v1207 = vunpack.c.l.s4 1966171168
        %v1208 = vunpack.c.0.s8 %v1207
        %v1209 = vlaneseq
        %v1210 = vshrl.u32 %v1209, 7
        %v1211 = vsub.s32 %v1208, %v1210
        %v1212 = vrot.slane %v1205, %v1211
        %v1221 = vunpack.c.l.b16 %v696
        %v1222 = vunpack.c.l.b16 %v697
        %v1223 = vunpack.c.l.b16 %v698
        %v1224 = vunpack.c.l.b16 %v699
        %v1225 = vunpack.c.l.b16 %v700
        %v1226 = vunpack.c.l.b16 %v701
        %v1227 = vunpack.c.l.b16 %v702
        %v1228 = vunpack.c.l.b16 %v703
        %v1229 = vpack.c.b16 %v1222, %v1221
        %v1230 = vpack.c.b16 %v1224, %v1223
        %v1231 = vpack.c.b16 %v1226, %v1225
        %v1232 = vpack.c.b16 %v1228, %v1227
        %v1237 = vcombine.low %v989, %v1003
        %v1238 = vcombine.low %v1011, %v1013
        %v1239 = vcombine.low %v996, %v1010
        %v1240 = vcombine.low %v1012, %v989
        %v1242 = vunpack.c.l.s4 1966171168
        %v1243 = vunpack.c.0.s8 %v1242
        %v1244 = vlaneseq
        %v1245 = vshrl.u32 %v1244, 7
        %v1246 = vsub.s32 %v1243, %v1245
        %v1247 = vrot.slane %v1237, %v1246
        %v1249 = vunpack.c.l.s4 1966171168
        %v1250 = vunpack.c.0.s8 %v1249
        %v1251 = vlaneseq
        %v1252 = vshrl.u32 %v1251, 7
        %v1253 = vsub.s32 %v1250, %v1252
        %v1254 = vrot.slane %v1238, %v1253
        %v1256 = vunpack.c.l.s4 1966171168
        %v1257 = vunpack.c.0.s8 %v1256
        %v1258 = vlaneseq
        %v1259 = vshrl.u32 %v1258, 7
        %v1260 = vsub.s32 %v1257, %v1259
        %v1261 = vrot.slane %v1239, %v1260
        %v1263 = vunpack.c.l.s4 1966171168
        %v1264 = vunpack.c.0.s8 %v1263
        %v1265 = vlaneseq
        %v1266 = vshrl.u32 %v1265, 7
        %v1267 = vsub.s32 %v1264, %v1266
        %v1268 = vrot.slane %v1240, %v1267
        %v1269 = vcombine.low %v1247, %v1254
        %v1270 = vcombine.low %v1261, %v1268
        %v1272 = vunpack.c.l.s4 1966171168
        %v1273 = vunpack.c.0.s8 %v1272
        %v1274 = vlaneseq
        %v1275 = vshrl.u32 %v1274, 7
        %v1276 = vsub.s32 %v1273, %v1275
        %v1277 = vrot.slane %v1269, %v1276
        %v1279 = vunpack.c.l.s4 1966171168
        %v1280 = vunpack.c.0.s8 %v1279
        %v1281 = vlaneseq
        %v1282 = vshrl.u32 %v1281, 7
        %v1283 = vsub.s32 %v1280, %v1282
        %v1284 = vrot.slane %v1270, %v1283
        %v1285 = vcombine.low %v1277, %v1284
        %v1286 = vcombine.low %v1003, %v1011
        %v1287 = vcombine.low %v1013, %v996
        %v1288 = vcombine.low %v1010, %v1012
        %v1290 = vunpack.c.l.s4 1966171168
        %v1291 = vunpack.c.0.s8 %v1290
        %v1292 = vlaneseq
        %v1293 = vshrl.u32 %v1292, 7
        %v1294 = vsub.s32 %v1291, %v1293
        %v1295 = vrot.slane %v1286, %v1294
        %v1297 = vunpack.c.l.s4 1966171168
        %v1298 = vunpack.c.0.s8 %v1297
        %v1299 = vlaneseq
        %v1300 = vshrl.u32 %v1299, 7
        %v1301 = vsub.s32 %v1298, %v1300
        %v1302 = vrot.slane %v1287, %v1301
        %v1304 = vunpack.c.l.s4 1966171168
        %v1305 = vunpack.c.0.s8 %v1304
        %v1306 = vlaneseq
        %v1307 = vshrl.u32 %v1306, 7
        %v1308 = vsub.s32 %v1305, %v1307
        %v1309 = vrot.slane %v1288, %v1308
        %v1310 = vcombine.low %v1295, %v1302
        %v1311 = vcombine.low %v1309, %v1247
        %v1313 = vunpack.c.l.s4 1966171168
        %v1314 = vunpack.c.0.s8 %v1313
        %v1315 = vlaneseq
        %v1316 = vshrl.u32 %v1315, 7
        %v1317 = vsub.s32 %v1314, %v1316
        %v1318 = vrot.slane %v1310, %v1317
        %v1320 = vunpack.c.l.s4 1966171168
        %v1321 = vunpack.c.0.s8 %v1320
        %v1322 = vlaneseq
        %v1323 = vshrl.u32 %v1322, 7
        %v1324 = vsub.s32 %v1321, %v1323
        %v1325 = vrot.slane %v1311, %v1324
        %v1326 = vcombine.low %v1318, %v1325
        %v1327 = vcombine.low %v1254, %v1261
        %v1328 = vcombine.low %v1268, %v1295
        %v1330 = vunpack.c.l.s4 1966171168
        %v1331 = vunpack.c.0.s8 %v1330
        %v1332 = vlaneseq
        %v1333 = vshrl.u32 %v1332, 7
        %v1334 = vsub.s32 %v1331, %v1333
        %v1335 = vrot.slane %v1327, %v1334
        %v1337 = vunpack.c.l.s4 1966171168
        %v1338 = vunpack.c.0.s8 %v1337
        %v1339 = vlaneseq
        %v1340 = vshrl.u32 %v1339, 7
        %v1341 = vsub.s32 %v1338, %v1340
        %v1342 = vrot.slane %v1328, %v1341
        %v1343 = vcombine.low %v1335, %v1342
        %v1344 = vcombine.low %v1302, %v1309
        %v1346 = vunpack.c.l.s4 1966171168
        %v1347 = vunpack.c.0.s8 %v1346
        %v1348 = vlaneseq
        %v1349 = vshrl.u32 %v1348, 7
        %v1350 = vsub.s32 %v1347, %v1349
        %v1351 = vrot.slane %v1344, %v1350
        %v1352 = vcombine.low %v1351, %v1277
        %v1353 = vcombine.low %v1284, %v1318
        %v1354 = vcombine.low %v1325, %v1335
        %v1355 = vcombine.low %v1342, %v1351
        %vm1363 = vcmask 523264
        %v1365 = vsel %vm1363, %v1090, 0
        %v1368 = vsel %vm1363, %v1139, 0
        %v1371 = vsel %vm1363, %v1188, 0
        %v1374 = vsel %vm1363, %v1212, 0
        %1376 = vmatprep.subr.bf16.mxu0 0
        %1377 = vmatpush1.bf16.msra.mxu0 0
        %1378 = vmatprep.subr.bf16.mxu0 0
        %1379 = vmatpush1.bf16.msra.mxu0 0
        %1380 = vmatprep.subr.bf16.mxu0 0
        %1381 = vmatpush1.bf16.msra.mxu0 0
        %1382 = vmatprep.subr.bf16.mxu0 0
        %1383 = vmatpush1.bf16.msra.mxu0 0
        %1384 = vmatprep.subr.bf16.mxu0 0
        %1385 = vmatpush1.bf16.msra.mxu0 %v1232
        %1386 = vmatprep.subr.bf16.mxu0 0
        %1387 = vmatpush1.bf16.msra.mxu0 %v1231
        %1388 = vmatprep.subr.bf16.mxu0 0
        %1389 = vmatpush1.bf16.msra.mxu0 %v1230
        %1390 = vmatprep.subr.bf16.mxu0 0
        %1391 = vmatpush1.bf16.msra.mxu0 %v1229
        %1392 = vmatprep.subr.bf16.mxu0 0
        %1393 = vmatpush2.bf16.msra.mxu0 0
        %1394 = vmatprep.subr.bf16.mxu0 0
        %1395 = vmatpush2.bf16.msra.mxu0 0
        %1396 = vmatprep.subr.bf16.mxu0 0
        %1397 = vmatpush2.bf16.msra.mxu0 0
        %1398 = vmatprep.subr.bf16.mxu0 0
        %1399 = vmatpush2.bf16.msra.mxu0 0
        %1400 = vmatprep.subr.bf16.mxu0 0
        %1401 = vmatpush2.bf16.msra.mxu0 0
        %1402 = vmatprep.subr.bf16.mxu0 0
        %1403 = vmatpush2.bf16.msra.mxu0 0
        %1404 = vmatprep.subr.bf16.mxu0 0
        %1405 = vmatpush2.bf16.msra.mxu0 0
        %1406 = vmatprep.subr.bf16.mxu0 0
        %1407 = vmatpush2.bf16.msra.mxu0 0
        %1408 = vmatprep.mubr.bf16.mxu0 0
        %1409 = vmatmul.mubr.bf16.gmra.mxu0 %v1365
        %v1410 = vpop.f32.mrf.mxu0
        %v1411 = vadd.f32 %v1285, %v1410
        %v1412 = vpop.f32.mrf.mxu0
        %v1413 = vpop.f32.mrf.mxu0
        %v1414 = vadd.f32 %v1326, %v1413
        %v1415 = vpop.f32.mrf.mxu0
        %1416 = vmatprep.mubr.bf16.mxu0 0
        %1417 = vmatmul.mubr.bf16.gmra.mxu0 %v1368
        %v1418 = vpop.f32.mrf.mxu0
        %v1419 = vadd.f32 %v1343, %v1418
        %v1420 = vpop.f32.mrf.mxu0
        %v1421 = vpop.f32.mrf.mxu0
        %v1422 = vadd.f32 %v1352, %v1421
        %v1423 = vpop.f32.mrf.mxu0
        %1424 = vmatprep.mubr.bf16.mxu0 0
        %1425 = vmatmul.mubr.bf16.gmra.mxu0 %v1371
        %v1426 = vpop.f32.mrf.mxu0
        %v1427 = vadd.f32 %v1353, %v1426
        %v1428 = vpop.f32.mrf.mxu0
        %v1429 = vpop.f32.mrf.mxu0
        %v1430 = vadd.f32 %v1354, %v1429
        %v1431 = vpop.f32.mrf.mxu0
        %1432 = vmatprep.mubr.bf16.mxu0 0
        %1433 = vmatmul.mubr.bf16.gmra.mxu0 %v1374
        %v1434 = vpop.f32.mrf.mxu0
        %v1435 = vadd.f32 %v1355, %v1434
        %v1436 = vpop.f32.mrf.mxu0
        %v1437 = vpop.f32.mrf.mxu0
        %v1438 = vpop.f32.mrf.mxu0
        %1439 = vdwg.mxu0
        %v1447 = vcombine.high %v1411, %v1411
        %v1449 = vunpack.c.l.s4 1966171168
        %v1450 = vunpack.c.0.s8 %v1449
        %v1451 = vlaneseq
        %v1452 = vshrl.u32 %v1451, 7
        %v1453 = vsub.s32 %v1450, %v1452
        %v1454 = vrot.slane %v1411, %v1453
        %v1456 = vunpack.c.l.s4 1966171168
        %v1457 = vunpack.c.0.s8 %v1456
        %v1458 = vlaneseq
        %v1459 = vshrl.u32 %v1458, 7
        %v1460 = vsub.s32 %v1457, %v1459
        %v1461 = vrot.slane %v1447, %v1460
        %v1462 = vcombine.high %v1454, %v1454
        %v1463 = vcombine.high %v1461, %v1461
        %v1465 = vunpack.c.l.s4 1966171168
        %v1466 = vunpack.c.0.s8 %v1465
        %v1467 = vlaneseq
        %v1468 = vshrl.u32 %v1467, 7
        %v1469 = vsub.s32 %v1466, %v1468
        %v1470 = vrot.slane %v1454, %v1469
        %v1472 = vunpack.c.l.s4 1966171168
        %v1473 = vunpack.c.0.s8 %v1472
        %v1474 = vlaneseq
        %v1475 = vshrl.u32 %v1474, 7
        %v1476 = vsub.s32 %v1473, %v1475
        %v1477 = vrot.slane %v1461, %v1476
        %v1479 = vunpack.c.l.s4 1966171168
        %v1480 = vunpack.c.0.s8 %v1479
        %v1481 = vlaneseq
        %v1482 = vshrl.u32 %v1481, 7
        %v1483 = vsub.s32 %v1480, %v1482
        %v1484 = vrot.slane %v1462, %v1483
        %v1486 = vunpack.c.l.s4 1966171168
        %v1487 = vunpack.c.0.s8 %v1486
        %v1488 = vlaneseq
        %v1489 = vshrl.u32 %v1488, 7
        %v1490 = vsub.s32 %v1487, %v1489
        %v1491 = vrot.slane %v1463, %v1490
        %v1492 = vcombine.high %v1470, %v1470
        %v1493 = vcombine.high %v1477, %v1477
        %v1494 = vcombine.high %v1484, %v1484
        %v1495 = vcombine.high %v1491, %v1491
        %v1496 = vcombine.high %v1414, %v1414
        %v1498 = vunpack.c.l.s4 1966171168
        %v1499 = vunpack.c.0.s8 %v1498
        %v1500 = vlaneseq
        %v1501 = vshrl.u32 %v1500, 7
        %v1502 = vsub.s32 %v1499, %v1501
        %v1503 = vrot.slane %v1414, %v1502
        %v1505 = vunpack.c.l.s4 1966171168
        %v1506 = vunpack.c.0.s8 %v1505
        %v1507 = vlaneseq
        %v1508 = vshrl.u32 %v1507, 7
        %v1509 = vsub.s32 %v1506, %v1508
        %v1510 = vrot.slane %v1496, %v1509
        %v1511 = vcombine.high %v1503, %v1503
        %v1512 = vcombine.high %v1510, %v1510
        %v1514 = vunpack.c.l.s4 1966171168
        %v1515 = vunpack.c.0.s8 %v1514
        %v1516 = vlaneseq
        %v1517 = vshrl.u32 %v1516, 7
        %v1518 = vsub.s32 %v1515, %v1517
        %v1519 = vrot.slane %v1503, %v1518
        %v1521 = vunpack.c.l.s4 1966171168
        %v1522 = vunpack.c.0.s8 %v1521
        %v1523 = vlaneseq
        %v1524 = vshrl.u32 %v1523, 7
        %v1525 = vsub.s32 %v1522, %v1524
        %v1526 = vrot.slane %v1510, %v1525
        %v1528 = vunpack.c.l.s4 1966171168
        %v1529 = vunpack.c.0.s8 %v1528
        %v1530 = vlaneseq
        %v1531 = vshrl.u32 %v1530, 7
        %v1532 = vsub.s32 %v1529, %v1531
        %v1533 = vrot.slane %v1511, %v1532
        %v1535 = vunpack.c.l.s4 1966171168
        %v1536 = vunpack.c.0.s8 %v1535
        %v1537 = vlaneseq
        %v1538 = vshrl.u32 %v1537, 7
        %v1539 = vsub.s32 %v1536, %v1538
        %v1540 = vrot.slane %v1512, %v1539
        %v1541 = vcombine.high %v1519, %v1519
        %v1542 = vcombine.high %v1526, %v1526
        %v1543 = vcombine.high %v1533, %v1533
        %v1544 = vcombine.high %v1540, %v1540
        %v1545 = vcombine.high %v1419, %v1419
        %v1547 = vunpack.c.l.s4 1966171168
        %v1548 = vunpack.c.0.s8 %v1547
        %v1549 = vlaneseq
        %v1550 = vshrl.u32 %v1549, 7
        %v1551 = vsub.s32 %v1548, %v1550
        %v1552 = vrot.slane %v1419, %v1551
        %v1554 = vunpack.c.l.s4 1966171168
        %v1555 = vunpack.c.0.s8 %v1554
        %v1556 = vlaneseq
        %v1557 = vshrl.u32 %v1556, 7
        %v1558 = vsub.s32 %v1555, %v1557
        %v1559 = vrot.slane %v1545, %v1558
        %v1560 = vcombine.high %v1552, %v1552
        %v1561 = vcombine.high %v1559, %v1559
        %v1563 = vunpack.c.l.s4 1966171168
        %v1564 = vunpack.c.0.s8 %v1563
        %v1565 = vlaneseq
        %v1566 = vshrl.u32 %v1565, 7
        %v1567 = vsub.s32 %v1564, %v1566
        %v1568 = vrot.slane %v1552, %v1567
        %v1570 = vunpack.c.l.s4 1966171168
        %v1571 = vunpack.c.0.s8 %v1570
        %v1572 = vlaneseq
        %v1573 = vshrl.u32 %v1572, 7
        %v1574 = vsub.s32 %v1571, %v1573
        %v1575 = vrot.slane %v1559, %v1574
        %v1577 = vunpack.c.l.s4 1966171168
        %v1578 = vunpack.c.0.s8 %v1577
        %v1579 = vlaneseq
        %v1580 = vshrl.u32 %v1579, 7
        %v1581 = vsub.s32 %v1578, %v1580
        %v1582 = vrot.slane %v1560, %v1581
        %v1584 = vunpack.c.l.s4 1966171168
        %v1585 = vunpack.c.0.s8 %v1584
        %v1586 = vlaneseq
        %v1587 = vshrl.u32 %v1586, 7
        %v1588 = vsub.s32 %v1585, %v1587
        %v1589 = vrot.slane %v1561, %v1588
        %v1590 = vcombine.high %v1568, %v1568
        %v1591 = vcombine.high %v1575, %v1575
        %v1592 = vcombine.high %v1582, %v1582
        %v1593 = vcombine.high %v1589, %v1589
        %v1594 = vcombine.high %v1422, %v1422
        %v1596 = vunpack.c.l.s4 1966171168
        %v1597 = vunpack.c.0.s8 %v1596
        %v1598 = vlaneseq
        %v1599 = vshrl.u32 %v1598, 7
        %v1600 = vsub.s32 %v1597, %v1599
        %v1601 = vrot.slane %v1422, %v1600
        %v1603 = vunpack.c.l.s4 1966171168
        %v1604 = vunpack.c.0.s8 %v1603
        %v1605 = vlaneseq
        %v1606 = vshrl.u32 %v1605, 7
        %v1607 = vsub.s32 %v1604, %v1606
        %v1608 = vrot.slane %v1594, %v1607
        %v1609 = vcombine.high %v1601, %v1601
        %v1610 = vcombine.high %v1608, %v1608
        %v1612 = vunpack.c.l.s4 1966171168
        %v1613 = vunpack.c.0.s8 %v1612
        %v1614 = vlaneseq
        %v1615 = vshrl.u32 %v1614, 7
        %v1616 = vsub.s32 %v1613, %v1615
        %v1617 = vrot.slane %v1601, %v1616
        %v1619 = vunpack.c.l.s4 1966171168
        %v1620 = vunpack.c.0.s8 %v1619
        %v1621 = vlaneseq
        %v1622 = vshrl.u32 %v1621, 7
        %v1623 = vsub.s32 %v1620, %v1622
        %v1624 = vrot.slane %v1608, %v1623
        %v1626 = vunpack.c.l.s4 1966171168
        %v1627 = vunpack.c.0.s8 %v1626
        %v1628 = vlaneseq
        %v1629 = vshrl.u32 %v1628, 7
        %v1630 = vsub.s32 %v1627, %v1629
        %v1631 = vrot.slane %v1609, %v1630
        %v1633 = vunpack.c.l.s4 1966171168
        %v1634 = vunpack.c.0.s8 %v1633
        %v1635 = vlaneseq
        %v1636 = vshrl.u32 %v1635, 7
        %v1637 = vsub.s32 %v1634, %v1636
        %v1638 = vrot.slane %v1610, %v1637
        %v1639 = vcombine.high %v1617, %v1617
        %v1640 = vcombine.high %v1624, %v1624
        %v1641 = vcombine.high %v1631, %v1631
        %v1642 = vcombine.high %v1638, %v1638
        %v1643 = vcombine.high %v1427, %v1427
        %v1645 = vunpack.c.l.s4 1966171168
        %v1646 = vunpack.c.0.s8 %v1645
        %v1647 = vlaneseq
        %v1648 = vshrl.u32 %v1647, 7
        %v1649 = vsub.s32 %v1646, %v1648
        %v1650 = vrot.slane %v1427, %v1649
        %v1652 = vunpack.c.l.s4 1966171168
        %v1653 = vunpack.c.0.s8 %v1652
        %v1654 = vlaneseq
        %v1655 = vshrl.u32 %v1654, 7
        %v1656 = vsub.s32 %v1653, %v1655
        %v1657 = vrot.slane %v1643, %v1656
        %v1658 = vcombine.high %v1650, %v1650
        %v1659 = vcombine.high %v1657, %v1657
        %v1661 = vunpack.c.l.s4 1966171168
        %v1662 = vunpack.c.0.s8 %v1661
        %v1663 = vlaneseq
        %v1664 = vshrl.u32 %v1663, 7
        %v1665 = vsub.s32 %v1662, %v1664
        %v1666 = vrot.slane %v1650, %v1665
        %v1668 = vunpack.c.l.s4 1966171168
        %v1669 = vunpack.c.0.s8 %v1668
        %v1670 = vlaneseq
        %v1671 = vshrl.u32 %v1670, 7
        %v1672 = vsub.s32 %v1669, %v1671
        %v1673 = vrot.slane %v1657, %v1672
        %v1675 = vunpack.c.l.s4 1966171168
        %v1676 = vunpack.c.0.s8 %v1675
        %v1677 = vlaneseq
        %v1678 = vshrl.u32 %v1677, 7
        %v1679 = vsub.s32 %v1676, %v1678
        %v1680 = vrot.slane %v1658, %v1679
        %v1682 = vunpack.c.l.s4 1966171168
        %v1683 = vunpack.c.0.s8 %v1682
        %v1684 = vlaneseq
        %v1685 = vshrl.u32 %v1684, 7
        %v1686 = vsub.s32 %v1683, %v1685
        %v1687 = vrot.slane %v1659, %v1686
        %v1688 = vcombine.high %v1666, %v1666
        %v1689 = vcombine.high %v1673, %v1673
        %v1690 = vcombine.high %v1680, %v1680
        %v1691 = vcombine.high %v1687, %v1687
        %v1692 = vcombine.high %v1430, %v1430
        %v1694 = vunpack.c.l.s4 1966171168
        %v1695 = vunpack.c.0.s8 %v1694
        %v1696 = vlaneseq
        %v1697 = vshrl.u32 %v1696, 7
        %v1698 = vsub.s32 %v1695, %v1697
        %v1699 = vrot.slane %v1430, %v1698
        %v1701 = vunpack.c.l.s4 1966171168
        %v1702 = vunpack.c.0.s8 %v1701
        %v1703 = vlaneseq
        %v1704 = vshrl.u32 %v1703, 7
        %v1705 = vsub.s32 %v1702, %v1704
        %v1706 = vrot.slane %v1692, %v1705
        %v1707 = vcombine.high %v1699, %v1699
        %v1708 = vcombine.high %v1706, %v1706
        %v1710 = vunpack.c.l.s4 1966171168
        %v1711 = vunpack.c.0.s8 %v1710
        %v1712 = vlaneseq
        %v1713 = vshrl.u32 %v1712, 7
        %v1714 = vsub.s32 %v1711, %v1713
        %v1715 = vrot.slane %v1699, %v1714
        %v1717 = vunpack.c.l.s4 1966171168
        %v1718 = vunpack.c.0.s8 %v1717
        %v1719 = vlaneseq
        %v1720 = vshrl.u32 %v1719, 7
        %v1721 = vsub.s32 %v1718, %v1720
        %v1722 = vrot.slane %v1706, %v1721
        %v1724 = vunpack.c.l.s4 1966171168
        %v1725 = vunpack.c.0.s8 %v1724
        %v1726 = vlaneseq
        %v1727 = vshrl.u32 %v1726, 7
        %v1728 = vsub.s32 %v1725, %v1727
        %v1729 = vrot.slane %v1707, %v1728
        %v1731 = vunpack.c.l.s4 1966171168
        %v1732 = vunpack.c.0.s8 %v1731
        %v1733 = vlaneseq
        %v1734 = vshrl.u32 %v1733, 7
        %v1735 = vsub.s32 %v1732, %v1734
        %v1736 = vrot.slane %v1708, %v1735
        %v1737 = vcombine.high %v1715, %v1715
        %v1738 = vcombine.high %v1722, %v1722
        %v1739 = vcombine.high %v1729, %v1729
        %v1740 = vcombine.high %v1736, %v1736
        %v1741 = vcombine.high %v1435, %v1435
        %v1743 = vunpack.c.l.s4 1966171168
        %v1744 = vunpack.c.0.s8 %v1743
        %v1745 = vlaneseq
        %v1746 = vshrl.u32 %v1745, 7
        %v1747 = vsub.s32 %v1744, %v1746
        %v1748 = vrot.slane %v1435, %v1747
        %v1750 = vunpack.c.l.s4 1966171168
        %v1751 = vunpack.c.0.s8 %v1750
        %v1752 = vlaneseq
        %v1753 = vshrl.u32 %v1752, 7
        %v1754 = vsub.s32 %v1751, %v1753
        %v1755 = vrot.slane %v1741, %v1754
        %v1756 = vcombine.high %v1748, %v1748
        %v1757 = vcombine.high %v1755, %v1755
        %v1759 = vunpack.c.l.s4 1966171168
        %v1760 = vunpack.c.0.s8 %v1759
        %v1761 = vlaneseq
        %v1762 = vshrl.u32 %v1761, 7
        %v1763 = vsub.s32 %v1760, %v1762
        %v1764 = vrot.slane %v1748, %v1763
        %v1766 = vunpack.c.l.s4 1966171168
        %v1767 = vunpack.c.0.s8 %v1766
        %v1768 = vlaneseq
        %v1769 = vshrl.u32 %v1768, 7
        %v1770 = vsub.s32 %v1767, %v1769
        %v1771 = vrot.slane %v1755, %v1770
        %v1773 = vunpack.c.l.s4 1966171168
        %v1774 = vunpack.c.0.s8 %v1773
        %v1775 = vlaneseq
        %v1776 = vshrl.u32 %v1775, 7
        %v1777 = vsub.s32 %v1774, %v1776
        %v1778 = vrot.slane %v1756, %v1777
        %v1780 = vunpack.c.l.s4 1966171168
        %v1781 = vunpack.c.0.s8 %v1780
        %v1782 = vlaneseq
        %v1783 = vshrl.u32 %v1782, 7
        %v1784 = vsub.s32 %v1781, %v1783
        %v1785 = vrot.slane %v1757, %v1784
        %v1786 = vcombine.high %v1764, %v1764
        %v1787 = vcombine.high %v1771, %v1771
        %v1788 = vcombine.high %v1778, %v1778
        %v1789 = vcombine.high %v1785, %v1785
        %v1846 = vmax.f32 %v1470, 0.0
        %v1847 = vmax.f32 %v1484, 0.0
        %v1848 = vmax.f32 %v1492, 0.0
        %v1849 = vmax.f32 %v1494, 0.0
        %v1850 = vmax.f32 %v1477, 0.0
        %v1851 = vmax.f32 %v1491, 0.0
        %v1852 = vmax.f32 %v1493, 0.0
        %v1853 = vmax.f32 %v1495, 0.0
        %v1854 = vmax.f32 %v1519, 0.0
        %v1855 = vmax.f32 %v1533, 0.0
        %v1856 = vmax.f32 %v1541, 0.0
        %v1857 = vmax.f32 %v1543, 0.0
        %v1858 = vmax.f32 %v1526, 0.0
        %v1859 = vmax.f32 %v1540, 0.0
        %v1860 = vmax.f32 %v1542, 0.0
        %v1861 = vmax.f32 %v1544, 0.0
        %v1862 = vmax.f32 %v1568, 0.0
        %v1863 = vmax.f32 %v1582, 0.0
        %v1864 = vmax.f32 %v1590, 0.0
        %v1865 = vmax.f32 %v1592, 0.0
        %v1866 = vmax.f32 %v1575, 0.0
        %v1867 = vmax.f32 %v1589, 0.0
        %v1868 = vmax.f32 %v1591, 0.0
        %v1869 = vmax.f32 %v1593, 0.0
        %v1870 = vmax.f32 %v1617, 0.0
        %v1871 = vmax.f32 %v1631, 0.0
        %v1872 = vmax.f32 %v1639, 0.0
        %v1873 = vmax.f32 %v1641, 0.0
        %v1874 = vmax.f32 %v1624, 0.0
        %v1875 = vmax.f32 %v1638, 0.0
        %v1876 = vmax.f32 %v1640, 0.0
        %v1877 = vmax.f32 %v1642, 0.0
        %v1878 = vmax.f32 %v1666, 0.0
        %v1879 = vmax.f32 %v1680, 0.0
        %v1880 = vmax.f32 %v1688, 0.0
        %v1881 = vmax.f32 %v1690, 0.0
        %v1882 = vmax.f32 %v1673, 0.0
        %v1883 = vmax.f32 %v1687, 0.0
        %v1884 = vmax.f32 %v1689, 0.0
        %v1885 = vmax.f32 %v1691, 0.0
        %v1886 = vmax.f32 %v1715, 0.0
        %v1887 = vmax.f32 %v1729, 0.0
        %v1888 = vmax.f32 %v1737, 0.0
        %v1889 = vmax.f32 %v1739, 0.0
        %v1890 = vmax.f32 %v1722, 0.0
        %v1891 = vmax.f32 %v1736, 0.0
        %v1892 = vmax.f32 %v1738, 0.0
        %v1893 = vmax.f32 %v1740, 0.0
        %v1894 = vmax.f32 %v1764, 0.0
        %v1895 = vmax.f32 %v1778, 0.0
        %v1896 = vmax.f32 %v1786, 0.0
        %v1897 = vmax.f32 %v1788, 0.0
        %v1898 = vmax.f32 %v1771, 0.0
        %v1899 = vmax.f32 %v1785, 0.0
        %v1900 = vmax.f32 %v1787, 0.0
        %v1901 = vmax.f32 %v1789, 0.0
        %v1958 = vcombine.low %v1846, %v1847
        %v1959 = vcombine.low %v1848, %v1849
        %v1960 = vcombine.low %v1850, %v1851
        %v1962 = vunpack.c.l.s4 1966171168
        %v1963 = vunpack.c.0.s8 %v1962
        %v1964 = vlaneseq
        %v1965 = vshrl.u32 %v1964, 7
        %v1966 = vsub.s32 %v1963, %v1965
        %v1967 = vrot.slane %v1958, %v1966
        %v1969 = vunpack.c.l.s4 1966171168
        %v1970 = vunpack.c.0.s8 %v1969
        %v1971 = vlaneseq
        %v1972 = vshrl.u32 %v1971, 7
        %v1973 = vsub.s32 %v1970, %v1972
        %v1974 = vrot.slane %v1959, %v1973
        %v1976 = vunpack.c.l.s4 1966171168
        %v1977 = vunpack.c.0.s8 %v1976
        %v1978 = vlaneseq
        %v1979 = vshrl.u32 %v1978, 7
        %v1980 = vsub.s32 %v1977, %v1979
        %v1981 = vrot.slane %v1960, %v1980
        %v1983 = vunpack.c.l.s4 1966171168
        %v1984 = vunpack.c.0.s8 %v1983
        %v1985 = vlaneseq
        %v1986 = vshrl.u32 %v1985, 7
        %v1987 = vsub.s32 %v1984, %v1986
        %v1988 = vrot.slane %v1852, %v1987
        %v1989 = vcombine.low %v1967, %v1974
        %v1990 = vcombine.low %v1981, %v1988
        %v1992 = vunpack.c.l.s4 1966171168
        %v1993 = vunpack.c.0.s8 %v1992
        %v1994 = vlaneseq
        %v1995 = vshrl.u32 %v1994, 7
        %v1996 = vsub.s32 %v1993, %v1995
        %v1997 = vrot.slane %v1989, %v1996
        %v1999 = vunpack.c.l.s4 1966171168
        %v2000 = vunpack.c.0.s8 %v1999
        %v2001 = vlaneseq
        %v2002 = vshrl.u32 %v2001, 7
        %v2003 = vsub.s32 %v2000, %v2002
        %v2004 = vrot.slane %v1990, %v2003
        %v2005 = vcombine.low %v1997, %v2004
        %v2006 = vcombine.low %v1853, %v1854
        %v2007 = vcombine.low %v1855, %v1856
        %v2008 = vcombine.low %v1857, %v1858
        %v2010 = vunpack.c.l.s4 1966171168
        %v2011 = vunpack.c.0.s8 %v2010
        %v2012 = vlaneseq
        %v2013 = vshrl.u32 %v2012, 7
        %v2014 = vsub.s32 %v2011, %v2013
        %v2015 = vrot.slane %v2006, %v2014
        %v2017 = vunpack.c.l.s4 1966171168
        %v2018 = vunpack.c.0.s8 %v2017
        %v2019 = vlaneseq
        %v2020 = vshrl.u32 %v2019, 7
        %v2021 = vsub.s32 %v2018, %v2020
        %v2022 = vrot.slane %v2007, %v2021
        %v2024 = vunpack.c.l.s4 1966171168
        %v2025 = vunpack.c.0.s8 %v2024
        %v2026 = vlaneseq
        %v2027 = vshrl.u32 %v2026, 7
        %v2028 = vsub.s32 %v2025, %v2027
        %v2029 = vrot.slane %v2008, %v2028
        %v2031 = vunpack.c.l.s4 1966171168
        %v2032 = vunpack.c.0.s8 %v2031
        %v2033 = vlaneseq
        %v2034 = vshrl.u32 %v2033, 7
        %v2035 = vsub.s32 %v2032, %v2034
        %v2036 = vrot.slane %v1859, %v2035
        %v2037 = vcombine.low %v2015, %v2022
        %v2038 = vcombine.low %v2029, %v2036
        %v2040 = vunpack.c.l.s4 1966171168
        %v2041 = vunpack.c.0.s8 %v2040
        %v2042 = vlaneseq
        %v2043 = vshrl.u32 %v2042, 7
        %v2044 = vsub.s32 %v2041, %v2043
        %v2045 = vrot.slane %v2037, %v2044
        %v2047 = vunpack.c.l.s4 1966171168
        %v2048 = vunpack.c.0.s8 %v2047
        %v2049 = vlaneseq
        %v2050 = vshrl.u32 %v2049, 7
        %v2051 = vsub.s32 %v2048, %v2050
        %v2052 = vrot.slane %v2038, %v2051
        %v2053 = vcombine.low %v2045, %v2052
        %v2054 = vcombine.low %v1860, %v1861
        %v2055 = vcombine.low %v1862, %v1863
        %v2056 = vcombine.low %v1864, %v1865
        %v2058 = vunpack.c.l.s4 1966171168
        %v2059 = vunpack.c.0.s8 %v2058
        %v2060 = vlaneseq
        %v2061 = vshrl.u32 %v2060, 7
        %v2062 = vsub.s32 %v2059, %v2061
        %v2063 = vrot.slane %v2054, %v2062
        %v2065 = vunpack.c.l.s4 1966171168
        %v2066 = vunpack.c.0.s8 %v2065
        %v2067 = vlaneseq
        %v2068 = vshrl.u32 %v2067, 7
        %v2069 = vsub.s32 %v2066, %v2068
        %v2070 = vrot.slane %v2055, %v2069
        %v2072 = vunpack.c.l.s4 1966171168
        %v2073 = vunpack.c.0.s8 %v2072
        %v2074 = vlaneseq
        %v2075 = vshrl.u32 %v2074, 7
        %v2076 = vsub.s32 %v2073, %v2075
        %v2077 = vrot.slane %v2056, %v2076
        %v2079 = vunpack.c.l.s4 1966171168
        %v2080 = vunpack.c.0.s8 %v2079
        %v2081 = vlaneseq
        %v2082 = vshrl.u32 %v2081, 7
        %v2083 = vsub.s32 %v2080, %v2082
        %v2084 = vrot.slane %v1866, %v2083
        %v2085 = vcombine.low %v2063, %v2070
        %v2086 = vcombine.low %v2077, %v2084
        %v2088 = vunpack.c.l.s4 1966171168
        %v2089 = vunpack.c.0.s8 %v2088
        %v2090 = vlaneseq
        %v2091 = vshrl.u32 %v2090, 7
        %v2092 = vsub.s32 %v2089, %v2091
        %v2093 = vrot.slane %v2085, %v2092
        %v2095 = vunpack.c.l.s4 1966171168
        %v2096 = vunpack.c.0.s8 %v2095
        %v2097 = vlaneseq
        %v2098 = vshrl.u32 %v2097, 7
        %v2099 = vsub.s32 %v2096, %v2098
        %v2100 = vrot.slane %v2086, %v2099
        %v2101 = vcombine.low %v2093, %v2100
        %v2102 = vcombine.low %v1867, %v1868
        %v2103 = vcombine.low %v1869, %v1870
        %v2104 = vcombine.low %v1871, %v1872
        %v2106 = vunpack.c.l.s4 1966171168
        %v2107 = vunpack.c.0.s8 %v2106
        %v2108 = vlaneseq
        %v2109 = vshrl.u32 %v2108, 7
        %v2110 = vsub.s32 %v2107, %v2109
        %v2111 = vrot.slane %v2102, %v2110
        %v2113 = vunpack.c.l.s4 1966171168
        %v2114 = vunpack.c.0.s8 %v2113
        %v2115 = vlaneseq
        %v2116 = vshrl.u32 %v2115, 7
        %v2117 = vsub.s32 %v2114, %v2116
        %v2118 = vrot.slane %v2103, %v2117
        %v2120 = vunpack.c.l.s4 1966171168
        %v2121 = vunpack.c.0.s8 %v2120
        %v2122 = vlaneseq
        %v2123 = vshrl.u32 %v2122, 7
        %v2124 = vsub.s32 %v2121, %v2123
        %v2125 = vrot.slane %v2104, %v2124
        %v2127 = vunpack.c.l.s4 1966171168
        %v2128 = vunpack.c.0.s8 %v2127
        %v2129 = vlaneseq
        %v2130 = vshrl.u32 %v2129, 7
        %v2131 = vsub.s32 %v2128, %v2130
        %v2132 = vrot.slane %v1873, %v2131
        %v2133 = vcombine.low %v2111, %v2118
        %v2134 = vcombine.low %v2125, %v2132
        %v2136 = vunpack.c.l.s4 1966171168
        %v2137 = vunpack.c.0.s8 %v2136
        %v2138 = vlaneseq
        %v2139 = vshrl.u32 %v2138, 7
        %v2140 = vsub.s32 %v2137, %v2139
        %v2141 = vrot.slane %v2133, %v2140
        %v2143 = vunpack.c.l.s4 1966171168
        %v2144 = vunpack.c.0.s8 %v2143
        %v2145 = vlaneseq
        %v2146 = vshrl.u32 %v2145, 7
        %v2147 = vsub.s32 %v2144, %v2146
        %v2148 = vrot.slane %v2134, %v2147
        %v2149 = vcombine.low %v2141, %v2148
        %v2150 = vcombine.low %v1874, %v1875
        %v2151 = vcombine.low %v1876, %v1877
        %v2152 = vcombine.low %v1878, %v1879
        %v2154 = vunpack.c.l.s4 1966171168
        %v2155 = vunpack.c.0.s8 %v2154
        %v2156 = vlaneseq
        %v2157 = vshrl.u32 %v2156, 7
        %v2158 = vsub.s32 %v2155, %v2157
        %v2159 = vrot.slane %v2150, %v2158
        %v2161 = vunpack.c.l.s4 1966171168
        %v2162 = vunpack.c.0.s8 %v2161
        %v2163 = vlaneseq
        %v2164 = vshrl.u32 %v2163, 7
        %v2165 = vsub.s32 %v2162, %v2164
        %v2166 = vrot.slane %v2151, %v2165
        %v2168 = vunpack.c.l.s4 1966171168
        %v2169 = vunpack.c.0.s8 %v2168
        %v2170 = vlaneseq
        %v2171 = vshrl.u32 %v2170, 7
        %v2172 = vsub.s32 %v2169, %v2171
        %v2173 = vrot.slane %v2152, %v2172
        %v2175 = vunpack.c.l.s4 1966171168
        %v2176 = vunpack.c.0.s8 %v2175
        %v2177 = vlaneseq
        %v2178 = vshrl.u32 %v2177, 7
        %v2179 = vsub.s32 %v2176, %v2178
        %v2180 = vrot.slane %v1880, %v2179
        %v2181 = vcombine.low %v2159, %v2166
        %v2182 = vcombine.low %v2173, %v2180
        %v2184 = vunpack.c.l.s4 1966171168
        %v2185 = vunpack.c.0.s8 %v2184
        %v2186 = vlaneseq
        %v2187 = vshrl.u32 %v2186, 7
        %v2188 = vsub.s32 %v2185, %v2187
        %v2189 = vrot.slane %v2181, %v2188
        %v2191 = vunpack.c.l.s4 1966171168
        %v2192 = vunpack.c.0.s8 %v2191
        %v2193 = vlaneseq
        %v2194 = vshrl.u32 %v2193, 7
        %v2195 = vsub.s32 %v2192, %v2194
        %v2196 = vrot.slane %v2182, %v2195
        %v2197 = vcombine.low %v2189, %v2196
        %v2198 = vcombine.low %v1881, %v1882
        %v2199 = vcombine.low %v1883, %v1884
        %v2200 = vcombine.low %v1885, %v1886
        %v2202 = vunpack.c.l.s4 1966171168
        %v2203 = vunpack.c.0.s8 %v2202
        %v2204 = vlaneseq
        %v2205 = vshrl.u32 %v2204, 7
        %v2206 = vsub.s32 %v2203, %v2205
        %v2207 = vrot.slane %v2198, %v2206
        %v2209 = vunpack.c.l.s4 1966171168
        %v2210 = vunpack.c.0.s8 %v2209
        %v2211 = vlaneseq
        %v2212 = vshrl.u32 %v2211, 7
        %v2213 = vsub.s32 %v2210, %v2212
        %v2214 = vrot.slane %v2199, %v2213
        %v2216 = vunpack.c.l.s4 1966171168
        %v2217 = vunpack.c.0.s8 %v2216
        %v2218 = vlaneseq
        %v2219 = vshrl.u32 %v2218, 7
        %v2220 = vsub.s32 %v2217, %v2219
        %v2221 = vrot.slane %v2200, %v2220
        %v2223 = vunpack.c.l.s4 1966171168
        %v2224 = vunpack.c.0.s8 %v2223
        %v2225 = vlaneseq
        %v2226 = vshrl.u32 %v2225, 7
        %v2227 = vsub.s32 %v2224, %v2226
        %v2228 = vrot.slane %v1887, %v2227
        %v2229 = vcombine.low %v2207, %v2214
        %v2230 = vcombine.low %v2221, %v2228
        %v2232 = vunpack.c.l.s4 1966171168
        %v2233 = vunpack.c.0.s8 %v2232
        %v2234 = vlaneseq
        %v2235 = vshrl.u32 %v2234, 7
        %v2236 = vsub.s32 %v2233, %v2235
        %v2237 = vrot.slane %v2229, %v2236
        %v2239 = vunpack.c.l.s4 1966171168
        %v2240 = vunpack.c.0.s8 %v2239
        %v2241 = vlaneseq
        %v2242 = vshrl.u32 %v2241, 7
        %v2243 = vsub.s32 %v2240, %v2242
        %v2244 = vrot.slane %v2230, %v2243
        %v2245 = vcombine.low %v2237, %v2244
        %v2246 = vcombine.low %v1888, %v1889
        %v2247 = vcombine.low %v1890, %v1891
        %v2248 = vcombine.low %v1892, %v1893
        %v2250 = vunpack.c.l.s4 1966171168
        %v2251 = vunpack.c.0.s8 %v2250
        %v2252 = vlaneseq
        %v2253 = vshrl.u32 %v2252, 7
        %v2254 = vsub.s32 %v2251, %v2253
        %v2255 = vrot.slane %v2246, %v2254
        %v2257 = vunpack.c.l.s4 1966171168
        %v2258 = vunpack.c.0.s8 %v2257
        %v2259 = vlaneseq
        %v2260 = vshrl.u32 %v2259, 7
        %v2261 = vsub.s32 %v2258, %v2260
        %v2262 = vrot.slane %v2247, %v2261
        %v2264 = vunpack.c.l.s4 1966171168
        %v2265 = vunpack.c.0.s8 %v2264
        %v2266 = vlaneseq
        %v2267 = vshrl.u32 %v2266, 7
        %v2268 = vsub.s32 %v2265, %v2267
        %v2269 = vrot.slane %v2248, %v2268
        %v2271 = vunpack.c.l.s4 1966171168
        %v2272 = vunpack.c.0.s8 %v2271
        %v2273 = vlaneseq
        %v2274 = vshrl.u32 %v2273, 7
        %v2275 = vsub.s32 %v2272, %v2274
        %v2276 = vrot.slane %v1894, %v2275
        %v2277 = vcombine.low %v2255, %v2262
        %v2278 = vcombine.low %v2269, %v2276
        %v2280 = vunpack.c.l.s4 1966171168
        %v2281 = vunpack.c.0.s8 %v2280
        %v2282 = vlaneseq
        %v2283 = vshrl.u32 %v2282, 7
        %v2284 = vsub.s32 %v2281, %v2283
        %v2285 = vrot.slane %v2277, %v2284
        %v2287 = vunpack.c.l.s4 1966171168
        %v2288 = vunpack.c.0.s8 %v2287
        %v2289 = vlaneseq
        %v2290 = vshrl.u32 %v2289, 7
        %v2291 = vsub.s32 %v2288, %v2290
        %v2292 = vrot.slane %v2278, %v2291
        %v2293 = vcombine.low %v2285, %v2292
        %v2294 = vcombine.low %v1895, %v1896
        %v2295 = vcombine.low %v1897, %v1898
        %v2296 = vcombine.low %v1899, %v1900
        %v2298 = vunpack.c.l.s4 1966171168
        %v2299 = vunpack.c.0.s8 %v2298
        %v2300 = vlaneseq
        %v2301 = vshrl.u32 %v2300, 7
        %v2302 = vsub.s32 %v2299, %v2301
        %v2303 = vrot.slane %v2294, %v2302
        %v2305 = vunpack.c.l.s4 1966171168
        %v2306 = vunpack.c.0.s8 %v2305
        %v2307 = vlaneseq
        %v2308 = vshrl.u32 %v2307, 7
        %v2309 = vsub.s32 %v2306, %v2308
        %v2310 = vrot.slane %v2295, %v2309
        %v2312 = vunpack.c.l.s4 1966171168
        %v2313 = vunpack.c.0.s8 %v2312
        %v2314 = vlaneseq
        %v2315 = vshrl.u32 %v2314, 7
        %v2316 = vsub.s32 %v2313, %v2315
        %v2317 = vrot.slane %v2296, %v2316
        %v2319 = vunpack.c.l.s4 1966171168
        %v2320 = vunpack.c.0.s8 %v2319
        %v2321 = vlaneseq
        %v2322 = vshrl.u32 %v2321, 7
        %v2323 = vsub.s32 %v2320, %v2322
        %v2324 = vrot.slane %v1901, %v2323
        %v2325 = vcombine.low %v2303, %v2310
        %v2326 = vcombine.low %v2317, %v2324
        %v2328 = vunpack.c.l.s4 1966171168
        %v2329 = vunpack.c.0.s8 %v2328
        %v2330 = vlaneseq
        %v2331 = vshrl.u32 %v2330, 7
        %v2332 = vsub.s32 %v2329, %v2331
        %v2333 = vrot.slane %v2325, %v2332
        %v2335 = vunpack.c.l.s4 1966171168
        %v2336 = vunpack.c.0.s8 %v2335
        %v2337 = vlaneseq
        %v2338 = vshrl.u32 %v2337, 7
        %v2339 = vsub.s32 %v2336, %v2338
        %v2340 = vrot.slane %v2326, %v2339
        %v2341 = vcombine.low %v2333, %v2340
        %vm2350 = vcmask 260096
        %v2351 = vsel %vm2350, %v2005, -inf
        %v2352 = vrot.slane %v2351, 4
        %v2353 = vmax.f32 %v2351, %v2352
        %v2354 = vrot.slane %v2353, 2
        %v2355 = vmax.f32 %v2353, %v2354
        %v2356 = vrot.slane %v2355, 1
        %v2357 = vmax.f32 %v2355, %v2356
        %v2358 = vsel %vm2350, %v2053, -inf
        %v2359 = vrot.slane %v2358, 4
        %v2360 = vmax.f32 %v2358, %v2359
        %v2361 = vrot.slane %v2360, 2
        %v2362 = vmax.f32 %v2360, %v2361
        %v2363 = vrot.slane %v2362, 1
        %v2364 = vmax.f32 %v2362, %v2363
        %v2365 = vsel %vm2350, %v2101, -inf
        %v2366 = vrot.slane %v2365, 4
        %v2367 = vmax.f32 %v2365, %v2366
        %v2368 = vrot.slane %v2367, 2
        %v2369 = vmax.f32 %v2367, %v2368
        %v2370 = vrot.slane %v2369, 1
        %v2371 = vmax.f32 %v2369, %v2370
        %v2372 = vsel %vm2350, %v2149, -inf
        %v2373 = vrot.slane %v2372, 4
        %v2374 = vmax.f32 %v2372, %v2373
        %v2375 = vrot.slane %v2374, 2
        %v2376 = vmax.f32 %v2374, %v2375
        %v2377 = vrot.slane %v2376, 1
        %v2378 = vmax.f32 %v2376, %v2377
        %v2379 = vsel %vm2350, %v2197, -inf
        %v2380 = vrot.slane %v2379, 4
        %v2381 = vmax.f32 %v2379, %v2380
        %v2382 = vrot.slane %v2381, 2
        %v2383 = vmax.f32 %v2381, %v2382
        %v2384 = vrot.slane %v2383, 1
        %v2385 = vmax.f32 %v2383, %v2384
        %v2386 = vsel %vm2350, %v2245, -inf
        %v2387 = vrot.slane %v2386, 4
        %v2388 = vmax.f32 %v2386, %v2387
        %v2389 = vrot.slane %v2388, 2
        %v2390 = vmax.f32 %v2388, %v2389
        %v2391 = vrot.slane %v2390, 1
        %v2392 = vmax.f32 %v2390, %v2391
        %v2393 = vsel %vm2350, %v2293, -inf
        %v2394 = vrot.slane %v2393, 4
        %v2395 = vmax.f32 %v2393, %v2394
        %v2396 = vrot.slane %v2395, 2
        %v2397 = vmax.f32 %v2395, %v2396
        %v2398 = vrot.slane %v2397, 1
        %v2399 = vmax.f32 %v2397, %v2398
        %v2400 = vsel %vm2350, %v2341, -inf
        %v2401 = vrot.slane %v2400, 4
        %v2402 = vmax.f32 %v2400, %v2401
        %v2403 = vrot.slane %v2402, 2
        %v2404 = vmax.f32 %v2402, %v2403
        %v2405 = vrot.slane %v2404, 1
        %v2406 = vmax.f32 %v2404, %v2405
        %v2407 = vmax.f32 %v632, %v2357
        %v2408 = vmax.f32 %v633, %v2364
        %v2409 = vmax.f32 %v634, %v2371
        %v2410 = vmax.f32 %v635, %v2378
        %v2411 = vmax.f32 %v636, %v2385
        %v2412 = vmax.f32 %v637, %v2392
        %v2413 = vmax.f32 %v638, %v2399
        %v2414 = vmax.f32 %v639, %v2406
        %v2415 = vrot.slane %v278, 2
        %v2416 = vrot.slane %v279, 2
        %v2417 = vrot.slane %v280, 2
        %v2418 = vrot.slane %v281, 2
        %v2419 = vrot.slane %v282, 2
        %v2420 = vrot.slane %v283, 2
        %v2421 = vrot.slane %v284, 2
        %v2422 = vrot.slane %v285, 2
        %2423 = vrot.lane.b32.xlu0 %v2415, 64
        %v2424 = vpop.permute.xlu0 %2423
        %2425 = vrot.lane.b32.xlu0 %v2416, 64
        %v2426 = vpop.permute.xlu0 %2425
        %2427 = vrot.lane.b32.xlu0 %v2417, 64
        %v2428 = vpop.permute.xlu0 %2427
        %2429 = vrot.lane.b32.xlu0 %v2418, 64
        %v2430 = vpop.permute.xlu0 %2429
        %2431 = vrot.lane.b32.xlu0 %v2419, 64
        %v2432 = vpop.permute.xlu0 %2431
        %2433 = vrot.lane.b32.xlu0 %v2420, 64
        %v2434 = vpop.permute.xlu0 %2433
        %2435 = vrot.lane.b32.xlu0 %v2421, 64
        %v2436 = vpop.permute.xlu0 %2435
        %2437 = vrot.lane.b32.xlu0 %v2422, 64
        %v2438 = vpop.permute.xlu0 %2437
        %v2447 = vsel %vm1363, %v680, %v2424
        %v2448 = vsel %vm1363, %v681, %v2426
        %v2449 = vsel %vm1363, %v682, %v2428
        %v2450 = vsel %vm1363, %v683, %v2430
        %v2451 = vsel %vm1363, %v684, %v2432
        %v2452 = vsel %vm1363, %v685, %v2434
        %v2453 = vsel %vm1363, %v686, %v2436
        %v2454 = vsel %vm1363, %v687, %v2438
        %v2455 = vpack.c.bf16 %v2447, %v2447
        %v2456 = vpack.c.bf16 %v2448, %v2448
        %v2457 = vpack.c.bf16 %v2449, %v2449
        %v2458 = vpack.c.bf16 %v2450, %v2450
        %v2459 = vpack.c.bf16 %v2451, %v2451
        %v2460 = vpack.c.bf16 %v2452, %v2452
        %v2461 = vpack.c.bf16 %v2453, %v2453
        %v2462 = vpack.c.bf16 %v2454, %v2454
        %v2463 = vld [vmem:[%s2 + $0x30] sm:$0xf]
        %v2464 = vld [vmem:[%s2 + $0x34] sm:$0xf]
        %v2465 = vld [vmem:[%s2 + $0x38] sm:$0xf]
        %v2466 = vld [vmem:[%s2 + $0x3c] sm:$0xf]
        %v2467 = vld [vmem:[%s2 + $0x40] sm:$0xf]
        %v2468 = vld [vmem:[%s2 + $0x44] sm:$0xf]
        %v2469 = vld [vmem:[%s2 + $0x48] sm:$0xf]
        %v2470 = vld [vmem:[%s2 + $0x4c] sm:$0xf]
        %v2471 = vld [vmem:[%s2 + $0x50] sm:$0xf]
        %v2472 = vld [vmem:[%s2 + $0x54] sm:$0xf]
        %v2473 = vld [vmem:[%s2 + $0x58] sm:$0xf]
        %v2474 = vld [vmem:[%s2 + $0x5c] sm:$0xf]
        %v2475 = vld [vmem:[%s3 + $0x2] sm:$0x1]
        %v2476 = vlaneseq
        %v2477 = vshrl.u32 %v2476, 7
        %v2478 = vsub.s32 0, %v2477
        %v2479 = vrot.slane %v2475, %v2478
        %v2489 = vunpack.c.l.s4 1966171168
        %v2490 = vunpack.c.0.s8 %v2489
        %v2491 = vlaneseq
        %v2492 = vshrl.u32 %v2491, 7
        %v2493 = vsub.s32 %v2490, %v2492
        %v2494 = vrot.slane %v2455, %v2493
        %v2495 = vcombine.high %v2494, %v2494
        %v2497 = vunpack.c.l.s4 1966171168
        %v2498 = vunpack.c.0.s8 %v2497
        %v2499 = vlaneseq
        %v2500 = vshrl.u32 %v2499, 7
        %v2501 = vsub.s32 %v2498, %v2500
        %v2502 = vrot.slane %v2494, %v2501
        %v2504 = vunpack.c.l.s4 1966171168
        %v2505 = vunpack.c.0.s8 %v2504
        %v2506 = vlaneseq
        %v2507 = vshrl.u32 %v2506, 7
        %v2508 = vsub.s32 %v2505, %v2507
        %v2509 = vrot.slane %v2495, %v2508
        %v2510 = vcombine.high %v2502, %v2502
        %v2512 = vunpack.c.l.s4 1966171168
        %v2513 = vunpack.c.0.s8 %v2512
        %v2514 = vlaneseq
        %v2515 = vshrl.u32 %v2514, 7
        %v2516 = vsub.s32 %v2513, %v2515
        %v2517 = vrot.slane %v2456, %v2516
        %v2518 = vcombine.high %v2517, %v2517
        %v2520 = vunpack.c.l.s4 1966171168
        %v2521 = vunpack.c.0.s8 %v2520
        %v2522 = vlaneseq
        %v2523 = vshrl.u32 %v2522, 7
        %v2524 = vsub.s32 %v2521, %v2523
        %v2525 = vrot.slane %v2517, %v2524
        %v2527 = vunpack.c.l.s4 1966171168
        %v2528 = vunpack.c.0.s8 %v2527
        %v2529 = vlaneseq
        %v2530 = vshrl.u32 %v2529, 7
        %v2531 = vsub.s32 %v2528, %v2530
        %v2532 = vrot.slane %v2518, %v2531
        %v2533 = vcombine.high %v2525, %v2525
        %v2535 = vunpack.c.l.s4 1966171168
        %v2536 = vunpack.c.0.s8 %v2535
        %v2537 = vlaneseq
        %v2538 = vshrl.u32 %v2537, 7
        %v2539 = vsub.s32 %v2536, %v2538
        %v2540 = vrot.slane %v2457, %v2539
        %v2541 = vcombine.high %v2540, %v2540
        %v2543 = vunpack.c.l.s4 1966171168
        %v2544 = vunpack.c.0.s8 %v2543
        %v2545 = vlaneseq
        %v2546 = vshrl.u32 %v2545, 7
        %v2547 = vsub.s32 %v2544, %v2546
        %v2548 = vrot.slane %v2540, %v2547
        %v2550 = vunpack.c.l.s4 1966171168
        %v2551 = vunpack.c.0.s8 %v2550
        %v2552 = vlaneseq
        %v2553 = vshrl.u32 %v2552, 7
        %v2554 = vsub.s32 %v2551, %v2553
        %v2555 = vrot.slane %v2541, %v2554
        %v2556 = vcombine.high %v2548, %v2548
        %v2558 = vunpack.c.l.s4 1966171168
        %v2559 = vunpack.c.0.s8 %v2558
        %v2560 = vlaneseq
        %v2561 = vshrl.u32 %v2560, 7
        %v2562 = vsub.s32 %v2559, %v2561
        %v2563 = vrot.slane %v2458, %v2562
        %v2564 = vcombine.high %v2563, %v2563
        %v2566 = vunpack.c.l.s4 1966171168
        %v2567 = vunpack.c.0.s8 %v2566
        %v2568 = vlaneseq
        %v2569 = vshrl.u32 %v2568, 7
        %v2570 = vsub.s32 %v2567, %v2569
        %v2571 = vrot.slane %v2563, %v2570
        %v2573 = vunpack.c.l.s4 1966171168
        %v2574 = vunpack.c.0.s8 %v2573
        %v2575 = vlaneseq
        %v2576 = vshrl.u32 %v2575, 7
        %v2577 = vsub.s32 %v2574, %v2576
        %v2578 = vrot.slane %v2564, %v2577
        %v2579 = vcombine.high %v2571, %v2571
        %v2581 = vunpack.c.l.s4 1966171168
        %v2582 = vunpack.c.0.s8 %v2581
        %v2583 = vlaneseq
        %v2584 = vshrl.u32 %v2583, 7
        %v2585 = vsub.s32 %v2582, %v2584
        %v2586 = vrot.slane %v2459, %v2585
        %v2587 = vcombine.high %v2586, %v2586
        %v2589 = vunpack.c.l.s4 1966171168
        %v2590 = vunpack.c.0.s8 %v2589
        %v2591 = vlaneseq
        %v2592 = vshrl.u32 %v2591, 7
        %v2593 = vsub.s32 %v2590, %v2592
        %v2594 = vrot.slane %v2586, %v2593
        %v2596 = vunpack.c.l.s4 1966171168
        %v2597 = vunpack.c.0.s8 %v2596
        %v2598 = vlaneseq
        %v2599 = vshrl.u32 %v2598, 7
        %v2600 = vsub.s32 %v2597, %v2599
        %v2601 = vrot.slane %v2587, %v2600
        %v2602 = vcombine.high %v2594, %v2594
        %v2604 = vunpack.c.l.s4 1966171168
        %v2605 = vunpack.c.0.s8 %v2604
        %v2606 = vlaneseq
        %v2607 = vshrl.u32 %v2606, 7
        %v2608 = vsub.s32 %v2605, %v2607
        %v2609 = vrot.slane %v2460, %v2608
        %v2610 = vcombine.high %v2609, %v2609
        %v2612 = vunpack.c.l.s4 1966171168
        %v2613 = vunpack.c.0.s8 %v2612
        %v2614 = vlaneseq
        %v2615 = vshrl.u32 %v2614, 7
        %v2616 = vsub.s32 %v2613, %v2615
        %v2617 = vrot.slane %v2609, %v2616
        %v2619 = vunpack.c.l.s4 1966171168
        %v2620 = vunpack.c.0.s8 %v2619
        %v2621 = vlaneseq
        %v2622 = vshrl.u32 %v2621, 7
        %v2623 = vsub.s32 %v2620, %v2622
        %v2624 = vrot.slane %v2610, %v2623
        %v2625 = vcombine.high %v2617, %v2617
        %v2627 = vunpack.c.l.s4 1966171168
        %v2628 = vunpack.c.0.s8 %v2627
        %v2629 = vlaneseq
        %v2630 = vshrl.u32 %v2629, 7
        %v2631 = vsub.s32 %v2628, %v2630
        %v2632 = vrot.slane %v2461, %v2631
        %v2633 = vcombine.high %v2632, %v2632
        %v2635 = vunpack.c.l.s4 1966171168
        %v2636 = vunpack.c.0.s8 %v2635
        %v2637 = vlaneseq
        %v2638 = vshrl.u32 %v2637, 7
        %v2639 = vsub.s32 %v2636, %v2638
        %v2640 = vrot.slane %v2632, %v2639
        %v2642 = vunpack.c.l.s4 1966171168
        %v2643 = vunpack.c.0.s8 %v2642
        %v2644 = vlaneseq
        %v2645 = vshrl.u32 %v2644, 7
        %v2646 = vsub.s32 %v2643, %v2645
        %v2647 = vrot.slane %v2633, %v2646
        %v2648 = vcombine.high %v2640, %v2640
        %v2650 = vunpack.c.l.s4 1966171168
        %v2651 = vunpack.c.0.s8 %v2650
        %v2652 = vlaneseq
        %v2653 = vshrl.u32 %v2652, 7
        %v2654 = vsub.s32 %v2651, %v2653
        %v2655 = vrot.slane %v2462, %v2654
        %v2656 = vcombine.high %v2655, %v2655
        %v2658 = vunpack.c.l.s4 1966171168
        %v2659 = vunpack.c.0.s8 %v2658
        %v2660 = vlaneseq
        %v2661 = vshrl.u32 %v2660, 7
        %v2662 = vsub.s32 %v2659, %v2661
        %v2663 = vrot.slane %v2655, %v2662
        %v2665 = vunpack.c.l.s4 1966171168
        %v2666 = vunpack.c.0.s8 %v2665
        %v2667 = vlaneseq
        %v2668 = vshrl.u32 %v2667, 7
        %v2669 = vsub.s32 %v2666, %v2668
        %v2670 = vrot.slane %v2656, %v2669
        %v2671 = vcombine.high %v2663, %v2663
        %v2673 = vcombine.high %v2479, %v2479
        %v2675 = vunpack.c.l.s4 1983009808
        %v2676 = vunpack.c.0.s8 %v2675
        %v2677 = vlaneseq
        %v2678 = vshrl.u32 %v2677, 7
        %v2679 = vsub.s32 %v2676, %v2678
        %v2680 = vrot.slane %v2479, %v2679
        %v2682 = vunpack.c.l.s4 1983009808
        %v2683 = vunpack.c.0.s8 %v2682
        %v2684 = vlaneseq
        %v2685 = vshrl.u32 %v2684, 7
        %v2686 = vsub.s32 %v2683, %v2685
        %v2687 = vrot.slane %v2673, %v2686
        %v2688 = vcombine.high %v2680, %v2680
        %v2689 = vcombine.low %v2502, %v2509
        %v2690 = vcombine.low %v2510, %v2525
        %v2691 = vcombine.low %v2532, %v2533
        %v2692 = vcombine.low %v2548, %v2555
        %v2694 = vunpack.c.l.s4 1966171168
        %v2695 = vunpack.c.0.s8 %v2694
        %v2696 = vlaneseq
        %v2697 = vshrl.u32 %v2696, 7
        %v2698 = vsub.s32 %v2695, %v2697
        %v2699 = vrot.slane %v2689, %v2698
        %v2701 = vunpack.c.l.s4 1966171168
        %v2702 = vunpack.c.0.s8 %v2701
        %v2703 = vlaneseq
        %v2704 = vshrl.u32 %v2703, 7
        %v2705 = vsub.s32 %v2702, %v2704
        %v2706 = vrot.slane %v2690, %v2705
        %v2708 = vunpack.c.l.s4 1966171168
        %v2709 = vunpack.c.0.s8 %v2708
        %v2710 = vlaneseq
        %v2711 = vshrl.u32 %v2710, 7
        %v2712 = vsub.s32 %v2709, %v2711
        %v2713 = vrot.slane %v2691, %v2712
        %v2715 = vunpack.c.l.s4 1966171168
        %v2716 = vunpack.c.0.s8 %v2715
        %v2717 = vlaneseq
        %v2718 = vshrl.u32 %v2717, 7
        %v2719 = vsub.s32 %v2716, %v2718
        %v2720 = vrot.slane %v2692, %v2719
        %v2721 = vcombine.low %v2699, %v2706
        %v2722 = vcombine.low %v2713, %v2720
        %v2724 = vunpack.c.l.s4 1966171168
        %v2725 = vunpack.c.0.s8 %v2724
        %v2726 = vlaneseq
        %v2727 = vshrl.u32 %v2726, 7
        %v2728 = vsub.s32 %v2725, %v2727
        %v2729 = vrot.slane %v2721, %v2728
        %v2731 = vunpack.c.l.s4 1966171168
        %v2732 = vunpack.c.0.s8 %v2731
        %v2733 = vlaneseq
        %v2734 = vshrl.u32 %v2733, 7
        %v2735 = vsub.s32 %v2732, %v2734
        %v2736 = vrot.slane %v2722, %v2735
        %v2737 = vcombine.low %v2729, %v2736
        %v2738 = vcombine.low %v2556, %v2571
        %v2739 = vcombine.low %v2578, %v2579
        %v2740 = vcombine.low %v2594, %v2601
        %v2741 = vcombine.low %v2602, %v2617
        %v2743 = vunpack.c.l.s4 1966171168
        %v2744 = vunpack.c.0.s8 %v2743
        %v2745 = vlaneseq
        %v2746 = vshrl.u32 %v2745, 7
        %v2747 = vsub.s32 %v2744, %v2746
        %v2748 = vrot.slane %v2738, %v2747
        %v2750 = vunpack.c.l.s4 1966171168
        %v2751 = vunpack.c.0.s8 %v2750
        %v2752 = vlaneseq
        %v2753 = vshrl.u32 %v2752, 7
        %v2754 = vsub.s32 %v2751, %v2753
        %v2755 = vrot.slane %v2739, %v2754
        %v2757 = vunpack.c.l.s4 1966171168
        %v2758 = vunpack.c.0.s8 %v2757
        %v2759 = vlaneseq
        %v2760 = vshrl.u32 %v2759, 7
        %v2761 = vsub.s32 %v2758, %v2760
        %v2762 = vrot.slane %v2740, %v2761
        %v2764 = vunpack.c.l.s4 1966171168
        %v2765 = vunpack.c.0.s8 %v2764
        %v2766 = vlaneseq
        %v2767 = vshrl.u32 %v2766, 7
        %v2768 = vsub.s32 %v2765, %v2767
        %v2769 = vrot.slane %v2741, %v2768
        %v2770 = vcombine.low %v2748, %v2755
        %v2771 = vcombine.low %v2762, %v2769
        %v2773 = vunpack.c.l.s4 1966171168
        %v2774 = vunpack.c.0.s8 %v2773
        %v2775 = vlaneseq
        %v2776 = vshrl.u32 %v2775, 7
        %v2777 = vsub.s32 %v2774, %v2776
        %v2778 = vrot.slane %v2770, %v2777
        %v2780 = vunpack.c.l.s4 1966171168
        %v2781 = vunpack.c.0.s8 %v2780
        %v2782 = vlaneseq
        %v2783 = vshrl.u32 %v2782, 7
        %v2784 = vsub.s32 %v2781, %v2783
        %v2785 = vrot.slane %v2771, %v2784
        %v2786 = vcombine.low %v2778, %v2785
        %v2787 = vcombine.low %v2624, %v2625
        %v2788 = vcombine.low %v2640, %v2647
        %v2789 = vcombine.low %v2648, %v2663
        %v2790 = vcombine.low %v2670, %v2671
        %v2792 = vunpack.c.l.s4 1966171168
        %v2793 = vunpack.c.0.s8 %v2792
        %v2794 = vlaneseq
        %v2795 = vshrl.u32 %v2794, 7
        %v2796 = vsub.s32 %v2793, %v2795
        %v2797 = vrot.slane %v2787, %v2796
        %v2799 = vunpack.c.l.s4 1966171168
        %v2800 = vunpack.c.0.s8 %v2799
        %v2801 = vlaneseq
        %v2802 = vshrl.u32 %v2801, 7
        %v2803 = vsub.s32 %v2800, %v2802
        %v2804 = vrot.slane %v2788, %v2803
        %v2806 = vunpack.c.l.s4 1966171168
        %v2807 = vunpack.c.0.s8 %v2806
        %v2808 = vlaneseq
        %v2809 = vshrl.u32 %v2808, 7
        %v2810 = vsub.s32 %v2807, %v2809
        %v2811 = vrot.slane %v2789, %v2810
        %v2813 = vunpack.c.l.s4 1966171168
        %v2814 = vunpack.c.0.s8 %v2813
        %v2815 = vlaneseq
        %v2816 = vshrl.u32 %v2815, 7
        %v2817 = vsub.s32 %v2814, %v2816
        %v2818 = vrot.slane %v2790, %v2817
        %v2819 = vcombine.low %v2797, %v2804
        %v2820 = vcombine.low %v2811, %v2818
        %v2822 = vunpack.c.l.s4 1966171168
        %v2823 = vunpack.c.0.s8 %v2822
        %v2824 = vlaneseq
        %v2825 = vshrl.u32 %v2824, 7
        %v2826 = vsub.s32 %v2823, %v2825
        %v2827 = vrot.slane %v2819, %v2826
        %v2829 = vunpack.c.l.s4 1966171168
        %v2830 = vunpack.c.0.s8 %v2829
        %v2831 = vlaneseq
        %v2832 = vshrl.u32 %v2831, 7
        %v2833 = vsub.s32 %v2830, %v2832
        %v2834 = vrot.slane %v2820, %v2833
        %v2835 = vcombine.low %v2827, %v2834
        %v2848 = vunpack.c.l.b16 %v2463
        %v2849 = vunpack.c.l.b16 %v2464
        %v2850 = vunpack.c.l.b16 %v2465
        %v2851 = vunpack.c.l.b16 %v2466
        %v2852 = vunpack.c.l.b16 %v2467
        %v2853 = vunpack.c.l.b16 %v2468
        %v2854 = vunpack.c.l.b16 %v2469
        %v2855 = vunpack.c.l.b16 %v2470
        %v2856 = vunpack.c.l.b16 %v2471
        %v2857 = vunpack.c.l.b16 %v2472
        %v2858 = vunpack.c.l.b16 %v2473
        %v2859 = vunpack.c.l.b16 %v2474
        %v2860 = vpack.c.b16 %v2849, %v2848
        %v2861 = vpack.c.b16 %v2851, %v2850
        %v2862 = vpack.c.b16 %v2853, %v2852
        %v2863 = vpack.c.b16 %v2855, %v2854
        %v2864 = vpack.c.b16 %v2857, %v2856
        %v2865 = vpack.c.b16 %v2859, %v2858
        %v2872 = vcombine.low %v2680, %v2688
        %v2873 = vcombine.low %v2687, %v2680
        %v2875 = vunpack.c.l.s4 1983009808
        %v2876 = vunpack.c.0.s8 %v2875
        %v2877 = vlaneseq
        %v2878 = vshrl.u32 %v2877, 7
        %v2879 = vsub.s32 %v2876, %v2878
        %v2880 = vrot.slane %v2872, %v2879
        %v2882 = vunpack.c.l.s4 1983009808
        %v2883 = vunpack.c.0.s8 %v2882
        %v2884 = vlaneseq
        %v2885 = vshrl.u32 %v2884, 7
        %v2886 = vsub.s32 %v2883, %v2885
        %v2887 = vrot.slane %v2873, %v2886
        %v2888 = vcombine.low %v2880, %v2887
        %v2889 = vcombine.low %v2688, %v2687
        %v2891 = vunpack.c.l.s4 1983009808
        %v2892 = vunpack.c.0.s8 %v2891
        %v2893 = vlaneseq
        %v2894 = vshrl.u32 %v2893, 7
        %v2895 = vsub.s32 %v2892, %v2894
        %v2896 = vrot.slane %v2889, %v2895
        %v2897 = vcombine.low %v2896, %v2880
        %v2898 = vcombine.low %v2887, %v2896
        %vm2902 = vcmask 785408
        %v2904 = vsel %vm2902, %v2737, 0
        %v2907 = vsel %vm2902, %v2786, 0
        %v2910 = vsel %vm2902, %v2835, 0
        %2912 = vmatprep.subr.bf16.mxu0 0
        %2913 = vmatpush1.bf16.msra.mxu0 0
        %2914 = vmatprep.subr.bf16.mxu0 0
        %2915 = vmatpush1.bf16.msra.mxu0 0
        %2916 = vmatprep.subr.bf16.mxu0 0
        %2917 = vmatpush1.bf16.msra.mxu0 %v2865
        %2918 = vmatprep.subr.bf16.mxu0 0
        %2919 = vmatpush1.bf16.msra.mxu0 %v2864
        %2920 = vmatprep.subr.bf16.mxu0 0
        %2921 = vmatpush1.bf16.msra.mxu0 %v2863
        %2922 = vmatprep.subr.bf16.mxu0 0
        %2923 = vmatpush1.bf16.msra.mxu0 %v2862
        %2924 = vmatprep.subr.bf16.mxu0 0
        %2925 = vmatpush1.bf16.msra.mxu0 %v2861
        %2926 = vmatprep.subr.bf16.mxu0 0
        %2927 = vmatpush1.bf16.msra.mxu0 %v2860
        %2928 = vmatprep.subr.bf16.mxu0 0
        %2929 = vmatpush2.bf16.msra.mxu0 0
        %2930 = vmatprep.subr.bf16.mxu0 0
        %2931 = vmatpush2.bf16.msra.mxu0 0
        %2932 = vmatprep.subr.bf16.mxu0 0
        %2933 = vmatpush2.bf16.msra.mxu0 0
        %2934 = vmatprep.subr.bf16.mxu0 0
        %2935 = vmatpush2.bf16.msra.mxu0 0
        %2936 = vmatprep.subr.bf16.mxu0 0
        %2937 = vmatpush2.bf16.msra.mxu0 0
        %2938 = vmatprep.subr.bf16.mxu0 0
        %2939 = vmatpush2.bf16.msra.mxu0 0
        %2940 = vmatprep.subr.bf16.mxu0 0
        %2941 = vmatpush2.bf16.msra.mxu0 0
        %2942 = vmatprep.subr.bf16.mxu0 0
        %2943 = vmatpush2.bf16.msra.mxu0 0
        %2944 = vmatprep.mubr.bf16.mxu0 0
        %2945 = vmatmul.mubr.bf16.gmra.mxu0 %v2904
        %v2946 = vpop.f32.mrf.mxu0
        %v2947 = vadd.f32 %v2888, %v2946
        %v2948 = vpop.f32.mrf.mxu0
        %v2949 = vpop.f32.mrf.mxu0
        %v2950 = vadd.f32 %v2897, %v2949
        %v2951 = vpop.f32.mrf.mxu0
        %2952 = vmatprep.mubr.bf16.mxu0 0
        %2953 = vmatmul.mubr.bf16.gmra.mxu0 %v2907
        %v2954 = vpop.f32.mrf.mxu0
        %v2955 = vadd.f32 %v2898, %v2954
        %v2956 = vpop.f32.mrf.mxu0
        %v2957 = vpop.f32.mrf.mxu0
        %v2958 = vadd.f32 %v2888, %v2957
        %v2959 = vpop.f32.mrf.mxu0
        %2960 = vmatprep.mubr.bf16.mxu0 0
        %2961 = vmatmul.mubr.bf16.gmra.mxu0 %v2910
        %v2962 = vpop.f32.mrf.mxu0
        %v2963 = vadd.f32 %v2897, %v2962
        %v2964 = vpop.f32.mrf.mxu0
        %v2965 = vpop.f32.mrf.mxu0
        %v2966 = vadd.f32 %v2898, %v2965
        %v2967 = vpop.f32.mrf.mxu0
        %2968 = vdwg.mxu0
        %v2975 = vcombine.high %v2947, %v2947
        %v2977 = vunpack.c.l.s4 1983009808
        %v2978 = vunpack.c.0.s8 %v2977
        %v2979 = vlaneseq
        %v2980 = vshrl.u32 %v2979, 7
        %v2981 = vsub.s32 %v2978, %v2980
        %v2982 = vrot.slane %v2947, %v2981
        %v2984 = vunpack.c.l.s4 1983009808
        %v2985 = vunpack.c.0.s8 %v2984
        %v2986 = vlaneseq
        %v2987 = vshrl.u32 %v2986, 7
        %v2988 = vsub.s32 %v2985, %v2987
        %v2989 = vrot.slane %v2975, %v2988
        %v2990 = vcombine.high %v2982, %v2982
        %v2991 = vcombine.high %v2989, %v2989
        %v2992 = vcombine.high %v2950, %v2950
        %v2994 = vunpack.c.l.s4 1983009808
        %v2995 = vunpack.c.0.s8 %v2994
        %v2996 = vlaneseq
        %v2997 = vshrl.u32 %v2996, 7
        %v2998 = vsub.s32 %v2995, %v2997
        %v2999 = vrot.slane %v2950, %v2998
        %v3001 = vunpack.c.l.s4 1983009808
        %v3002 = vunpack.c.0.s8 %v3001
        %v3003 = vlaneseq
        %v3004 = vshrl.u32 %v3003, 7
        %v3005 = vsub.s32 %v3002, %v3004
        %v3006 = vrot.slane %v2992, %v3005
        %v3007 = vcombine.high %v2999, %v2999
        %v3008 = vcombine.high %v3006, %v3006
        %v3009 = vcombine.high %v2955, %v2955
        %v3011 = vunpack.c.l.s4 1983009808
        %v3012 = vunpack.c.0.s8 %v3011
        %v3013 = vlaneseq
        %v3014 = vshrl.u32 %v3013, 7
        %v3015 = vsub.s32 %v3012, %v3014
        %v3016 = vrot.slane %v2955, %v3015
        %v3018 = vunpack.c.l.s4 1983009808
        %v3019 = vunpack.c.0.s8 %v3018
        %v3020 = vlaneseq
        %v3021 = vshrl.u32 %v3020, 7
        %v3022 = vsub.s32 %v3019, %v3021
        %v3023 = vrot.slane %v3009, %v3022
        %v3024 = vcombine.high %v3016, %v3016
        %v3025 = vcombine.high %v3023, %v3023
        %v3026 = vcombine.high %v2958, %v2958
        %v3028 = vunpack.c.l.s4 1983009808
        %v3029 = vunpack.c.0.s8 %v3028
        %v3030 = vlaneseq
        %v3031 = vshrl.u32 %v3030, 7
        %v3032 = vsub.s32 %v3029, %v3031
        %v3033 = vrot.slane %v2958, %v3032
        %v3035 = vunpack.c.l.s4 1983009808
        %v3036 = vunpack.c.0.s8 %v3035
        %v3037 = vlaneseq
        %v3038 = vshrl.u32 %v3037, 7
        %v3039 = vsub.s32 %v3036, %v3038
        %v3040 = vrot.slane %v3026, %v3039
        %v3041 = vcombine.high %v3033, %v3033
        %v3042 = vcombine.high %v3040, %v3040
        %v3043 = vcombine.high %v2963, %v2963
        %v3045 = vunpack.c.l.s4 1983009808
        %v3046 = vunpack.c.0.s8 %v3045
        %v3047 = vlaneseq
        %v3048 = vshrl.u32 %v3047, 7
        %v3049 = vsub.s32 %v3046, %v3048
        %v3050 = vrot.slane %v2963, %v3049
        %v3052 = vunpack.c.l.s4 1983009808
        %v3053 = vunpack.c.0.s8 %v3052
        %v3054 = vlaneseq
        %v3055 = vshrl.u32 %v3054, 7
        %v3056 = vsub.s32 %v3053, %v3055
        %v3057 = vrot.slane %v3043, %v3056
        %v3058 = vcombine.high %v3050, %v3050
        %v3059 = vcombine.high %v3057, %v3057
        %v3060 = vcombine.high %v2966, %v2966
        %v3062 = vunpack.c.l.s4 1983009808
        %v3063 = vunpack.c.0.s8 %v3062
        %v3064 = vlaneseq
        %v3065 = vshrl.u32 %v3064, 7
        %v3066 = vsub.s32 %v3063, %v3065
        %v3067 = vrot.slane %v2966, %v3066
        %v3069 = vunpack.c.l.s4 1983009808
        %v3070 = vunpack.c.0.s8 %v3069
        %v3071 = vlaneseq
        %v3072 = vshrl.u32 %v3071, 7
        %v3073 = vsub.s32 %v3070, %v3072
        %v3074 = vrot.slane %v3060, %v3073
        %v3075 = vcombine.high %v3067, %v3067
        %v3076 = vcombine.high %v3074, %v3074
        %v3101 = vmax.f32 %v2982, 0.0
        %v3102 = vmax.f32 %v2990, 0.0
        %v3103 = vmax.f32 %v2989, 0.0
        %v3104 = vmax.f32 %v2991, 0.0
        %v3105 = vmax.f32 %v2999, 0.0
        %v3106 = vmax.f32 %v3007, 0.0
        %v3107 = vmax.f32 %v3006, 0.0
        %v3108 = vmax.f32 %v3008, 0.0
        %v3109 = vmax.f32 %v3016, 0.0
        %v3110 = vmax.f32 %v3024, 0.0
        %v3111 = vmax.f32 %v3023, 0.0
        %v3112 = vmax.f32 %v3025, 0.0
        %v3113 = vmax.f32 %v3033, 0.0
        %v3114 = vmax.f32 %v3041, 0.0
        %v3115 = vmax.f32 %v3040, 0.0
        %v3116 = vmax.f32 %v3042, 0.0
        %v3117 = vmax.f32 %v3050, 0.0
        %v3118 = vmax.f32 %v3058, 0.0
        %v3119 = vmax.f32 %v3057, 0.0
        %v3120 = vmax.f32 %v3059, 0.0
        %v3121 = vmax.f32 %v3067, 0.0
        %v3122 = vmax.f32 %v3075, 0.0
        %v3123 = vmax.f32 %v3074, 0.0
        %v3124 = vmax.f32 %v3076, 0.0
        %v3149 = vcombine.low %v3101, %v3102
        %v3151 = vunpack.c.l.s4 1983009808
        %v3152 = vunpack.c.0.s8 %v3151
        %v3153 = vlaneseq
        %v3154 = vshrl.u32 %v3153, 7
        %v3155 = vsub.s32 %v3152, %v3154
        %v3156 = vrot.slane %v3149, %v3155
        %v3158 = vunpack.c.l.s4 1983009808
        %v3159 = vunpack.c.0.s8 %v3158
        %v3160 = vlaneseq
        %v3161 = vshrl.u32 %v3160, 7
        %v3162 = vsub.s32 %v3159, %v3161
        %v3163 = vrot.slane %v3103, %v3162
        %v3164 = vcombine.low %v3156, %v3163
        %v3165 = vcombine.low %v3104, %v3105
        %v3167 = vunpack.c.l.s4 1983009808
        %v3168 = vunpack.c.0.s8 %v3167
        %v3169 = vlaneseq
        %v3170 = vshrl.u32 %v3169, 7
        %v3171 = vsub.s32 %v3168, %v3170
        %v3172 = vrot.slane %v3165, %v3171
        %v3174 = vunpack.c.l.s4 1983009808
        %v3175 = vunpack.c.0.s8 %v3174
        %v3176 = vlaneseq
        %v3177 = vshrl.u32 %v3176, 7
        %v3178 = vsub.s32 %v3175, %v3177
        %v3179 = vrot.slane %v3106, %v3178
        %v3180 = vcombine.low %v3172, %v3179
        %v3181 = vcombine.low %v3107, %v3108
        %v3183 = vunpack.c.l.s4 1983009808
        %v3184 = vunpack.c.0.s8 %v3183
        %v3185 = vlaneseq
        %v3186 = vshrl.u32 %v3185, 7
        %v3187 = vsub.s32 %v3184, %v3186
        %v3188 = vrot.slane %v3181, %v3187
        %v3190 = vunpack.c.l.s4 1983009808
        %v3191 = vunpack.c.0.s8 %v3190
        %v3192 = vlaneseq
        %v3193 = vshrl.u32 %v3192, 7
        %v3194 = vsub.s32 %v3191, %v3193
        %v3195 = vrot.slane %v3109, %v3194
        %v3196 = vcombine.low %v3188, %v3195
        %v3197 = vcombine.low %v3110, %v3111
        %v3199 = vunpack.c.l.s4 1983009808
        %v3200 = vunpack.c.0.s8 %v3199
        %v3201 = vlaneseq
        %v3202 = vshrl.u32 %v3201, 7
        %v3203 = vsub.s32 %v3200, %v3202
        %v3204 = vrot.slane %v3197, %v3203
        %v3206 = vunpack.c.l.s4 1983009808
        %v3207 = vunpack.c.0.s8 %v3206
        %v3208 = vlaneseq
        %v3209 = vshrl.u32 %v3208, 7
        %v3210 = vsub.s32 %v3207, %v3209
        %v3211 = vrot.slane %v3112, %v3210
        %v3212 = vcombine.low %v3204, %v3211
        %v3213 = vcombine.low %v3113, %v3114
        %v3215 = vunpack.c.l.s4 1983009808
        %v3216 = vunpack.c.0.s8 %v3215
        %v3217 = vlaneseq
        %v3218 = vshrl.u32 %v3217, 7
        %v3219 = vsub.s32 %v3216, %v3218
        %v3220 = vrot.slane %v3213, %v3219
        %v3222 = vunpack.c.l.s4 1983009808
        %v3223 = vunpack.c.0.s8 %v3222
        %v3224 = vlaneseq
        %v3225 = vshrl.u32 %v3224, 7
        %v3226 = vsub.s32 %v3223, %v3225
        %v3227 = vrot.slane %v3115, %v3226
        %v3228 = vcombine.low %v3220, %v3227
        %v3229 = vcombine.low %v3116, %v3117
        %v3231 = vunpack.c.l.s4 1983009808
        %v3232 = vunpack.c.0.s8 %v3231
        %v3233 = vlaneseq
        %v3234 = vshrl.u32 %v3233, 7
        %v3235 = vsub.s32 %v3232, %v3234
        %v3236 = vrot.slane %v3229, %v3235
        %v3238 = vunpack.c.l.s4 1983009808
        %v3239 = vunpack.c.0.s8 %v3238
        %v3240 = vlaneseq
        %v3241 = vshrl.u32 %v3240, 7
        %v3242 = vsub.s32 %v3239, %v3241
        %v3243 = vrot.slane %v3118, %v3242
        %v3244 = vcombine.low %v3236, %v3243
        %v3245 = vcombine.low %v3119, %v3120
        %v3247 = vunpack.c.l.s4 1983009808
        %v3248 = vunpack.c.0.s8 %v3247
        %v3249 = vlaneseq
        %v3250 = vshrl.u32 %v3249, 7
        %v3251 = vsub.s32 %v3248, %v3250
        %v3252 = vrot.slane %v3245, %v3251
        %v3254 = vunpack.c.l.s4 1983009808
        %v3255 = vunpack.c.0.s8 %v3254
        %v3256 = vlaneseq
        %v3257 = vshrl.u32 %v3256, 7
        %v3258 = vsub.s32 %v3255, %v3257
        %v3259 = vrot.slane %v3121, %v3258
        %v3260 = vcombine.low %v3252, %v3259
        %v3261 = vcombine.low %v3122, %v3123
        %v3263 = vunpack.c.l.s4 1983009808
        %v3264 = vunpack.c.0.s8 %v3263
        %v3265 = vlaneseq
        %v3266 = vshrl.u32 %v3265, 7
        %v3267 = vsub.s32 %v3264, %v3266
        %v3268 = vrot.slane %v3261, %v3267
        %v3270 = vunpack.c.l.s4 1983009808
        %v3271 = vunpack.c.0.s8 %v3270
        %v3272 = vlaneseq
        %v3273 = vshrl.u32 %v3272, 7
        %v3274 = vsub.s32 %v3271, %v3273
        %v3275 = vrot.slane %v3124, %v3274
        %v3276 = vcombine.low %v3268, %v3275
        %vm3285 = vcmask 259072
        %v3286 = vsel %vm3285, %v3164, -inf
        %v3287 = vrot.slane %v3286, 4
        %v3288 = vmax.f32 %v3286, %v3287
        %v3289 = vrot.slane %v3288, 2
        %v3290 = vmax.f32 %v3288, %v3289
        %v3291 = vrot.slane %v3290, 1
        %v3292 = vmax.f32 %v3290, %v3291
        %v3293 = vsel %vm3285, %v3180, -inf
        %v3294 = vrot.slane %v3293, 4
        %v3295 = vmax.f32 %v3293, %v3294
        %v3296 = vrot.slane %v3295, 2
        %v3297 = vmax.f32 %v3295, %v3296
        %v3298 = vrot.slane %v3297, 1
        %v3299 = vmax.f32 %v3297, %v3298
        %v3300 = vsel %vm3285, %v3196, -inf
        %v3301 = vrot.slane %v3300, 4
        %v3302 = vmax.f32 %v3300, %v3301
        %v3303 = vrot.slane %v3302, 2
        %v3304 = vmax.f32 %v3302, %v3303
        %v3305 = vrot.slane %v3304, 1
        %v3306 = vmax.f32 %v3304, %v3305
        %v3307 = vsel %vm3285, %v3212, -inf
        %v3308 = vrot.slane %v3307, 4
        %v3309 = vmax.f32 %v3307, %v3308
        %v3310 = vrot.slane %v3309, 2
        %v3311 = vmax.f32 %v3309, %v3310
        %v3312 = vrot.slane %v3311, 1
        %v3313 = vmax.f32 %v3311, %v3312
        %v3314 = vsel %vm3285, %v3228, -inf
        %v3315 = vrot.slane %v3314, 4
        %v3316 = vmax.f32 %v3314, %v3315
        %v3317 = vrot.slane %v3316, 2
        %v3318 = vmax.f32 %v3316, %v3317
        %v3319 = vrot.slane %v3318, 1
        %v3320 = vmax.f32 %v3318, %v3319
        %v3321 = vsel %vm3285, %v3244, -inf
        %v3322 = vrot.slane %v3321, 4
        %v3323 = vmax.f32 %v3321, %v3322
        %v3324 = vrot.slane %v3323, 2
        %v3325 = vmax.f32 %v3323, %v3324
        %v3326 = vrot.slane %v3325, 1
        %v3327 = vmax.f32 %v3325, %v3326
        %v3328 = vsel %vm3285, %v3260, -inf
        %v3329 = vrot.slane %v3328, 4
        %v3330 = vmax.f32 %v3328, %v3329
        %v3331 = vrot.slane %v3330, 2
        %v3332 = vmax.f32 %v3330, %v3331
        %v3333 = vrot.slane %v3332, 1
        %v3334 = vmax.f32 %v3332, %v3333
        %v3335 = vsel %vm3285, %v3276, -inf
        %v3336 = vrot.slane %v3335, 4
        %v3337 = vmax.f32 %v3335, %v3336
        %v3338 = vrot.slane %v3337, 2
        %v3339 = vmax.f32 %v3337, %v3338
        %v3340 = vrot.slane %v3339, 1
        %v3341 = vmax.f32 %v3339, %v3340
        %v3342 = vmax.f32 %v2407, %v3292
        %v3343 = vmax.f32 %v2408, %v3299
        %v3344 = vmax.f32 %v2409, %v3306
        %v3345 = vmax.f32 %v2410, %v3313
        %v3346 = vmax.f32 %v2411, %v3320
        %v3347 = vmax.f32 %v2412, %v3327
        %v3348 = vmax.f32 %v2413, %v3334
        %v3349 = vmax.f32 %v2414, %v3341
        %v3350 = vrot.slane %v278, 3
        %v3351 = vrot.slane %v279, 3
        %v3352 = vrot.slane %v280, 3
        %v3353 = vrot.slane %v281, 3
        %v3354 = vrot.slane %v282, 3
        %v3355 = vrot.slane %v283, 3
        %v3356 = vrot.slane %v284, 3
        %v3357 = vrot.slane %v285, 3
        %3358 = vrot.lane.b32.xlu0 %v3350, 96
        %v3359 = vpop.permute.xlu0 %3358
        %3360 = vrot.lane.b32.xlu0 %v3351, 96
        %v3361 = vpop.permute.xlu0 %3360
        %3362 = vrot.lane.b32.xlu0 %v3352, 96
        %v3363 = vpop.permute.xlu0 %3362
        %3364 = vrot.lane.b32.xlu0 %v3353, 96
        %v3365 = vpop.permute.xlu0 %3364
        %3366 = vrot.lane.b32.xlu0 %v3354, 96
        %v3367 = vpop.permute.xlu0 %3366
        %3368 = vrot.lane.b32.xlu0 %v3355, 96
        %v3369 = vpop.permute.xlu0 %3368
        %3370 = vrot.lane.b32.xlu0 %v3356, 96
        %v3371 = vpop.permute.xlu0 %3370
        %3372 = vrot.lane.b32.xlu0 %v3357, 96
        %v3373 = vpop.permute.xlu0 %3372
        %v3382 = vsel %vm2902, %v2447, %v3359
        %v3383 = vsel %vm2902, %v2448, %v3361
        %v3384 = vsel %vm2902, %v2449, %v3363
        %v3385 = vsel %vm2902, %v2450, %v3365
        %v3386 = vsel %vm2902, %v2451, %v3367
        %v3387 = vsel %vm2902, %v2452, %v3369
        %v3388 = vsel %vm2902, %v2453, %v3371
        %v3389 = vsel %vm2902, %v2454, %v3373
        %v3390 = vpack.c.bf16 %v3382, %v3382
        %v3391 = vpack.c.bf16 %v3383, %v3383
        %v3392 = vpack.c.bf16 %v3384, %v3384
        %v3393 = vpack.c.bf16 %v3385, %v3385
        %v3394 = vpack.c.bf16 %v3386, %v3386
        %v3395 = vpack.c.bf16 %v3387, %v3387
        %v3396 = vpack.c.bf16 %v3388, %v3388
        %v3397 = vpack.c.bf16 %v3389, %v3389
        %v3398 = vld [vmem:[%s2 + $0x60] sm:$0xf]
        %v3399 = vld [vmem:[%s2 + $0x64] sm:$0xf]
        %v3400 = vld [vmem:[%s2 + $0x68] sm:$0xf]
        %v3401 = vld [vmem:[%s2 + $0x6c] sm:$0xf]
        %v3402 = vld [vmem:[%s2 + $0x70] sm:$0xf]
        %v3403 = vld [vmem:[%s2 + $0x74] sm:$0xf]
        %v3404 = vld [vmem:[%s2 + $0x78] sm:$0xf]
        %v3405 = vld [vmem:[%s2 + $0x7c] sm:$0xf]
        %v3406 = vld [vmem:[%s2 + $0x80] sm:$0xf]
        %v3407 = vld [vmem:[%s2 + $0x84] sm:$0xf]
        %v3408 = vld [vmem:[%s2 + $0x88] sm:$0xf]
        %v3409 = vld [vmem:[%s2 + $0x8c] sm:$0xf]
        %v3410 = vld [vmem:[%s2 + $0x90] sm:$0xf]
        %v3411 = vld [vmem:[%s2 + $0x94] sm:$0xf]
        %v3412 = vld [vmem:[%s2 + $0x98] sm:$0xf]
        %v3413 = vld [vmem:[%s2 + $0x9c] sm:$0xf]
        %v3414 = vld [vmem:[%s3 + $0x3] sm:$0x1]
        %v3415 = vlaneseq
        %v3416 = vshrl.u32 %v3415, 7
        %v3417 = vsub.s32 0, %v3416
        %v3418 = vrot.slane %v3414, %v3417
        %v3428 = vunpack.c.l.s4 1966171168
        %v3429 = vunpack.c.0.s8 %v3428
        %v3430 = vlaneseq
        %v3431 = vshrl.u32 %v3430, 7
        %v3432 = vsub.s32 %v3429, %v3431
        %v3433 = vrot.slane %v3390, %v3432
        %v3434 = vcombine.high %v3433, %v3433
        %v3436 = vunpack.c.l.s4 1966171168
        %v3437 = vunpack.c.0.s8 %v3436
        %v3438 = vlaneseq
        %v3439 = vshrl.u32 %v3438, 7
        %v3440 = vsub.s32 %v3437, %v3439
        %v3441 = vrot.slane %v3433, %v3440
        %v3443 = vunpack.c.l.s4 1966171168
        %v3444 = vunpack.c.0.s8 %v3443
        %v3445 = vlaneseq
        %v3446 = vshrl.u32 %v3445, 7
        %v3447 = vsub.s32 %v3444, %v3446
        %v3448 = vrot.slane %v3434, %v3447
        %v3449 = vcombine.high %v3441, %v3441
        %v3451 = vunpack.c.l.s4 1966171168
        %v3452 = vunpack.c.0.s8 %v3451
        %v3453 = vlaneseq
        %v3454 = vshrl.u32 %v3453, 7
        %v3455 = vsub.s32 %v3452, %v3454
        %v3456 = vrot.slane %v3391, %v3455
        %v3457 = vcombine.high %v3456, %v3456
        %v3459 = vunpack.c.l.s4 1966171168
        %v3460 = vunpack.c.0.s8 %v3459
        %v3461 = vlaneseq
        %v3462 = vshrl.u32 %v3461, 7
        %v3463 = vsub.s32 %v3460, %v3462
        %v3464 = vrot.slane %v3456, %v3463
        %v3466 = vunpack.c.l.s4 1966171168
        %v3467 = vunpack.c.0.s8 %v3466
        %v3468 = vlaneseq
        %v3469 = vshrl.u32 %v3468, 7
        %v3470 = vsub.s32 %v3467, %v3469
        %v3471 = vrot.slane %v3457, %v3470
        %v3472 = vcombine.high %v3464, %v3464
        %v3474 = vunpack.c.l.s4 1966171168
        %v3475 = vunpack.c.0.s8 %v3474
        %v3476 = vlaneseq
        %v3477 = vshrl.u32 %v3476, 7
        %v3478 = vsub.s32 %v3475, %v3477
        %v3479 = vrot.slane %v3392, %v3478
        %v3480 = vcombine.high %v3479, %v3479
        %v3482 = vunpack.c.l.s4 1966171168
        %v3483 = vunpack.c.0.s8 %v3482
        %v3484 = vlaneseq
        %v3485 = vshrl.u32 %v3484, 7
        %v3486 = vsub.s32 %v3483, %v3485
        %v3487 = vrot.slane %v3479, %v3486
        %v3489 = vunpack.c.l.s4 1966171168
        %v3490 = vunpack.c.0.s8 %v3489
        %v3491 = vlaneseq
        %v3492 = vshrl.u32 %v3491, 7
        %v3493 = vsub.s32 %v3490, %v3492
        %v3494 = vrot.slane %v3480, %v3493
        %v3495 = vcombine.high %v3487, %v3487
        %v3497 = vunpack.c.l.s4 1966171168
        %v3498 = vunpack.c.0.s8 %v3497
        %v3499 = vlaneseq
        %v3500 = vshrl.u32 %v3499, 7
        %v3501 = vsub.s32 %v3498, %v3500
        %v3502 = vrot.slane %v3393, %v3501
        %v3503 = vcombine.high %v3502, %v3502
        %v3505 = vunpack.c.l.s4 1966171168
        %v3506 = vunpack.c.0.s8 %v3505
        %v3507 = vlaneseq
        %v3508 = vshrl.u32 %v3507, 7
        %v3509 = vsub.s32 %v3506, %v3508
        %v3510 = vrot.slane %v3502, %v3509
        %v3512 = vunpack.c.l.s4 1966171168
        %v3513 = vunpack.c.0.s8 %v3512
        %v3514 = vlaneseq
        %v3515 = vshrl.u32 %v3514, 7
        %v3516 = vsub.s32 %v3513, %v3515
        %v3517 = vrot.slane %v3503, %v3516
        %v3518 = vcombine.high %v3510, %v3510
        %v3520 = vunpack.c.l.s4 1966171168
        %v3521 = vunpack.c.0.s8 %v3520
        %v3522 = vlaneseq
        %v3523 = vshrl.u32 %v3522, 7
        %v3524 = vsub.s32 %v3521, %v3523
        %v3525 = vrot.slane %v3394, %v3524
        %v3526 = vcombine.high %v3525, %v3525
        %v3528 = vunpack.c.l.s4 1966171168
        %v3529 = vunpack.c.0.s8 %v3528
        %v3530 = vlaneseq
        %v3531 = vshrl.u32 %v3530, 7
        %v3532 = vsub.s32 %v3529, %v3531
        %v3533 = vrot.slane %v3525, %v3532
        %v3535 = vunpack.c.l.s4 1966171168
        %v3536 = vunpack.c.0.s8 %v3535
        %v3537 = vlaneseq
        %v3538 = vshrl.u32 %v3537, 7
        %v3539 = vsub.s32 %v3536, %v3538
        %v3540 = vrot.slane %v3526, %v3539
        %v3541 = vcombine.high %v3533, %v3533
        %v3543 = vunpack.c.l.s4 1966171168
        %v3544 = vunpack.c.0.s8 %v3543
        %v3545 = vlaneseq
        %v3546 = vshrl.u32 %v3545, 7
        %v3547 = vsub.s32 %v3544, %v3546
        %v3548 = vrot.slane %v3395, %v3547
        %v3549 = vcombine.high %v3548, %v3548
        %v3551 = vunpack.c.l.s4 1966171168
        %v3552 = vunpack.c.0.s8 %v3551
        %v3553 = vlaneseq
        %v3554 = vshrl.u32 %v3553, 7
        %v3555 = vsub.s32 %v3552, %v3554
        %v3556 = vrot.slane %v3548, %v3555
        %v3558 = vunpack.c.l.s4 1966171168
        %v3559 = vunpack.c.0.s8 %v3558
        %v3560 = vlaneseq
        %v3561 = vshrl.u32 %v3560, 7
        %v3562 = vsub.s32 %v3559, %v3561
        %v3563 = vrot.slane %v3549, %v3562
        %v3564 = vcombine.high %v3556, %v3556
        %v3566 = vunpack.c.l.s4 1966171168
        %v3567 = vunpack.c.0.s8 %v3566
        %v3568 = vlaneseq
        %v3569 = vshrl.u32 %v3568, 7
        %v3570 = vsub.s32 %v3567, %v3569
        %v3571 = vrot.slane %v3396, %v3570
        %v3572 = vcombine.high %v3571, %v3571
        %v3574 = vunpack.c.l.s4 1966171168
        %v3575 = vunpack.c.0.s8 %v3574
        %v3576 = vlaneseq
        %v3577 = vshrl.u32 %v3576, 7
        %v3578 = vsub.s32 %v3575, %v3577
        %v3579 = vrot.slane %v3571, %v3578
        %v3581 = vunpack.c.l.s4 1966171168
        %v3582 = vunpack.c.0.s8 %v3581
        %v3583 = vlaneseq
        %v3584 = vshrl.u32 %v3583, 7
        %v3585 = vsub.s32 %v3582, %v3584
        %v3586 = vrot.slane %v3572, %v3585
        %v3587 = vcombine.high %v3579, %v3579
        %v3589 = vunpack.c.l.s4 1966171168
        %v3590 = vunpack.c.0.s8 %v3589
        %v3591 = vlaneseq
        %v3592 = vshrl.u32 %v3591, 7
        %v3593 = vsub.s32 %v3590, %v3592
        %v3594 = vrot.slane %v3397, %v3593
        %v3595 = vcombine.high %v3594, %v3594
        %v3597 = vunpack.c.l.s4 1966171168
        %v3598 = vunpack.c.0.s8 %v3597
        %v3599 = vlaneseq
        %v3600 = vshrl.u32 %v3599, 7
        %v3601 = vsub.s32 %v3598, %v3600
        %v3602 = vrot.slane %v3594, %v3601
        %v3604 = vunpack.c.l.s4 1966171168
        %v3605 = vunpack.c.0.s8 %v3604
        %v3606 = vlaneseq
        %v3607 = vshrl.u32 %v3606, 7
        %v3608 = vsub.s32 %v3605, %v3607
        %v3609 = vrot.slane %v3595, %v3608
        %v3610 = vcombine.high %v3602, %v3602
        %v3611 = vunpack.i.l.s16 %v3441
        %v3612 = vunpack.i.h.s16 %v3441
        %v3613 = vunpack.i.l.s16 %v3448
        %v3614 = vunpack.i.h.s16 %v3448
        %v3615 = vunpack.i.l.s16 %v3449
        %v3616 = vunpack.i.l.s16 %v3464
        %v3617 = vunpack.i.h.s16 %v3464
        %v3618 = vunpack.i.l.s16 %v3471
        %v3619 = vunpack.i.h.s16 %v3471
        %v3620 = vunpack.i.l.s16 %v3472
        %v3621 = vunpack.i.l.s16 %v3487
        %v3622 = vunpack.i.h.s16 %v3487
        %v3623 = vunpack.i.l.s16 %v3494
        %v3624 = vunpack.i.h.s16 %v3494
        %v3625 = vunpack.i.l.s16 %v3495
        %v3626 = vunpack.i.l.s16 %v3510
        %v3627 = vunpack.i.h.s16 %v3510
        %v3628 = vunpack.i.l.s16 %v3517
        %v3629 = vunpack.i.h.s16 %v3517
        %v3630 = vunpack.i.l.s16 %v3518
        %v3631 = vunpack.i.l.s16 %v3533
        %v3632 = vunpack.i.h.s16 %v3533
        %v3633 = vunpack.i.l.s16 %v3540
        %v3634 = vunpack.i.h.s16 %v3540
        %v3635 = vunpack.i.l.s16 %v3541
        %v3636 = vunpack.i.l.s16 %v3556
        %v3637 = vunpack.i.h.s16 %v3556
        %v3638 = vunpack.i.l.s16 %v3563
        %v3639 = vunpack.i.h.s16 %v3563
        %v3640 = vunpack.i.l.s16 %v3564
        %v3641 = vunpack.i.l.s16 %v3579
        %v3642 = vunpack.i.h.s16 %v3579
        %v3643 = vunpack.i.l.s16 %v3586
        %v3644 = vunpack.i.h.s16 %v3586
        %v3645 = vunpack.i.l.s16 %v3587
        %v3646 = vunpack.i.l.s16 %v3602
        %v3647 = vunpack.i.h.s16 %v3602
        %v3648 = vunpack.i.l.s16 %v3609
        %v3649 = vunpack.i.h.s16 %v3609
        %v3650 = vunpack.i.l.s16 %v3610
        %v3652 = vcombine.high %v3418, %v3418
        %v3654 = vunpack.c.l.s4 1966171168
        %v3655 = vunpack.c.0.s8 %v3654
        %v3656 = vlaneseq
        %v3657 = vshrl.u32 %v3656, 7
        %v3658 = vsub.s32 %v3655, %v3657
        %v3659 = vrot.slane %v3418, %v3658
        %v3661 = vunpack.c.l.s4 1966171168
        %v3662 = vunpack.c.0.s8 %v3661
        %v3663 = vlaneseq
        %v3664 = vshrl.u32 %v3663, 7
        %v3665 = vsub.s32 %v3662, %v3664
        %v3666 = vrot.slane %v3652, %v3665
        %v3667 = vcombine.high %v3659, %v3659
        %v3669 = vunpack.c.l.s4 1966171168
        %v3670 = vunpack.c.0.s8 %v3669
        %v3671 = vlaneseq
        %v3672 = vshrl.u32 %v3671, 7
        %v3673 = vsub.s32 %v3670, %v3672
        %v3674 = vrot.slane %v3659, %v3673
        %v3676 = vunpack.c.l.s4 1966171168
        %v3677 = vunpack.c.0.s8 %v3676
        %v3678 = vlaneseq
        %v3679 = vshrl.u32 %v3678, 7
        %v3680 = vsub.s32 %v3677, %v3679
        %v3681 = vrot.slane %v3666, %v3680
        %v3683 = vunpack.c.l.s4 1966171168
        %v3684 = vunpack.c.0.s8 %v3683
        %v3685 = vlaneseq
        %v3686 = vshrl.u32 %v3685, 7
        %v3687 = vsub.s32 %v3684, %v3686
        %v3688 = vrot.slane %v3667, %v3687
        %v3689 = vcombine.high %v3674, %v3674
        %v3690 = vcombine.high %v3688, %v3688
        %v3691 = vpack.i.b16 %v3612, %v3611
        %v3692 = vpack.i.b16 %v3614, %v3613
        %v3693 = vpack.i.b16 %v3616, %v3615
        %v3694 = vpack.i.b16 %v3618, %v3617
        %v3695 = vpack.i.b16 %v3620, %v3619
        %v3696 = vpack.i.b16 %v3622, %v3621
        %v3697 = vpack.i.b16 %v3624, %v3623
        %v3698 = vpack.i.b16 %v3626, %v3625
        %v3699 = vpack.i.b16 %v3628, %v3627
        %v3700 = vpack.i.b16 %v3630, %v3629
        %v3701 = vpack.i.b16 %v3632, %v3631
        %v3702 = vpack.i.b16 %v3634, %v3633
        %v3703 = vpack.i.b16 %v3636, %v3635
        %v3704 = vpack.i.b16 %v3638, %v3637
        %v3705 = vpack.i.b16 %v3640, %v3639
        %v3706 = vpack.i.b16 %v3642, %v3641
        %v3707 = vpack.i.b16 %v3644, %v3643
        %v3708 = vpack.i.b16 %v3646, %v3645
        %v3709 = vpack.i.b16 %v3648, %v3647
        %v3710 = vpack.i.b16 %v3650, %v3649
        %v3711 = vcombine.low %v3691, %v3692
        %v3712 = vcombine.low %v3693, %v3694
        %v3713 = vcombine.low %v3695, %v3696
        %v3714 = vcombine.low %v3697, %v3698
        %v3716 = vunpack.c.l.s4 1966171168
        %v3717 = vunpack.c.0.s8 %v3716
        %v3718 = vlaneseq
        %v3719 = vshrl.u32 %v3718, 7
        %v3720 = vsub.s32 %v3717, %v3719
        %v3721 = vrot.slane %v3711, %v3720
        %v3723 = vunpack.c.l.s4 1966171168
        %v3724 = vunpack.c.0.s8 %v3723
        %v3725 = vlaneseq
        %v3726 = vshrl.u32 %v3725, 7
        %v3727 = vsub.s32 %v3724, %v3726
        %v3728 = vrot.slane %v3712, %v3727
        %v3730 = vunpack.c.l.s4 1966171168
        %v3731 = vunpack.c.0.s8 %v3730
        %v3732 = vlaneseq
        %v3733 = vshrl.u32 %v3732, 7
        %v3734 = vsub.s32 %v3731, %v3733
        %v3735 = vrot.slane %v3713, %v3734
        %v3737 = vunpack.c.l.s4 1966171168
        %v3738 = vunpack.c.0.s8 %v3737
        %v3739 = vlaneseq
        %v3740 = vshrl.u32 %v3739, 7
        %v3741 = vsub.s32 %v3738, %v3740
        %v3742 = vrot.slane %v3714, %v3741
        %v3743 = vcombine.low %v3721, %v3728
        %v3744 = vcombine.low %v3735, %v3742
        %v3746 = vunpack.c.l.s4 1966171168
        %v3747 = vunpack.c.0.s8 %v3746
        %v3748 = vlaneseq
        %v3749 = vshrl.u32 %v3748, 7
        %v3750 = vsub.s32 %v3747, %v3749
        %v3751 = vrot.slane %v3743, %v3750
        %v3753 = vunpack.c.l.s4 1966171168
        %v3754 = vunpack.c.0.s8 %v3753
        %v3755 = vlaneseq
        %v3756 = vshrl.u32 %v3755, 7
        %v3757 = vsub.s32 %v3754, %v3756
        %v3758 = vrot.slane %v3744, %v3757
        %v3759 = vcombine.low %v3751, %v3758
        %v3760 = vcombine.low %v3699, %v3700
        %v3761 = vcombine.low %v3701, %v3702
        %v3762 = vcombine.low %v3703, %v3704
        %v3763 = vcombine.low %v3705, %v3706
        %v3765 = vunpack.c.l.s4 1966171168
        %v3766 = vunpack.c.0.s8 %v3765
        %v3767 = vlaneseq
        %v3768 = vshrl.u32 %v3767, 7
        %v3769 = vsub.s32 %v3766, %v3768
        %v3770 = vrot.slane %v3760, %v3769
        %v3772 = vunpack.c.l.s4 1966171168
        %v3773 = vunpack.c.0.s8 %v3772
        %v3774 = vlaneseq
        %v3775 = vshrl.u32 %v3774, 7
        %v3776 = vsub.s32 %v3773, %v3775
        %v3777 = vrot.slane %v3761, %v3776
        %v3779 = vunpack.c.l.s4 1966171168
        %v3780 = vunpack.c.0.s8 %v3779
        %v3781 = vlaneseq
        %v3782 = vshrl.u32 %v3781, 7
        %v3783 = vsub.s32 %v3780, %v3782
        %v3784 = vrot.slane %v3762, %v3783
        %v3786 = vunpack.c.l.s4 1966171168
        %v3787 = vunpack.c.0.s8 %v3786
        %v3788 = vlaneseq
        %v3789 = vshrl.u32 %v3788, 7
        %v3790 = vsub.s32 %v3787, %v3789
        %v3791 = vrot.slane %v3763, %v3790
        %v3792 = vcombine.low %v3770, %v3777
        %v3793 = vcombine.low %v3784, %v3791
        %v3795 = vunpack.c.l.s4 1966171168
        %v3796 = vunpack.c.0.s8 %v3795
        %v3797 = vlaneseq
        %v3798 = vshrl.u32 %v3797, 7
        %v3799 = vsub.s32 %v3796, %v3798
        %v3800 = vrot.slane %v3792, %v3799
        %v3802 = vunpack.c.l.s4 1966171168
        %v3803 = vunpack.c.0.s8 %v3802
        %v3804 = vlaneseq
        %v3805 = vshrl.u32 %v3804, 7
        %v3806 = vsub.s32 %v3803, %v3805
        %v3807 = vrot.slane %v3793, %v3806
        %v3808 = vcombine.low %v3800, %v3807
        %v3809 = vcombine.low %v3707, %v3708
        %v3810 = vcombine.low %v3709, %v3710
        %v3812 = vunpack.c.l.s4 1966171168
        %v3813 = vunpack.c.0.s8 %v3812
        %v3814 = vlaneseq
        %v3815 = vshrl.u32 %v3814, 7
        %v3816 = vsub.s32 %v3813, %v3815
        %v3817 = vrot.slane %v3809, %v3816
        %v3819 = vunpack.c.l.s4 1966171168
        %v3820 = vunpack.c.0.s8 %v3819
        %v3821 = vlaneseq
        %v3822 = vshrl.u32 %v3821, 7
        %v3823 = vsub.s32 %v3820, %v3822
        %v3824 = vrot.slane %v3810, %v3823
        %v3825 = vcombine.low %v3817, %v3824
        %v3827 = vunpack.c.l.s4 1966171168
        %v3828 = vunpack.c.0.s8 %v3827
        %v3829 = vlaneseq
        %v3830 = vshrl.u32 %v3829, 7
        %v3831 = vsub.s32 %v3828, %v3830
        %v3832 = vrot.slane %v3825, %v3831
        %v3852 = vunpack.c.l.b16 %v3398
        %v3853 = vunpack.c.l.b16 %v3399
        %v3854 = vunpack.c.l.b16 %v3400
        %v3855 = vunpack.c.l.b16 %v3401
        %v3856 = vunpack.c.l.b16 %v3402
        %v3857 = vunpack.c.l.b16 %v3403
        %v3858 = vunpack.c.l.b16 %v3404
        %v3859 = vunpack.c.l.b16 %v3405
        %v3860 = vunpack.c.l.b16 %v3406
        %v3861 = vunpack.c.l.b16 %v3407
        %v3862 = vunpack.c.l.b16 %v3408
        %v3863 = vunpack.c.l.b16 %v3409
        %v3864 = vunpack.c.l.b16 %v3410
        %v3865 = vunpack.c.l.b16 %v3411
        %v3866 = vunpack.c.l.b16 %v3412
        %v3867 = vunpack.c.l.b16 %v3413
        %v3868 = vpack.c.b16 %v3853, %v3852
        %v3869 = vpack.c.b16 %v3855, %v3854
        %v3870 = vpack.c.b16 %v3857, %v3856
        %v3871 = vpack.c.b16 %v3859, %v3858
        %v3872 = vpack.c.b16 %v3861, %v3860
        %v3873 = vpack.c.b16 %v3863, %v3862
        %v3874 = vpack.c.b16 %v3865, %v3864
        %v3875 = vpack.c.b16 %v3867, %v3866
        %v3884 = vcombine.low %v3674, %v3688
        %v3885 = vcombine.low %v3689, %v3690
        %v3886 = vcombine.low %v3681, %v3674
        %v3887 = vcombine.low %v3688, %v3689
        %v3889 = vunpack.c.l.s4 1966171168
        %v3890 = vunpack.c.0.s8 %v3889
        %v3891 = vlaneseq
        %v3892 = vshrl.u32 %v3891, 7
        %v3893 = vsub.s32 %v3890, %v3892
        %v3894 = vrot.slane %v3884, %v3893
        %v3896 = vunpack.c.l.s4 1966171168
        %v3897 = vunpack.c.0.s8 %v3896
        %v3898 = vlaneseq
        %v3899 = vshrl.u32 %v3898, 7
        %v3900 = vsub.s32 %v3897, %v3899
        %v3901 = vrot.slane %v3885, %v3900
        %v3903 = vunpack.c.l.s4 1966171168
        %v3904 = vunpack.c.0.s8 %v3903
        %v3905 = vlaneseq
        %v3906 = vshrl.u32 %v3905, 7
        %v3907 = vsub.s32 %v3904, %v3906
        %v3908 = vrot.slane %v3886, %v3907
        %v3910 = vunpack.c.l.s4 1966171168
        %v3911 = vunpack.c.0.s8 %v3910
        %v3912 = vlaneseq
        %v3913 = vshrl.u32 %v3912, 7
        %v3914 = vsub.s32 %v3911, %v3913
        %v3915 = vrot.slane %v3887, %v3914
        %v3916 = vcombine.low %v3894, %v3901
        %v3917 = vcombine.low %v3908, %v3915
        %v3919 = vunpack.c.l.s4 1966171168
        %v3920 = vunpack.c.0.s8 %v3919
        %v3921 = vlaneseq
        %v3922 = vshrl.u32 %v3921, 7
        %v3923 = vsub.s32 %v3920, %v3922
        %v3924 = vrot.slane %v3916, %v3923
        %v3926 = vunpack.c.l.s4 1966171168
        %v3927 = vunpack.c.0.s8 %v3926
        %v3928 = vlaneseq
        %v3929 = vshrl.u32 %v3928, 7
        %v3930 = vsub.s32 %v3927, %v3929
        %v3931 = vrot.slane %v3917, %v3930
        %v3932 = vcombine.low %v3924, %v3931
        %v3933 = vcombine.low %v3690, %v3681
        %v3935 = vunpack.c.l.s4 1966171168
        %v3936 = vunpack.c.0.s8 %v3935
        %v3937 = vlaneseq
        %v3938 = vshrl.u32 %v3937, 7
        %v3939 = vsub.s32 %v3936, %v3938
        %v3940 = vrot.slane %v3933, %v3939
        %v3941 = vcombine.low %v3940, %v3894
        %v3942 = vcombine.low %v3901, %v3908
        %v3944 = vunpack.c.l.s4 1966171168
        %v3945 = vunpack.c.0.s8 %v3944
        %v3946 = vlaneseq
        %v3947 = vshrl.u32 %v3946, 7
        %v3948 = vsub.s32 %v3945, %v3947
        %v3949 = vrot.slane %v3941, %v3948
        %v3951 = vunpack.c.l.s4 1966171168
        %v3952 = vunpack.c.0.s8 %v3951
        %v3953 = vlaneseq
        %v3954 = vshrl.u32 %v3953, 7
        %v3955 = vsub.s32 %v3952, %v3954
        %v3956 = vrot.slane %v3942, %v3955
        %v3957 = vcombine.low %v3949, %v3956
        %v3958 = vcombine.low %v3915, %v3940
        %v3960 = vunpack.c.l.s4 1966171168
        %v3961 = vunpack.c.0.s8 %v3960
        %v3962 = vlaneseq
        %v3963 = vshrl.u32 %v3962, 7
        %v3964 = vsub.s32 %v3961, %v3963
        %v3965 = vrot.slane %v3958, %v3964
        %v3966 = vcombine.low %v3965, %v3924
        %v3967 = vcombine.low %v3931, %v3949
        %v3968 = vcombine.low %v3956, %v3965
        %3974 = vmatprep.subr.bf16.mxu0 0
        %3975 = vmatpush1.bf16.msra.mxu0 %v3875
        %3976 = vmatprep.subr.bf16.mxu0 0
        %3977 = vmatpush1.bf16.msra.mxu0 %v3874
        %3978 = vmatprep.subr.bf16.mxu0 0
        %3979 = vmatpush1.bf16.msra.mxu0 %v3873
        %3980 = vmatprep.subr.bf16.mxu0 0
        %3981 = vmatpush1.bf16.msra.mxu0 %v3872
        %3982 = vmatprep.subr.bf16.mxu0 0
        %3983 = vmatpush1.bf16.msra.mxu0 %v3871
        %3984 = vmatprep.subr.bf16.mxu0 0
        %3985 = vmatpush1.bf16.msra.mxu0 %v3870
        %3986 = vmatprep.subr.bf16.mxu0 0
        %3987 = vmatpush1.bf16.msra.mxu0 %v3869
        %3988 = vmatprep.subr.bf16.mxu0 0
        %3989 = vmatpush1.bf16.msra.mxu0 %v3868
        %3990 = vmatprep.subr.bf16.mxu0 0
        %3991 = vmatpush2.bf16.msra.mxu0 0
        %3992 = vmatprep.subr.bf16.mxu0 0
        %3993 = vmatpush2.bf16.msra.mxu0 0
        %3994 = vmatprep.subr.bf16.mxu0 0
        %3995 = vmatpush2.bf16.msra.mxu0 0
        %3996 = vmatprep.subr.bf16.mxu0 0
        %3997 = vmatpush2.bf16.msra.mxu0 0
        %3998 = vmatprep.subr.bf16.mxu0 0
        %3999 = vmatpush2.bf16.msra.mxu0 0
        %4000 = vmatprep.subr.bf16.mxu0 0
        %4001 = vmatpush2.bf16.msra.mxu0 0
        %4002 = vmatprep.subr.bf16.mxu0 0
        %4003 = vmatpush2.bf16.msra.mxu0 0
        %4004 = vmatprep.subr.bf16.mxu0 0
        %4005 = vmatpush2.bf16.msra.mxu0 0
        %4006 = vmatprep.mubr.bf16.mxu0 0
        %4007 = vmatmul.mubr.bf16.gmra.mxu0 %v3759
        %v4008 = vpop.f32.mrf.mxu0
        %v4009 = vadd.f32 %v3932, %v4008
        %v4010 = vpop.f32.mrf.mxu0
        %v4011 = vpop.f32.mrf.mxu0
        %v4012 = vadd.f32 %v3957, %v4011
        %v4013 = vpop.f32.mrf.mxu0
        %4014 = vmatprep.mubr.bf16.mxu0 0
        %4015 = vmatmul.mubr.bf16.gmra.mxu0 %v3808
        %v4016 = vpop.f32.mrf.mxu0
        %v4017 = vadd.f32 %v3966, %v4016
        %v4018 = vpop.f32.mrf.mxu0
        %v4019 = vpop.f32.mrf.mxu0
        %v4020 = vadd.f32 %v3967, %v4019
        %v4021 = vpop.f32.mrf.mxu0
        %4022 = vmatprep.mubr.bf16.mxu0 0
        %4023 = vmatmul.mubr.bf16.gmra.mxu0 %v3832
        %v4024 = vpop.f32.mrf.mxu0
        %v4025 = vadd.f32 %v3968, %v4024
        %v4026 = vpop.f32.mrf.mxu0
        %v4027 = vpop.f32.mrf.mxu0
        %v4028 = vpop.f32.mrf.mxu0
        %4029 = vdwg.mxu0
        %v4035 = vcombine.high %v4009, %v4009
        %v4037 = vunpack.c.l.s4 1966171168
        %v4038 = vunpack.c.0.s8 %v4037
        %v4039 = vlaneseq
        %v4040 = vshrl.u32 %v4039, 7
        %v4041 = vsub.s32 %v4038, %v4040
        %v4042 = vrot.slane %v4009, %v4041
        %v4044 = vunpack.c.l.s4 1966171168
        %v4045 = vunpack.c.0.s8 %v4044
        %v4046 = vlaneseq
        %v4047 = vshrl.u32 %v4046, 7
        %v4048 = vsub.s32 %v4045, %v4047
        %v4049 = vrot.slane %v4035, %v4048
        %v4050 = vcombine.high %v4042, %v4042
        %v4051 = vcombine.high %v4049, %v4049
        %v4053 = vunpack.c.l.s4 1966171168
        %v4054 = vunpack.c.0.s8 %v4053
        %v4055 = vlaneseq
        %v4056 = vshrl.u32 %v4055, 7
        %v4057 = vsub.s32 %v4054, %v4056
        %v4058 = vrot.slane %v4042, %v4057
        %v4060 = vunpack.c.l.s4 1966171168
        %v4061 = vunpack.c.0.s8 %v4060
        %v4062 = vlaneseq
        %v4063 = vshrl.u32 %v4062, 7
        %v4064 = vsub.s32 %v4061, %v4063
        %v4065 = vrot.slane %v4049, %v4064
        %v4067 = vunpack.c.l.s4 1966171168
        %v4068 = vunpack.c.0.s8 %v4067
        %v4069 = vlaneseq
        %v4070 = vshrl.u32 %v4069, 7
        %v4071 = vsub.s32 %v4068, %v4070
        %v4072 = vrot.slane %v4050, %v4071
        %v4074 = vunpack.c.l.s4 1966171168
        %v4075 = vunpack.c.0.s8 %v4074
        %v4076 = vlaneseq
        %v4077 = vshrl.u32 %v4076, 7
        %v4078 = vsub.s32 %v4075, %v4077
        %v4079 = vrot.slane %v4051, %v4078
        %v4080 = vcombine.high %v4058, %v4058
        %v4081 = vcombine.high %v4065, %v4065
        %v4082 = vcombine.high %v4072, %v4072
        %v4083 = vcombine.high %v4079, %v4079
        %v4084 = vcombine.high %v4012, %v4012
        %v4086 = vunpack.c.l.s4 1966171168
        %v4087 = vunpack.c.0.s8 %v4086
        %v4088 = vlaneseq
        %v4089 = vshrl.u32 %v4088, 7
        %v4090 = vsub.s32 %v4087, %v4089
        %v4091 = vrot.slane %v4012, %v4090
        %v4093 = vunpack.c.l.s4 1966171168
        %v4094 = vunpack.c.0.s8 %v4093
        %v4095 = vlaneseq
        %v4096 = vshrl.u32 %v4095, 7
        %v4097 = vsub.s32 %v4094, %v4096
        %v4098 = vrot.slane %v4084, %v4097
        %v4099 = vcombine.high %v4091, %v4091
        %v4100 = vcombine.high %v4098, %v4098
        %v4102 = vunpack.c.l.s4 1966171168
        %v4103 = vunpack.c.0.s8 %v4102
        %v4104 = vlaneseq
        %v4105 = vshrl.u32 %v4104, 7
        %v4106 = vsub.s32 %v4103, %v4105
        %v4107 = vrot.slane %v4091, %v4106
        %v4109 = vunpack.c.l.s4 1966171168
        %v4110 = vunpack.c.0.s8 %v4109
        %v4111 = vlaneseq
        %v4112 = vshrl.u32 %v4111, 7
        %v4113 = vsub.s32 %v4110, %v4112
        %v4114 = vrot.slane %v4098, %v4113
        %v4116 = vunpack.c.l.s4 1966171168
        %v4117 = vunpack.c.0.s8 %v4116
        %v4118 = vlaneseq
        %v4119 = vshrl.u32 %v4118, 7
        %v4120 = vsub.s32 %v4117, %v4119
        %v4121 = vrot.slane %v4099, %v4120
        %v4123 = vunpack.c.l.s4 1966171168
        %v4124 = vunpack.c.0.s8 %v4123
        %v4125 = vlaneseq
        %v4126 = vshrl.u32 %v4125, 7
        %v4127 = vsub.s32 %v4124, %v4126
        %v4128 = vrot.slane %v4100, %v4127
        %v4129 = vcombine.high %v4107, %v4107
        %v4130 = vcombine.high %v4114, %v4114
        %v4131 = vcombine.high %v4121, %v4121
        %v4132 = vcombine.high %v4128, %v4128
        %v4133 = vcombine.high %v4017, %v4017
        %v4135 = vunpack.c.l.s4 1966171168
        %v4136 = vunpack.c.0.s8 %v4135
        %v4137 = vlaneseq
        %v4138 = vshrl.u32 %v4137, 7
        %v4139 = vsub.s32 %v4136, %v4138
        %v4140 = vrot.slane %v4017, %v4139
        %v4142 = vunpack.c.l.s4 1966171168
        %v4143 = vunpack.c.0.s8 %v4142
        %v4144 = vlaneseq
        %v4145 = vshrl.u32 %v4144, 7
        %v4146 = vsub.s32 %v4143, %v4145
        %v4147 = vrot.slane %v4133, %v4146
        %v4148 = vcombine.high %v4140, %v4140
        %v4149 = vcombine.high %v4147, %v4147
        %v4151 = vunpack.c.l.s4 1966171168
        %v4152 = vunpack.c.0.s8 %v4151
        %v4153 = vlaneseq
        %v4154 = vshrl.u32 %v4153, 7
        %v4155 = vsub.s32 %v4152, %v4154
        %v4156 = vrot.slane %v4140, %v4155
        %v4158 = vunpack.c.l.s4 1966171168
        %v4159 = vunpack.c.0.s8 %v4158
        %v4160 = vlaneseq
        %v4161 = vshrl.u32 %v4160, 7
        %v4162 = vsub.s32 %v4159, %v4161
        %v4163 = vrot.slane %v4147, %v4162
        %v4165 = vunpack.c.l.s4 1966171168
        %v4166 = vunpack.c.0.s8 %v4165
        %v4167 = vlaneseq
        %v4168 = vshrl.u32 %v4167, 7
        %v4169 = vsub.s32 %v4166, %v4168
        %v4170 = vrot.slane %v4148, %v4169
        %v4172 = vunpack.c.l.s4 1966171168
        %v4173 = vunpack.c.0.s8 %v4172
        %v4174 = vlaneseq
        %v4175 = vshrl.u32 %v4174, 7
        %v4176 = vsub.s32 %v4173, %v4175
        %v4177 = vrot.slane %v4149, %v4176
        %v4178 = vcombine.high %v4156, %v4156
        %v4179 = vcombine.high %v4163, %v4163
        %v4180 = vcombine.high %v4170, %v4170
        %v4181 = vcombine.high %v4177, %v4177
        %v4182 = vcombine.high %v4020, %v4020
        %v4184 = vunpack.c.l.s4 1966171168
        %v4185 = vunpack.c.0.s8 %v4184
        %v4186 = vlaneseq
        %v4187 = vshrl.u32 %v4186, 7
        %v4188 = vsub.s32 %v4185, %v4187
        %v4189 = vrot.slane %v4020, %v4188
        %v4191 = vunpack.c.l.s4 1966171168
        %v4192 = vunpack.c.0.s8 %v4191
        %v4193 = vlaneseq
        %v4194 = vshrl.u32 %v4193, 7
        %v4195 = vsub.s32 %v4192, %v4194
        %v4196 = vrot.slane %v4182, %v4195
        %v4197 = vcombine.high %v4189, %v4189
        %v4198 = vcombine.high %v4196, %v4196
        %v4200 = vunpack.c.l.s4 1966171168
        %v4201 = vunpack.c.0.s8 %v4200
        %v4202 = vlaneseq
        %v4203 = vshrl.u32 %v4202, 7
        %v4204 = vsub.s32 %v4201, %v4203
        %v4205 = vrot.slane %v4189, %v4204
        %v4207 = vunpack.c.l.s4 1966171168
        %v4208 = vunpack.c.0.s8 %v4207
        %v4209 = vlaneseq
        %v4210 = vshrl.u32 %v4209, 7
        %v4211 = vsub.s32 %v4208, %v4210
        %v4212 = vrot.slane %v4196, %v4211
        %v4214 = vunpack.c.l.s4 1966171168
        %v4215 = vunpack.c.0.s8 %v4214
        %v4216 = vlaneseq
        %v4217 = vshrl.u32 %v4216, 7
        %v4218 = vsub.s32 %v4215, %v4217
        %v4219 = vrot.slane %v4197, %v4218
        %v4221 = vunpack.c.l.s4 1966171168
        %v4222 = vunpack.c.0.s8 %v4221
        %v4223 = vlaneseq
        %v4224 = vshrl.u32 %v4223, 7
        %v4225 = vsub.s32 %v4222, %v4224
        %v4226 = vrot.slane %v4198, %v4225
        %v4227 = vcombine.high %v4205, %v4205
        %v4228 = vcombine.high %v4212, %v4212
        %v4229 = vcombine.high %v4219, %v4219
        %v4230 = vcombine.high %v4226, %v4226
        %v4231 = vcombine.high %v4025, %v4025
        %v4233 = vunpack.c.l.s4 1966171168
        %v4234 = vunpack.c.0.s8 %v4233
        %v4235 = vlaneseq
        %v4236 = vshrl.u32 %v4235, 7
        %v4237 = vsub.s32 %v4234, %v4236
        %v4238 = vrot.slane %v4025, %v4237
        %v4240 = vunpack.c.l.s4 1966171168
        %v4241 = vunpack.c.0.s8 %v4240
        %v4242 = vlaneseq
        %v4243 = vshrl.u32 %v4242, 7
        %v4244 = vsub.s32 %v4241, %v4243
        %v4245 = vrot.slane %v4231, %v4244
        %v4246 = vcombine.high %v4238, %v4238
        %v4247 = vcombine.high %v4245, %v4245
        %v4249 = vunpack.c.l.s4 1966171168
        %v4250 = vunpack.c.0.s8 %v4249
        %v4251 = vlaneseq
        %v4252 = vshrl.u32 %v4251, 7
        %v4253 = vsub.s32 %v4250, %v4252
        %v4254 = vrot.slane %v4238, %v4253
        %v4256 = vunpack.c.l.s4 1966171168
        %v4257 = vunpack.c.0.s8 %v4256
        %v4258 = vlaneseq
        %v4259 = vshrl.u32 %v4258, 7
        %v4260 = vsub.s32 %v4257, %v4259
        %v4261 = vrot.slane %v4245, %v4260
        %v4263 = vunpack.c.l.s4 1966171168
        %v4264 = vunpack.c.0.s8 %v4263
        %v4265 = vlaneseq
        %v4266 = vshrl.u32 %v4265, 7
        %v4267 = vsub.s32 %v4264, %v4266
        %v4268 = vrot.slane %v4246, %v4267
        %v4270 = vunpack.c.l.s4 1966171168
        %v4271 = vunpack.c.0.s8 %v4270
        %v4272 = vlaneseq
        %v4273 = vshrl.u32 %v4272, 7
        %v4274 = vsub.s32 %v4271, %v4273
        %v4275 = vrot.slane %v4247, %v4274
        %v4276 = vcombine.high %v4254, %v4254
        %v4277 = vcombine.high %v4261, %v4261
        %v4278 = vcombine.high %v4268, %v4268
        %v4279 = vcombine.high %v4275, %v4275
        %v4320 = vmax.f32 %v4058, 0.0
        %v4321 = vmax.f32 %v4072, 0.0
        %v4322 = vmax.f32 %v4080, 0.0
        %v4323 = vmax.f32 %v4082, 0.0
        %v4324 = vmax.f32 %v4065, 0.0
        %v4325 = vmax.f32 %v4079, 0.0
        %v4326 = vmax.f32 %v4081, 0.0
        %v4327 = vmax.f32 %v4083, 0.0
        %v4328 = vmax.f32 %v4107, 0.0
        %v4329 = vmax.f32 %v4121, 0.0
        %v4330 = vmax.f32 %v4129, 0.0
        %v4331 = vmax.f32 %v4131, 0.0
        %v4332 = vmax.f32 %v4114, 0.0
        %v4333 = vmax.f32 %v4128, 0.0
        %v4334 = vmax.f32 %v4130, 0.0
        %v4335 = vmax.f32 %v4132, 0.0
        %v4336 = vmax.f32 %v4156, 0.0
        %v4337 = vmax.f32 %v4170, 0.0
        %v4338 = vmax.f32 %v4178, 0.0
        %v4339 = vmax.f32 %v4180, 0.0
        %v4340 = vmax.f32 %v4163, 0.0
        %v4341 = vmax.f32 %v4177, 0.0
        %v4342 = vmax.f32 %v4179, 0.0
        %v4343 = vmax.f32 %v4181, 0.0
        %v4344 = vmax.f32 %v4205, 0.0
        %v4345 = vmax.f32 %v4219, 0.0
        %v4346 = vmax.f32 %v4227, 0.0
        %v4347 = vmax.f32 %v4229, 0.0
        %v4348 = vmax.f32 %v4212, 0.0
        %v4349 = vmax.f32 %v4226, 0.0
        %v4350 = vmax.f32 %v4228, 0.0
        %v4351 = vmax.f32 %v4230, 0.0
        %v4352 = vmax.f32 %v4254, 0.0
        %v4353 = vmax.f32 %v4268, 0.0
        %v4354 = vmax.f32 %v4276, 0.0
        %v4355 = vmax.f32 %v4278, 0.0
        %v4356 = vmax.f32 %v4261, 0.0
        %v4357 = vmax.f32 %v4275, 0.0
        %v4358 = vmax.f32 %v4277, 0.0
        %v4359 = vmax.f32 %v4279, 0.0
        %v4400 = vcombine.low %v4320, %v4321
        %v4401 = vcombine.low %v4322, %v4323
        %v4403 = vunpack.c.l.s4 1966171168
        %v4404 = vunpack.c.0.s8 %v4403
        %v4405 = vlaneseq
        %v4406 = vshrl.u32 %v4405, 7
        %v4407 = vsub.s32 %v4404, %v4406
        %v4408 = vrot.slane %v4400, %v4407
        %v4410 = vunpack.c.l.s4 1966171168
        %v4411 = vunpack.c.0.s8 %v4410
        %v4412 = vlaneseq
        %v4413 = vshrl.u32 %v4412, 7
        %v4414 = vsub.s32 %v4411, %v4413
        %v4415 = vrot.slane %v4401, %v4414
        %v4417 = vunpack.c.l.s4 1966171168
        %v4418 = vunpack.c.0.s8 %v4417
        %v4419 = vlaneseq
        %v4420 = vshrl.u32 %v4419, 7
        %v4421 = vsub.s32 %v4418, %v4420
        %v4422 = vrot.slane %v4324, %v4421
        %v4423 = vcombine.low %v4408, %v4415
        %v4425 = vunpack.c.l.s4 1966171168
        %v4426 = vunpack.c.0.s8 %v4425
        %v4427 = vlaneseq
        %v4428 = vshrl.u32 %v4427, 7
        %v4429 = vsub.s32 %v4426, %v4428
        %v4430 = vrot.slane %v4423, %v4429
        %v4432 = vunpack.c.l.s4 1966171168
        %v4433 = vunpack.c.0.s8 %v4432
        %v4434 = vlaneseq
        %v4435 = vshrl.u32 %v4434, 7
        %v4436 = vsub.s32 %v4433, %v4435
        %v4437 = vrot.slane %v4422, %v4436
        %v4438 = vcombine.low %v4430, %v4437
        %v4439 = vcombine.low %v4325, %v4326
        %v4440 = vcombine.low %v4327, %v4328
        %v4442 = vunpack.c.l.s4 1966171168
        %v4443 = vunpack.c.0.s8 %v4442
        %v4444 = vlaneseq
        %v4445 = vshrl.u32 %v4444, 7
        %v4446 = vsub.s32 %v4443, %v4445
        %v4447 = vrot.slane %v4439, %v4446
        %v4449 = vunpack.c.l.s4 1966171168
        %v4450 = vunpack.c.0.s8 %v4449
        %v4451 = vlaneseq
        %v4452 = vshrl.u32 %v4451, 7
        %v4453 = vsub.s32 %v4450, %v4452
        %v4454 = vrot.slane %v4440, %v4453
        %v4456 = vunpack.c.l.s4 1966171168
        %v4457 = vunpack.c.0.s8 %v4456
        %v4458 = vlaneseq
        %v4459 = vshrl.u32 %v4458, 7
        %v4460 = vsub.s32 %v4457, %v4459
        %v4461 = vrot.slane %v4329, %v4460
        %v4462 = vcombine.low %v4447, %v4454
        %v4464 = vunpack.c.l.s4 1966171168
        %v4465 = vunpack.c.0.s8 %v4464
        %v4466 = vlaneseq
        %v4467 = vshrl.u32 %v4466, 7
        %v4468 = vsub.s32 %v4465, %v4467
        %v4469 = vrot.slane %v4462, %v4468
        %v4471 = vunpack.c.l.s4 1966171168
        %v4472 = vunpack.c.0.s8 %v4471
        %v4473 = vlaneseq
        %v4474 = vshrl.u32 %v4473, 7
        %v4475 = vsub.s32 %v4472, %v4474
        %v4476 = vrot.slane %v4461, %v4475
        %v4477 = vcombine.low %v4469, %v4476
        %v4478 = vcombine.low %v4330, %v4331
        %v4479 = vcombine.low %v4332, %v4333
        %v4481 = vunpack.c.l.s4 1966171168
        %v4482 = vunpack.c.0.s8 %v4481
        %v4483 = vlaneseq
        %v4484 = vshrl.u32 %v4483, 7
        %v4485 = vsub.s32 %v4482, %v4484
        %v4486 = vrot.slane %v4478, %v4485
        %v4488 = vunpack.c.l.s4 1966171168
        %v4489 = vunpack.c.0.s8 %v4488
        %v4490 = vlaneseq
        %v4491 = vshrl.u32 %v4490, 7
        %v4492 = vsub.s32 %v4489, %v4491
        %v4493 = vrot.slane %v4479, %v4492
        %v4495 = vunpack.c.l.s4 1966171168
        %v4496 = vunpack.c.0.s8 %v4495
        %v4497 = vlaneseq
        %v4498 = vshrl.u32 %v4497, 7
        %v4499 = vsub.s32 %v4496, %v4498
        %v4500 = vrot.slane %v4334, %v4499
        %v4501 = vcombine.low %v4486, %v4493
        %v4503 = vunpack.c.l.s4 1966171168
        %v4504 = vunpack.c.0.s8 %v4503
        %v4505 = vlaneseq
        %v4506 = vshrl.u32 %v4505, 7
        %v4507 = vsub.s32 %v4504, %v4506
        %v4508 = vrot.slane %v4501, %v4507
        %v4510 = vunpack.c.l.s4 1966171168
        %v4511 = vunpack.c.0.s8 %v4510
        %v4512 = vlaneseq
        %v4513 = vshrl.u32 %v4512, 7
        %v4514 = vsub.s32 %v4511, %v4513
        %v4515 = vrot.slane %v4500, %v4514
        %v4516 = vcombine.low %v4508, %v4515
        %v4517 = vcombine.low %v4335, %v4336
        %v4518 = vcombine.low %v4337, %v4338
        %v4520 = vunpack.c.l.s4 1966171168
        %v4521 = vunpack.c.0.s8 %v4520
        %v4522 = vlaneseq
        %v4523 = vshrl.u32 %v4522, 7
        %v4524 = vsub.s32 %v4521, %v4523
        %v4525 = vrot.slane %v4517, %v4524
        %v4527 = vunpack.c.l.s4 1966171168
        %v4528 = vunpack.c.0.s8 %v4527
        %v4529 = vlaneseq
        %v4530 = vshrl.u32 %v4529, 7
        %v4531 = vsub.s32 %v4528, %v4530
        %v4532 = vrot.slane %v4518, %v4531
        %v4534 = vunpack.c.l.s4 1966171168
        %v4535 = vunpack.c.0.s8 %v4534
        %v4536 = vlaneseq
        %v4537 = vshrl.u32 %v4536, 7
        %v4538 = vsub.s32 %v4535, %v4537
        %v4539 = vrot.slane %v4339, %v4538
        %v4540 = vcombine.low %v4525, %v4532
        %v4542 = vunpack.c.l.s4 1966171168
        %v4543 = vunpack.c.0.s8 %v4542
        %v4544 = vlaneseq
        %v4545 = vshrl.u32 %v4544, 7
        %v4546 = vsub.s32 %v4543, %v4545
        %v4547 = vrot.slane %v4540, %v4546
        %v4549 = vunpack.c.l.s4 1966171168
        %v4550 = vunpack.c.0.s8 %v4549
        %v4551 = vlaneseq
        %v4552 = vshrl.u32 %v4551, 7
        %v4553 = vsub.s32 %v4550, %v4552
        %v4554 = vrot.slane %v4539, %v4553
        %v4555 = vcombine.low %v4547, %v4554
        %v4556 = vcombine.low %v4340, %v4341
        %v4557 = vcombine.low %v4342, %v4343
        %v4559 = vunpack.c.l.s4 1966171168
        %v4560 = vunpack.c.0.s8 %v4559
        %v4561 = vlaneseq
        %v4562 = vshrl.u32 %v4561, 7
        %v4563 = vsub.s32 %v4560, %v4562
        %v4564 = vrot.slane %v4556, %v4563
        %v4566 = vunpack.c.l.s4 1966171168
        %v4567 = vunpack.c.0.s8 %v4566
        %v4568 = vlaneseq
        %v4569 = vshrl.u32 %v4568, 7
        %v4570 = vsub.s32 %v4567, %v4569
        %v4571 = vrot.slane %v4557, %v4570
        %v4573 = vunpack.c.l.s4 1966171168
        %v4574 = vunpack.c.0.s8 %v4573
        %v4575 = vlaneseq
        %v4576 = vshrl.u32 %v4575, 7
        %v4577 = vsub.s32 %v4574, %v4576
        %v4578 = vrot.slane %v4344, %v4577
        %v4579 = vcombine.low %v4564, %v4571
        %v4581 = vunpack.c.l.s4 1966171168
        %v4582 = vunpack.c.0.s8 %v4581
        %v4583 = vlaneseq
        %v4584 = vshrl.u32 %v4583, 7
        %v4585 = vsub.s32 %v4582, %v4584
        %v4586 = vrot.slane %v4579, %v4585
        %v4588 = vunpack.c.l.s4 1966171168
        %v4589 = vunpack.c.0.s8 %v4588
        %v4590 = vlaneseq
        %v4591 = vshrl.u32 %v4590, 7
        %v4592 = vsub.s32 %v4589, %v4591
        %v4593 = vrot.slane %v4578, %v4592
        %v4594 = vcombine.low %v4586, %v4593
        %v4595 = vcombine.low %v4345, %v4346
        %v4596 = vcombine.low %v4347, %v4348
        %v4598 = vunpack.c.l.s4 1966171168
        %v4599 = vunpack.c.0.s8 %v4598
        %v4600 = vlaneseq
        %v4601 = vshrl.u32 %v4600, 7
        %v4602 = vsub.s32 %v4599, %v4601
        %v4603 = vrot.slane %v4595, %v4602
        %v4605 = vunpack.c.l.s4 1966171168
        %v4606 = vunpack.c.0.s8 %v4605
        %v4607 = vlaneseq
        %v4608 = vshrl.u32 %v4607, 7
        %v4609 = vsub.s32 %v4606, %v4608
        %v4610 = vrot.slane %v4596, %v4609
        %v4612 = vunpack.c.l.s4 1966171168
        %v4613 = vunpack.c.0.s8 %v4612
        %v4614 = vlaneseq
        %v4615 = vshrl.u32 %v4614, 7
        %v4616 = vsub.s32 %v4613, %v4615
        %v4617 = vrot.slane %v4349, %v4616
        %v4618 = vcombine.low %v4603, %v4610
        %v4620 = vunpack.c.l.s4 1966171168
        %v4621 = vunpack.c.0.s8 %v4620
        %v4622 = vlaneseq
        %v4623 = vshrl.u32 %v4622, 7
        %v4624 = vsub.s32 %v4621, %v4623
        %v4625 = vrot.slane %v4618, %v4624
        %v4627 = vunpack.c.l.s4 1966171168
        %v4628 = vunpack.c.0.s8 %v4627
        %v4629 = vlaneseq
        %v4630 = vshrl.u32 %v4629, 7
        %v4631 = vsub.s32 %v4628, %v4630
        %v4632 = vrot.slane %v4617, %v4631
        %v4633 = vcombine.low %v4625, %v4632
        %v4634 = vcombine.low %v4350, %v4351
        %v4635 = vcombine.low %v4352, %v4353
        %v4637 = vunpack.c.l.s4 1966171168
        %v4638 = vunpack.c.0.s8 %v4637
        %v4639 = vlaneseq
        %v4640 = vshrl.u32 %v4639, 7
        %v4641 = vsub.s32 %v4638, %v4640
        %v4642 = vrot.slane %v4634, %v4641
        %v4644 = vunpack.c.l.s4 1966171168
        %v4645 = vunpack.c.0.s8 %v4644
        %v4646 = vlaneseq
        %v4647 = vshrl.u32 %v4646, 7
        %v4648 = vsub.s32 %v4645, %v4647
        %v4649 = vrot.slane %v4635, %v4648
        %v4651 = vunpack.c.l.s4 1966171168
        %v4652 = vunpack.c.0.s8 %v4651
        %v4653 = vlaneseq
        %v4654 = vshrl.u32 %v4653, 7
        %v4655 = vsub.s32 %v4652, %v4654
        %v4656 = vrot.slane %v4354, %v4655
        %v4657 = vcombine.low %v4642, %v4649
        %v4659 = vunpack.c.l.s4 1966171168
        %v4660 = vunpack.c.0.s8 %v4659
        %v4661 = vlaneseq
        %v4662 = vshrl.u32 %v4661, 7
        %v4663 = vsub.s32 %v4660, %v4662
        %v4664 = vrot.slane %v4657, %v4663
        %v4666 = vunpack.c.l.s4 1966171168
        %v4667 = vunpack.c.0.s8 %v4666
        %v4668 = vlaneseq
        %v4669 = vshrl.u32 %v4668, 7
        %v4670 = vsub.s32 %v4667, %v4669
        %v4671 = vrot.slane %v4656, %v4670
        %v4672 = vcombine.low %v4664, %v4671
        %v4673 = vcombine.low %v4355, %v4356
        %v4674 = vcombine.low %v4357, %v4358
        %v4676 = vunpack.c.l.s4 1966171168
        %v4677 = vunpack.c.0.s8 %v4676
        %v4678 = vlaneseq
        %v4679 = vshrl.u32 %v4678, 7
        %v4680 = vsub.s32 %v4677, %v4679
        %v4681 = vrot.slane %v4673, %v4680
        %v4683 = vunpack.c.l.s4 1966171168
        %v4684 = vunpack.c.0.s8 %v4683
        %v4685 = vlaneseq
        %v4686 = vshrl.u32 %v4685, 7
        %v4687 = vsub.s32 %v4684, %v4686
        %v4688 = vrot.slane %v4674, %v4687
        %v4690 = vunpack.c.l.s4 1966171168
        %v4691 = vunpack.c.0.s8 %v4690
        %v4692 = vlaneseq
        %v4693 = vshrl.u32 %v4692, 7
        %v4694 = vsub.s32 %v4691, %v4693
        %v4695 = vrot.slane %v4359, %v4694
        %v4696 = vcombine.low %v4681, %v4688
        %v4698 = vunpack.c.l.s4 1966171168
        %v4699 = vunpack.c.0.s8 %v4698
        %v4700 = vlaneseq
        %v4701 = vshrl.u32 %v4700, 7
        %v4702 = vsub.s32 %v4699, %v4701
        %v4703 = vrot.slane %v4696, %v4702
        %v4705 = vunpack.c.l.s4 1966171168
        %v4706 = vunpack.c.0.s8 %v4705
        %v4707 = vlaneseq
        %v4708 = vshrl.u32 %v4707, 7
        %v4709 = vsub.s32 %v4706, %v4708
        %v4710 = vrot.slane %v4695, %v4709
        %v4711 = vcombine.low %v4703, %v4710
        %vm4720 = vcmask 258048
        %v4721 = vsel %vm4720, %v4438, -inf
        %v4722 = vrot.slane %v4721, 4
        %v4723 = vmax.f32 %v4721, %v4722
        %v4724 = vrot.slane %v4723, 2
        %v4725 = vmax.f32 %v4723, %v4724
        %v4726 = vrot.slane %v4725, 1
        %v4727 = vmax.f32 %v4725, %v4726
        %v4728 = vsel %vm4720, %v4477, -inf
        %v4729 = vrot.slane %v4728, 4
        %v4730 = vmax.f32 %v4728, %v4729
        %v4731 = vrot.slane %v4730, 2
        %v4732 = vmax.f32 %v4730, %v4731
        %v4733 = vrot.slane %v4732, 1
        %v4734 = vmax.f32 %v4732, %v4733
        %v4735 = vsel %vm4720, %v4516, -inf
        %v4736 = vrot.slane %v4735, 4
        %v4737 = vmax.f32 %v4735, %v4736
        %v4738 = vrot.slane %v4737, 2
        %v4739 = vmax.f32 %v4737, %v4738
        %v4740 = vrot.slane %v4739, 1
        %v4741 = vmax.f32 %v4739, %v4740
        %v4742 = vsel %vm4720, %v4555, -inf
        %v4743 = vrot.slane %v4742, 4
        %v4744 = vmax.f32 %v4742, %v4743
        %v4745 = vrot.slane %v4744, 2
        %v4746 = vmax.f32 %v4744, %v4745
        %v4747 = vrot.slane %v4746, 1
        %v4748 = vmax.f32 %v4746, %v4747
        %v4749 = vsel %vm4720, %v4594, -inf
        %v4750 = vrot.slane %v4749, 4
        %v4751 = vmax.f32 %v4749, %v4750
        %v4752 = vrot.slane %v4751, 2
        %v4753 = vmax.f32 %v4751, %v4752
        %v4754 = vrot.slane %v4753, 1
        %v4755 = vmax.f32 %v4753, %v4754
        %v4756 = vsel %vm4720, %v4633, -inf
        %v4757 = vrot.slane %v4756, 4
        %v4758 = vmax.f32 %v4756, %v4757
        %v4759 = vrot.slane %v4758, 2
        %v4760 = vmax.f32 %v4758, %v4759
        %v4761 = vrot.slane %v4760, 1
        %v4762 = vmax.f32 %v4760, %v4761
        %v4763 = vsel %vm4720, %v4672, -inf
        %v4764 = vrot.slane %v4763, 4
        %v4765 = vmax.f32 %v4763, %v4764
        %v4766 = vrot.slane %v4765, 2
        %v4767 = vmax.f32 %v4765, %v4766
        %v4768 = vrot.slane %v4767, 1
        %v4769 = vmax.f32 %v4767, %v4768
        %v4770 = vsel %vm4720, %v4711, -inf
        %v4771 = vrot.slane %v4770, 4
        %v4772 = vmax.f32 %v4770, %v4771
        %v4773 = vrot.slane %v4772, 2
        %v4774 = vmax.f32 %v4772, %v4773
        %v4775 = vrot.slane %v4774, 1
        %v4776 = vmax.f32 %v4774, %v4775
        %v4777 = vmax.f32 %v3342, %v4727
        %v4778 = vmax.f32 %v3343, %v4734
        %v4779 = vmax.f32 %v3344, %v4741
        %v4780 = vmax.f32 %v3345, %v4748
        %v4781 = vmax.f32 %v3346, %v4755
        %v4782 = vmax.f32 %v3347, %v4762
        %v4783 = vmax.f32 %v3348, %v4769
        %v4784 = vmax.f32 %v3349, %v4776
        %v4785 = vld [vmem:[%s5] sm:$0xff]
        %v4786 = vld [vmem:[%s5 + $0x8] sm:$0xff]
        %v4787 = vld [vmem:[%s5 + $0x10] sm:$0xff]
        %v4788 = vld [vmem:[%s5 + $0x18] sm:$0xff]
        %v4789 = vld [vmem:[%s5 + $0x20] sm:$0xff]
        %v4790 = vld [vmem:[%s5 + $0x28] sm:$0xff]
        %v4791 = vld [vmem:[%s5 + $0x30] sm:$0x1]
        %v4792 = vld [vmem:[%s5 + $0x31] sm:$0x1]
        %vm4793 = vcmask 130048
        %v4795 = vsel %vm4793, %v449, 0
        %4797 = vmatprep.subr.mxu0 0.0
        %4798 = vmatpush1.msra.mxu0 0.0
        %4799 = vmatprep.subr.mxu0 0.0
        %4800 = vmatpush1.msra.mxu0 0.0
        %4801 = vmatprep.subr.mxu0 0.0
        %4802 = vmatpush1.msra.mxu0 0.0
        %4803 = vmatprep.subr.mxu0 0.0
        %4804 = vmatpush1.msra.mxu0 0.0
        %4805 = vmatprep.subr.mxu0 0.0
        %4806 = vmatpush1.msra.mxu0 0.0
        %4807 = vmatprep.subr.mxu0 0.0
        %4808 = vmatpush1.msra.mxu0 0.0
        %4809 = vmatprep.subr.mxu0 0.0
        %4810 = vmatpush1.msra.mxu0 0.0
        %4811 = vmatprep.subr.mxu0 0.0
        %4812 = vmatpush1.msra.mxu0 0.0
        %4813 = vmatprep.subr.mxu0 0.0
        %4814 = vmatpush1.msra.mxu0 0.0
        %4815 = vmatprep.subr.mxu0 0.0
        %4816 = vmatpush1.msra.mxu0 0.0
        %4817 = vmatprep.subr.mxu0 0.0
        %4818 = vmatpush1.msra.mxu0 0.0
        %4819 = vmatprep.subr.mxu0 0.0
        %4820 = vmatpush1.msra.mxu0 0.0
        %4821 = vmatprep.subr.mxu0 0.0
        %4822 = vmatpush1.msra.mxu0 0.0
        %4823 = vmatprep.subr.mxu0 0.0
        %4824 = vmatpush1.msra.mxu0 0.0
        %4825 = vmatprep.subr.mxu0 0.0
        %4826 = vmatpush1.msra.mxu0 %v4790
        %4827 = vmatprep.subr.mxu0 0.0
        %4828 = vmatpush1.msra.mxu0 %v4789
        %4829 = vmatprep.subr.mxu0 0.0
        %4830 = vmatpush2.msra.mxu0 0.0
        %4831 = vmatprep.subr.mxu0 0.0
        %4832 = vmatpush2.msra.mxu0 0.0
        %4833 = vmatprep.subr.mxu0 0.0
        %4834 = vmatpush2.msra.mxu0 0.0
        %4835 = vmatprep.subr.mxu0 0.0
        %4836 = vmatpush2.msra.mxu0 0.0
        %4837 = vmatprep.subr.mxu0 0.0
        %4838 = vmatpush2.msra.mxu0 0.0
        %4839 = vmatprep.subr.mxu0 0.0
        %4840 = vmatpush2.msra.mxu0 0.0
        %4841 = vmatprep.subr.mxu0 0.0
        %4842 = vmatpush2.msra.mxu0 0.0
        %4843 = vmatprep.subr.mxu0 0.0
        %4844 = vmatpush2.msra.mxu0 0.0
        %4845 = vmatprep.subr.mxu0 0.0
        %4846 = vmatpush2.msra.mxu0 0.0
        %4847 = vmatprep.subr.mxu0 0.0
        %4848 = vmatpush2.msra.mxu0 0.0
        %4849 = vmatprep.subr.mxu0 0.0
        %4850 = vmatpush2.msra.mxu0 0.0
        %4851 = vmatprep.subr.mxu0 0.0
        %4852 = vmatpush2.msra.mxu0 0.0
        %4853 = vmatprep.subr.mxu0 0.0
        %4854 = vmatpush2.msra.mxu0 0.0
        %4855 = vmatprep.subr.mxu0 0.0
        %4856 = vmatpush2.msra.mxu0 0.0
        %4857 = vmatprep.subr.mxu0 0.0
        %4858 = vmatpush2.msra.mxu0 0.0
        %4859 = vmatprep.subr.mxu0 0.0
        %4860 = vmatpush2.msra.mxu0 0.0
        %4861 = vmatprep.mubr.f32.mxu0 0.0
        %4862 = vmatmul.mubr.f32.gmra.mxu0 %v4795
        %v4863 = vpop.f32.mrf.mxu0
        %v4864 = vadd.f32 0.0, %v4863
        %v4865 = vpop.f32.mrf.mxu0
        %4866 = vdwg.mxu0
        %v4875 = vsel %vm363, %v4778, %v4777
        %v4876 = vsel %vm365, %v4779, %v4875
        %v4877 = vsel %vm367, %v4780, %v4876
        %v4878 = vsel %vm369, %v4781, %v4877
        %v4879 = vsel %vm371, %v4782, %v4878
        %v4880 = vsel %vm373, %v4783, %v4879
        %v4881 = vsel %vm375, %v4784, %v4880
        %v4882 = vsel %vm286, %v4881, 0
        %4884 = vmatprep.subr.mxu0 0.0
        %4885 = vmatpush1.msra.mxu0 0.0
        %4886 = vmatprep.subr.mxu0 0.0
        %4887 = vmatpush1.msra.mxu0 0.0
        %4888 = vmatprep.subr.mxu0 0.0
        %4889 = vmatpush1.msra.mxu0 0.0
        %4890 = vmatprep.subr.mxu0 0.0
        %4891 = vmatpush1.msra.mxu0 0.0
        %4892 = vmatprep.subr.mxu0 0.0
        %4893 = vmatpush1.msra.mxu0 0.0
        %4894 = vmatprep.subr.mxu0 0.0
        %4895 = vmatpush1.msra.mxu0 0.0
        %4896 = vmatprep.subr.mxu0 0.0
        %4897 = vmatpush1.msra.mxu0 0.0
        %4898 = vmatprep.subr.mxu0 0.0
        %4899 = vmatpush1.msra.mxu0 0.0
        %4900 = vmatprep.subr.mxu0 0.0
        %4901 = vmatpush1.msra.mxu0 0.0
        %4902 = vmatprep.subr.mxu0 0.0
        %4903 = vmatpush1.msra.mxu0 0.0
        %4904 = vmatprep.subr.mxu0 0.0
        %4905 = vmatpush1.msra.mxu0 0.0
        %4906 = vmatprep.subr.mxu0 0.0
        %4907 = vmatpush1.msra.mxu0 0.0
        %4908 = vmatprep.subr.mxu0 0.0
        %4909 = vmatpush1.msra.mxu0 %v4788
        %4910 = vmatprep.subr.mxu0 0.0
        %4911 = vmatpush1.msra.mxu0 %v4787
        %4912 = vmatprep.subr.mxu0 0.0
        %4913 = vmatpush1.msra.mxu0 %v4786
        %4914 = vmatprep.subr.mxu0 0.0
        %4915 = vmatpush1.msra.mxu0 %v4785
        %4916 = vmatprep.subr.mxu0 0.0
        %4917 = vmatpush2.msra.mxu0 0.0
        %4918 = vmatprep.subr.mxu0 0.0
        %4919 = vmatpush2.msra.mxu0 0.0
        %4920 = vmatprep.subr.mxu0 0.0
        %4921 = vmatpush2.msra.mxu0 0.0
        %4922 = vmatprep.subr.mxu0 0.0
        %4923 = vmatpush2.msra.mxu0 0.0
        %4924 = vmatprep.subr.mxu0 0.0
        %4925 = vmatpush2.msra.mxu0 0.0
        %4926 = vmatprep.subr.mxu0 0.0
        %4927 = vmatpush2.msra.mxu0 0.0
        %4928 = vmatprep.subr.mxu0 0.0
        %4929 = vmatpush2.msra.mxu0 0.0
        %4930 = vmatprep.subr.mxu0 0.0
        %4931 = vmatpush2.msra.mxu0 0.0
        %4932 = vmatprep.subr.mxu0 0.0
        %4933 = vmatpush2.msra.mxu0 0.0
        %4934 = vmatprep.subr.mxu0 0.0
        %4935 = vmatpush2.msra.mxu0 0.0
        %4936 = vmatprep.subr.mxu0 0.0
        %4937 = vmatpush2.msra.mxu0 0.0
        %4938 = vmatprep.subr.mxu0 0.0
        %4939 = vmatpush2.msra.mxu0 0.0
        %4940 = vmatprep.subr.mxu0 0.0
        %4941 = vmatpush2.msra.mxu0 0.0
        %4942 = vmatprep.subr.mxu0 0.0
        %4943 = vmatpush2.msra.mxu0 0.0
        %4944 = vmatprep.subr.mxu0 0.0
        %4945 = vmatpush2.msra.mxu0 0.0
        %4946 = vmatprep.subr.mxu0 0.0
        %4947 = vmatpush2.msra.mxu0 0.0
        %4948 = vmatprep.mubr.f32.mxu0 0.0
        %4949 = vmatmul.mubr.f32.gmra.mxu0 %v4882
        %v4950 = vpop.f32.mrf.mxu0
        %v4951 = vadd.f32 %v4864, %v4950
        %v4952 = vpop.f32.mrf.mxu0
        %4953 = vdwg.mxu0
        %v4954 = vld [vmem:[%s268] sm:$0xff]
        %4956 = vset.pattern.permute.xlu0 0
        %4957 = vperm.xlu0 %4956, %v4954
        %v4958 = vpop.permute.xlu0 %4957
        %v4960 = vlaneseq
        %v4961 = vshrl.u32 %v4960, 7
        %v4962 = vsub.s32 0, %v4961
        %v4963 = vrot.slane %v4791, %v4962
        %v4964 = vmul.f32 %v4958, %v4963
        %v4965 = vadd.f32 %v4951, %v4964
        %v4966 = vlaneseq
        %v4967 = vshrl.u32 %v4966, 7
        %v4968 = vsub.s32 0, %v4967
        %v4969 = vrot.slane %v4792, %v4968
        %v4970 = vadd.f32 %v4965, %v4969
        %v4971 = vlaneseq
        %v4972 = vand.u32 %v4971, 127
        %vm4973 = vcmp.lt.s32.totalorder %v4972, 5
        %v4974 = vsel %vm4973, %v4970, -1e+30
        %4975 = vmax.xlane.f32.xlu0 %v4974
        %v4976 = vpop.xlane.xlu0 %4975
        %v4977 = vsub.f32 %v4974, %v4976
        %v4978 = vmul.f32 %v4977, 1.442695
        %v4979 = vpow.pop %v4978
        %4980 = vadd.xlane.f32.xlu0 %v4979
        %v4981 = vpop.xlane.xlu0 %4980
        %v4982 = vlog2.pop %v4981
        %v4983 = vmul.f32 %v4982, 0.6931472
        %v4984 = vsub.f32 %v4977, %v4983
        %4985 = vst [vmem:[%s258] sm:$0xff] %v4984
        %s4986 = sand.u32 %s164, 1
        %s4987 = scalar_lea.sflag [#allocation3], %s4986
        %s4988 = sand.u32 %s164, 1
        %s4989 = smul.addr %s4988, 8
        %s4990 = scalar_lea.vmem [#allocation2], %s4989
        // Predicated region
        $region45: #{tpu_custom_call.1} parent=43 // pred_check
          %p4991 = pneg %p174
        $region46: #{tpu_custom_call.1} parent=43 // pred_check_branch
          %4993 = sbr.rel (%p4991) target = $region48
        $region47: #{tpu_custom_call.1} parent=43 // pred_region
          %s4995 = ssub.s32 128, 128
          %4996 = vsyncadd %s4987, %s4995
          %s4997 = smul.addr %s20, 128
          %s4998 = scalar_lea.hbm %s6, %s4997
          %s5000 = sshll.u32 %s4990, 4
          %s5001 = int_to_ptr.vmem [resolvable:$true] %s5000
          %5003 = dma.vmem_to_hbm [thread:$0]  %s5001, 128, %s4998, %s4987
        $region48: #{tpu_custom_call.1} parent=43 // pred_fallthru
          _
      $region44: #{tpu_custom_call.1} parent=5 // pred_fallthru
        _
      %p5004 = scmp.le.s32.totalorder 2, %s15
      // Predicated region
      $region49: #{tpu_custom_call.1} parent=5 // pred_check
        %p5005 = pneg %p5004
      $region50: #{tpu_custom_call.1} parent=5 // pred_check_branch
        %5007 = sbr.rel (%p5005) target = $region52
      $region51: #{tpu_custom_call.1} parent=5 // pred_region
        %s5008 = ssub.s32 %s15, 2
        // Predicated region
        $region53: #{tpu_custom_call.1} parent=51 // pred_check
          %p5009 = pneg %p180
        $region54: #{tpu_custom_call.1} parent=51 // pred_check_branch
          %5011 = sbr.rel (%p5009) target = $region56
        $region55: #{tpu_custom_call.1} parent=51 // pred_region
          %s5012 = sand.u32 %s165, 1
          %s5013 = scalar_lea.sflag [#allocation3], %s5012
          %s5014 = sand.u32 %s165, 1
          %s5015 = smul.addr %s5014, 8
          %s5016 = scalar_lea.vmem [#allocation2], %s5015
          %5017 = dma.done %s5013, 128
        $region56: #{tpu_custom_call.1} parent=51 // pred_fallthru
          _
      $region52: #{tpu_custom_call.1} parent=5 // pred_fallthru
        _
    $region6: #{tpu_custom_call.1} parent=1 // loop_footer
      %s19 = sadd.s32 1, %s15
    $region7: #{tpu_custom_call.1} parent=1 // loop_footer_branch
      %14 = sbr.rel target = $region3
    $region8: #{tpu_custom_call.1} parent=1 // loop_exit
      _
    %5018 = vsyncpa [#allocation3], 1
    %s5019 = scalar_lea.sflag [#allocation3], 1
    %5020 = vsyncpa %s5019, 1

</llo_original>
